<compile_context>
chip_gen: v6e
topology: v6e:2x2x1
jax: 0.10.0
libtpu: 0.0.40
codegen_flags: <defaults>
</compile_context>

<pallas_src>
import functools

import jax
import jax.numpy as jnp
from jax.experimental import pallas as pl
from jax.experimental.pallas import tpu as pltpu

EPS = 1e-5
NEG_SLOPE = 0.2
LANE = 128
TARGET_CONTRACT = 256          # aim for a >=256-wide contraction (v6e/v7x MXU width)


def _round_up(x, m):
    return ((x + m - 1) // m) * m


def _cnn_block_kernel(src_ref, w_ref, mask_ref, gamma_ref, beta_ref, out_ref, patch_ref,
                      *, tap_groups, rows, cin_p, inv_p):
    """One batch element per grid step.

    src_ref:   (S2L, Cin_p)          bf16  stride-phase reshuffled reflect-padded input
    w_ref:     (K*K*Cin_p, Cout_p)   bf16  tap-major flattened weights
    mask_ref:  (rows, 1)             f32   1.0 on valid output rows, 0.0 on pad rows
    gamma_ref: (1, Cout_p)           f32
    beta_ref:  (1, Cout_p)           f32
    out_ref:   (rows, Cout_p)        bf16
    patch_ref: (rows, g*Cin_p)       bf16  VMEM scratch: packed taps of one group
    """
    # ---- convolution: taps packed along the contraction dim -> few wide MXU matmuls ---
    acc = None
    for group in tap_groups:                       # static Python loop over tap groups
        k0 = group[0][0]
        width = len(group) * cin_p
        if len(group) == 1:
            # contraction already wide enough: matmul straight off the src slice
            lhs = src_ref[pl.ds(group[0][1], rows), :]          # (rows, Cin_p) bf16
        else:
            # pack this group's taps into the VMEM patch buffer (reads VMEM-resident
            # data only: this is the "implicit im2col", no HBM inflation)
            for j, (_, off) in enumerate(group):
                patch_ref[:, j * cin_p:(j + 1) * cin_p] = src_ref[pl.ds(off, rows), :]
            lhs = patch_ref[:, :width]                          # (rows, width) bf16
        rhs = w_ref[pl.ds(k0 * cin_p, width), :]                # (width, Cout_p) bf16
        part = jnp.dot(lhs, rhs, preferred_element_type=jnp.float32)
        acc = part if acc is None else acc + part               # accumulate in registers
    y = acc                                                     # (rows, Cout_p) f32

    # ---- InstanceNorm2d statistics: single masked pass (sum & sum-of-squares) ----
    m = mask_ref[...]                                           # (rows, 1)
    yv = y * m
    s1 = jnp.sum(yv, axis=0, keepdims=True)                     # (1, Cout_p)
    s2 = jnp.sum(y * yv, axis=0, keepdims=True)                 # mask is 0/1
    mean = s1 * inv_p
    var = jnp.maximum(s2 * inv_p - mean * mean, 0.0)            # biased variance
    inv_std = jax.lax.rsqrt(var + EPS)

    # ---- affine + LeakyReLU(0.2): single normalize pass, bf16 writeback ----
    scale = gamma_ref[...] * inv_std
    shift = beta_ref[...] - mean * scale
    ya = y * scale + shift
    out_ref[...] = jnp.where(ya >= 0.0, ya, NEG_SLOPE * ya).astype(out_ref.dtype)


def cnn_block_forward(x, weight, gamma, beta, stride):
    """x: (N, Cin, H, W) f32; weight: (Cout, Cin, 4, 4); gamma/beta: (Cout,).
    Returns (N, Cout, Ho, Wo) f32 (same semantics as the PyTorch CNNBlock)."""
    N, Cin, H, W = x.shape
    Cout, Cin_w, K, K2 = weight.shape
    assert K == 4 and K2 == 4 and Cin_w == Cin
    s = int(stride)
    pad = 1

    Hp, Wp = H + 2 * pad, W + 2 * pad
    Ho = (Hp - K) // s + 1
    Wo = (Wp - K) // s + 1
    P = Ho * Wo

    Cin_p = _round_up(Cin, 8)
    # lane-dense output channels; 256-granular once wide (better fill of v6e/v7x MXU)
    cout_mult = 256 if Cout >= 256 else LANE
    Cout_p = _round_up(max(Cout, LANE), cout_mult)

    # Accumulator row space r = i*Wq + j (columns j >= Wo are don't-care pad rows).
    Wq = -(-Wp // s)
    rows = _round_up(Ho * Wq, 16)                    # 16: bf16 sublane tile
    max_off = ((K - 1) // s) * Wq + ((K - 1) // s)
    # Enough phantom zero rows at the bottom so every tap slice stays in-bounds.
    Hq = max(-(-Hp // s), -(-(rows + max_off) // Wq))
    Lsrc = Hq * Wq

    # ---------- host-side layout prep (bf16 early, pads fused; no K*K inflation) ------
    xb = x.astype(jnp.bfloat16)
    xp = jnp.pad(xb, ((0, 0), (0, 0), (pad, pad), (pad, pad)), mode="reflect")
    xp = jnp.transpose(xp, (0, 2, 3, 1))                              # (N, Hp, Wp, Cin)
    # one combined zero-pad: channels -> Cin_p, spatial -> (Hq*s, Wq*s) incl. tap slack
    xp = jnp.pad(xp, ((0, 0), (0, Hq * s - Hp), (0, Wq * s - Wp), (0, Cin_p - Cin)))

    # Stride-phase decomposition:
    #   src[n, (ph*s+pw)*Lsrc + iq*Wq + jq, c] = xp[n, s*iq + ph, s*jq + pw, c]
    xph = xp.reshape(N, Hq, s, Wq, s, Cin_p).transpose(0, 2, 4, 1, 3, 5)
    src = xph.reshape(N, s * s * Lsrc, Cin_p)

    # Tap-major flattened weights; padded gamma/beta so padded channels come out zero.
    w_taps = jnp.transpose(weight, (2, 3, 1, 0))                      # (K, K, Cin, Cout)
    w_taps = jnp.pad(w_taps, ((0, 0), (0, 0), (0, Cin_p - Cin), (0, Cout_p - Cout)))
    w_flat = w_taps.reshape(K * K * Cin_p, Cout_p).astype(jnp.bfloat16)
    gamma_p = jnp.pad(gamma.astype(jnp.float32), (0, Cout_p - Cout)).reshape(1, Cout_p)
    beta_p = jnp.pad(beta.astype(jnp.float32), (0, Cout_p - Cout)).reshape(1, Cout_p)

    # Valid-row mask for the instance-norm statistics.
    mask = jnp.pad(jnp.ones((Ho, Wo), jnp.float32), ((0, 0), (0, Wq - Wo)))
    mask = jnp.pad(mask.reshape(Ho * Wq), (0, rows - Ho * Wq)).reshape(rows, 1)

    # Static tap table (tap index kk, row offset into the phase-flattened source),
    # grouped so each group's packed contraction width is >= TARGET_CONTRACT lanes.
    taps = []
    for kh in range(K):
        for kw in range(K):
            ph, oh = kh % s, kh // s
            pw, ow = kw % s, kw // s
            taps.append((kh * K + kw, (ph * s + pw) * Lsrc + oh * Wq + ow))
    g = min(max(1, TARGET_CONTRACT // Cin_p), K * K)
    tap_groups = tuple(tuple(taps[i:i + g]) for i in range(0, len(taps), g))
    patch_cols = g * Cin_p

    kernel = functools.partial(_cnn_block_kernel, tap_groups=tap_groups, rows=rows,
                               cin_p=Cin_p, inv_p=1.0 / P)

    # VMEM budget: exact per-buffer accounting (physical (sublane,128)-tile padded),
    # capped at 85% of the chip's physical VMEM (128 MiB v5e/v6e, 64 MiB v7x).
    def _tile_bytes(r, c, itemsize):
        return _round_up(r, 32 // itemsize) * _round_up(c, LANE) * itemsize

    vmem_bytes = (
        2 * _tile_bytes(s * s * Lsrc, Cin_p, 2)        # src (bf16, double-buffered)
        + 2 * _tile_bytes(K * K * Cin_p, Cout_p, 2)    # weights (worst case: 2 bufs)
        + 2 * _tile_bytes(rows, 1, 4)                  # mask
        + 4 * _tile_bytes(1, Cout_p, 4)                # gamma, beta
        + 2 * _tile_bytes(rows, Cout_p, 2)             # output (bf16, double-buffered)
        + _tile_bytes(rows, patch_cols, 2)             # patch scratch
    )
    try:
        phys_vmem = int(pltpu.get_tpu_info().vmem_capacity_bytes)
    except Exception:
        phys_vmem = 64 * 1024 * 1024                   # conservative (v7x-sized)
    vmem_limit = int(min(int(phys_vmem * 0.85),
                         max(32 * 1024 * 1024, int(vmem_bytes * 1.25))))

    flops = 2 * N * P * K * K * Cin * Cout + 10 * N * P * Cout
    bytes_accessed = (src.size * 2 + w_flat.size * 2 + mask.size * 4
                      + gamma_p.size * 4 + beta_p.size * 4 + N * rows * Cout_p * 2)
    cost = pl.CostEstimate(flops=int(flops), transcendentals=int(N * Cout_p),
                           bytes_accessed=int(bytes_accessed))

    out_struct = jax.ShapeDtypeStruct((N, rows, Cout_p), jnp.bfloat16)

    def _run(single_buffer_invariants):
        def inv_spec(shape):
            if single_buffer_invariants:
                return pl.BlockSpec(shape, lambda b: (0,) * len(shape),
                                    pipeline_mode=pl.Buffered(1))
            return pl.BlockSpec(shape, lambda b: (0,) * len(shape))

        fn = pl.pallas_call(
            kernel,
            out_shape=out_struct,
            grid_spec=pltpu.PrefetchScalarGridSpec(
                num_scalar_prefetch=0,
                grid=(N,),
                in_specs=[
                    pl.BlockSpec((None, s * s * Lsrc, Cin_p), lambda b: (b, 0, 0)),
                    inv_spec((K * K * Cin_p, Cout_p)),
                    inv_spec((rows, 1)),
                    inv_spec((1, Cout_p)),
                    inv_spec((1, Cout_p)),
                ],
                out_specs=pl.BlockSpec((None, rows, Cout_p), lambda b: (b, 0, 0)),
                scratch_shapes=[pltpu.VMEM((rows, patch_cols), jnp.bfloat16)],
            ),
            compiler_params=pltpu.CompilerParams(
                dimension_semantics=("parallel",),
                vmem_limit_bytes=vmem_limit,
            ),
            cost_estimate=cost,
        )
        return jax.block_until_ready(fn(src, w_flat, mask, gamma_p, beta_p))

    try:
        out = _run(True)
    except Exception:
        # Fallback for jax versions without BlockSpec(pipeline_mode=pl.Buffered(1)):
        # default double-buffering of the small grid-invariant operands.
        out = _run(False)

    # (N, rows, Cout_p) bf16 -> NCHW f32 to match the PyTorch module's output.
    # TODO(synk): in a full pipeline keep the lane-dense (rows, C) bf16 layout for the
    # next layer instead of this slice + NHWC->NCHW transpose + f32 cast.
    out = out[:, : Ho * Wq, :Cout].astype(jnp.float32)
    out = out.reshape(N, Ho, Wq, Cout)[:, :, :Wo, :]
    return jnp.transpose(out, (0, 3, 1, 2))


def _reference_forward(x, weight, gamma, beta, stride):
    xp = jnp.pad(x, ((0, 0), (0, 0), (1, 1), (1, 1)), mode="reflect")
    y = jax.lax.conv_general_dilated(
        xp, weight, window_strides=(stride, stride), padding="VALID",
        dimension_numbers=("NCHW", "OIHW", "NCHW"),
    )
    mean = jnp.mean(y, axis=(2, 3), keepdims=True)
    var = jnp.mean((y - mean) ** 2, axis=(2, 3), keepdims=True)
    yn = (y - mean) / jnp.sqrt(var + EPS)
    ya = yn * gamma[None, :, None, None] + beta[None, :, None, None]
    return jnp.where(ya >= 0, ya, NEG_SLOPE * ya)


if __name__ == "__main__":
    N, Cin, H, W = 2, 4, 16, 16
    Cout, K, stride = 8, 4, 2

    key = jax.random.PRNGKey(0)
    kx, kw, kg, kb = jax.random.split(key, 4)
    x = jax.random.normal(kx, (N, Cin, H, W), dtype=jnp.float32)
    weight = jax.random.normal(kw, (Cout, Cin, K, K), dtype=jnp.float32) * 0.1
    gamma = 1.0 + 0.1 * jax.random.normal(kg, (Cout,), dtype=jnp.float32)
    beta = 0.1 * jax.random.normal(kb, (Cout,), dtype=jnp.float32)

    out = cnn_block_forward(x, weight, gamma, beta, stride)
    out = jax.block_until_ready(out)

    # Reference with the same bf16-rounded conv operands (kernel uses bf16 MXU inputs
    # with f32 accumulation and a bf16 output store).
    xb = x.astype(jnp.bfloat16).astype(jnp.float32)
    wb = weight.astype(jnp.bfloat16).astype(jnp.float32)
    ref = _reference_forward(xb, wb, gamma, beta, stride)

    Ho = (H + 2 - K) // stride + 1
    Wo = (W + 2 - K) // stride + 1
    assert out.shape == (N, Cout, Ho, Wo)
    assert jnp.allclose(out, ref, atol=2e-2, rtol=2e-2), "mismatch vs JAX reference"

    print("KERNEL_OK")
</pallas_src>

<mosaic_0001>
module attributes {stable_mosaic.version = 11 : i64} {
  func.func @_cnn_block_kernel(%arg0: i32, %arg1: memref<1x360x8xbf16, #tpu.memory_space<vmem>>, %arg2: memref<128x128xbf16, #tpu.memory_space<vmem>>, %arg3: memref<80x1xf32, #tpu.memory_space<vmem>>, %arg4: memref<1x128xf32, #tpu.memory_space<vmem>>, %arg5: memref<1x128xf32, #tpu.memory_space<vmem>>, %arg6: memref<1x80x128xbf16, #tpu.memory_space<vmem>>, %arg7: memref<80x128xbf16, #tpu.memory_space<vmem>>) attributes {dimension_semantics = [#tpu.dimension_semantics<parallel>], iteration_bounds = array<i64: 2>, scalar_prefetch = 0 : i64, scratch_operands = 1 : i64, tpu.core_type = #tpu.core_type<tc>, window_params = [{transform_indices = @transform_0, window_bounds = array<i64: 1, 360, 8>}, {pipeline_mode = #tpu.pipeline_mode<synchronous>, transform_indices = @transform_1, window_bounds = array<i64: 128, 128>}, {pipeline_mode = #tpu.pipeline_mode<synchronous>, transform_indices = @transform_2, window_bounds = array<i64: 80, 1>}, {pipeline_mode = #tpu.pipeline_mode<synchronous>, transform_indices = @transform_3, window_bounds = array<i64: 1, 128>}, {pipeline_mode = #tpu.pipeline_mode<synchronous>, transform_indices = @transform_4, window_bounds = array<i64: 1, 128>}, {transform_indices = @transform_5, window_bounds = array<i64: 1, 80, 128>}]} {
    %c0 = arith.constant 0 : index
    %c0_0 = arith.constant 0 : index
    %c0_1 = arith.constant 0 : index
    %0 = vector.load %arg1[%c0, %c0_0, %c0_1] : memref<1x360x8xbf16, #tpu.memory_space<vmem>>, vector<1x80x8xbf16>
    %1 = vector.shape_cast %0 : vector<1x80x8xbf16> to vector<80x8xbf16>
    %c0_2 = arith.constant 0 : index
    %c0_3 = arith.constant 0 : index
    %2 = vector.load %arg7[%c0_2, %c0_3] : memref<80x128xbf16, #tpu.memory_space<vmem>>, vector<80x8xbf16>
    tpu.vector_store %arg7[%c0_2, %c0_3], %1 {strides = array<i32>} : memref<80x128xbf16, #tpu.memory_space<vmem>>, vector<80x8xbf16>,
    %c0_4 = arith.constant 0 : index
    %c90 = arith.constant 90 : index
    %c0_5 = arith.constant 0 : index
    %3 = vector.load %arg1[%c0_4, %c90, %c0_5] : memref<1x360x8xbf16, #tpu.memory_space<vmem>>, vector<1x80x8xbf16>
    %4 = vector.shape_cast %3 : vector<1x80x8xbf16> to vector<80x8xbf16>
    %c0_6 = arith.constant 0 : index
    %c8 = arith.constant 8 : index
    %5 = vector.load %arg7[%c0_6, %c8] : memref<80x128xbf16, #tpu.memory_space<vmem>>, vector<80x8xbf16>
    tpu.vector_store %arg7[%c0_6, %c8], %4 {strides = array<i32>} : memref<80x128xbf16, #tpu.memory_space<vmem>>, vector<80x8xbf16>,
    %c0_7 = arith.constant 0 : index
    %c1 = arith.constant 1 : index
    %c0_8 = arith.constant 0 : index
    %6 = vector.load %arg1[%c0_7, %c1, %c0_8] : memref<1x360x8xbf16, #tpu.memory_space<vmem>>, vector<1x80x8xbf16>
    %7 = vector.shape_cast %6 : vector<1x80x8xbf16> to vector<80x8xbf16>
    %c0_9 = arith.constant 0 : index
    %c16 = arith.constant 16 : index
    %8 = vector.load %arg7[%c0_9, %c16] : memref<80x128xbf16, #tpu.memory_space<vmem>>, vector<80x8xbf16>
    tpu.vector_store %arg7[%c0_9, %c16], %7 {strides = array<i32>} : memref<80x128xbf16, #tpu.memory_space<vmem>>, vector<80x8xbf16>,
    %c0_10 = arith.constant 0 : index
    %c91 = arith.constant 91 : index
    %c0_11 = arith.constant 0 : index
    %9 = vector.load %arg1[%c0_10, %c91, %c0_11] : memref<1x360x8xbf16, #tpu.memory_space<vmem>>, vector<1x80x8xbf16>
    %10 = vector.shape_cast %9 : vector<1x80x8xbf16> to vector<80x8xbf16>
    %c0_12 = arith.constant 0 : index
    %c24 = arith.constant 24 : index
    %11 = vector.load %arg7[%c0_12, %c24] : memref<80x128xbf16, #tpu.memory_space<vmem>>, vector<80x8xbf16>
    tpu.vector_store %arg7[%c0_12, %c24], %10 {strides = array<i32>} : memref<80x128xbf16, #tpu.memory_space<vmem>>, vector<80x8xbf16>,
    %c0_13 = arith.constant 0 : index
    %c180 = arith.constant 180 : index
    %c0_14 = arith.constant 0 : index
    %12 = vector.load %arg1[%c0_13, %c180, %c0_14] : memref<1x360x8xbf16, #tpu.memory_space<vmem>>, vector<1x80x8xbf16>
    %13 = vector.shape_cast %12 : vector<1x80x8xbf16> to vector<80x8xbf16>
    %c0_15 = arith.constant 0 : index
    %c32 = arith.constant 32 : index
    %14 = vector.load %arg7[%c0_15, %c32] : memref<80x128xbf16, #tpu.memory_space<vmem>>, vector<80x8xbf16>
    tpu.vector_store %arg7[%c0_15, %c32], %13 {strides = array<i32>} : memref<80x128xbf16, #tpu.memory_space<vmem>>, vector<80x8xbf16>,
    %c0_16 = arith.constant 0 : index
    %c270 = arith.constant 270 : index
    %c0_17 = arith.constant 0 : index
    %15 = vector.load %arg1[%c0_16, %c270, %c0_17] : memref<1x360x8xbf16, #tpu.memory_space<vmem>>, vector<1x80x8xbf16>
    %16 = vector.shape_cast %15 : vector<1x80x8xbf16> to vector<80x8xbf16>
    %c0_18 = arith.constant 0 : index
    %c40 = arith.constant 40 : index
    %17 = vector.load %arg7[%c0_18, %c40] : memref<80x128xbf16, #tpu.memory_space<vmem>>, vector<80x8xbf16>
    tpu.vector_store %arg7[%c0_18, %c40], %16 {strides = array<i32>} : memref<80x128xbf16, #tpu.memory_space<vmem>>, vector<80x8xbf16>,
    %c0_19 = arith.constant 0 : index
    %c181 = arith.constant 181 : index
    %c0_20 = arith.constant 0 : index
    %18 = vector.load %arg1[%c0_19, %c181, %c0_20] : memref<1x360x8xbf16, #tpu.memory_space<vmem>>, vector<1x80x8xbf16>
    %19 = vector.shape_cast %18 : vector<1x80x8xbf16> to vector<80x8xbf16>
    %c0_21 = arith.constant 0 : index
    %c48 = arith.constant 48 : index
    %20 = vector.load %arg7[%c0_21, %c48] : memref<80x128xbf16, #tpu.memory_space<vmem>>, vector<80x8xbf16>
    tpu.vector_store %arg7[%c0_21, %c48], %19 {strides = array<i32>} : memref<80x128xbf16, #tpu.memory_space<vmem>>, vector<80x8xbf16>,
    %c0_22 = arith.constant 0 : index
    %c271 = arith.constant 271 : index
    %c0_23 = arith.constant 0 : index
    %21 = vector.load %arg1[%c0_22, %c271, %c0_23] : memref<1x360x8xbf16, #tpu.memory_space<vmem>>, vector<1x80x8xbf16>
    %22 = vector.shape_cast %21 : vector<1x80x8xbf16> to vector<80x8xbf16>
    %c0_24 = arith.constant 0 : index
    %c56 = arith.constant 56 : index
    %23 = vector.load %arg7[%c0_24, %c56] : memref<80x128xbf16, #tpu.memory_space<vmem>>, vector<80x8xbf16>
    tpu.vector_store %arg7[%c0_24, %c56], %22 {strides = array<i32>} : memref<80x128xbf16, #tpu.memory_space<vmem>>, vector<80x8xbf16>,
    %c0_25 = arith.constant 0 : index
    %c9 = arith.constant 9 : index
    %c0_26 = arith.constant 0 : index
    %24 = vector.load %arg1[%c0_25, %c9, %c0_26] : memref<1x360x8xbf16, #tpu.memory_space<vmem>>, vector<1x80x8xbf16>
    %25 = vector.shape_cast %24 : vector<1x80x8xbf16> to vector<80x8xbf16>
    %c0_27 = arith.constant 0 : index
    %c64 = arith.constant 64 : index
    %26 = vector.load %arg7[%c0_27, %c64] : memref<80x128xbf16, #tpu.memory_space<vmem>>, vector<80x8xbf16>
    tpu.vector_store %arg7[%c0_27, %c64], %25 {strides = array<i32>} : memref<80x128xbf16, #tpu.memory_space<vmem>>, vector<80x8xbf16>,
    %c0_28 = arith.constant 0 : index
    %c99 = arith.constant 99 : index
    %c0_29 = arith.constant 0 : index
    %27 = vector.load %arg1[%c0_28, %c99, %c0_29] : memref<1x360x8xbf16, #tpu.memory_space<vmem>>, vector<1x80x8xbf16>
    %28 = vector.shape_cast %27 : vector<1x80x8xbf16> to vector<80x8xbf16>
    %c0_30 = arith.constant 0 : index
    %c72 = arith.constant 72 : index
    %29 = vector.load %arg7[%c0_30, %c72] : memref<80x128xbf16, #tpu.memory_space<vmem>>, vector<80x8xbf16>
    tpu.vector_store %arg7[%c0_30, %c72], %28 {strides = array<i32>} : memref<80x128xbf16, #tpu.memory_space<vmem>>, vector<80x8xbf16>,
    %c0_31 = arith.constant 0 : index
    %c10 = arith.constant 10 : index
    %c0_32 = arith.constant 0 : index
    %30 = vector.load %arg1[%c0_31, %c10, %c0_32] : memref<1x360x8xbf16, #tpu.memory_space<vmem>>, vector<1x80x8xbf16>
    %31 = vector.shape_cast %30 : vector<1x80x8xbf16> to vector<80x8xbf16>
    %c0_33 = arith.constant 0 : index
    %c80 = arith.constant 80 : index
    %32 = vector.load %arg7[%c0_33, %c80] : memref<80x128xbf16, #tpu.memory_space<vmem>>, vector<80x8xbf16>
    tpu.vector_store %arg7[%c0_33, %c80], %31 {strides = array<i32>} : memref<80x128xbf16, #tpu.memory_space<vmem>>, vector<80x8xbf16>,
    %c0_34 = arith.constant 0 : index
    %c100 = arith.constant 100 : index
    %c0_35 = arith.constant 0 : index
    %33 = vector.load %arg1[%c0_34, %c100, %c0_35] : memref<1x360x8xbf16, #tpu.memory_space<vmem>>, vector<1x80x8xbf16>
    %34 = vector.shape_cast %33 : vector<1x80x8xbf16> to vector<80x8xbf16>
    %c0_36 = arith.constant 0 : index
    %c88 = arith.constant 88 : index
    %35 = vector.load %arg7[%c0_36, %c88] : memref<80x128xbf16, #tpu.memory_space<vmem>>, vector<80x8xbf16>
    tpu.vector_store %arg7[%c0_36, %c88], %34 {strides = array<i32>} : memref<80x128xbf16, #tpu.memory_space<vmem>>, vector<80x8xbf16>,
    %c0_37 = arith.constant 0 : index
    %c189 = arith.constant 189 : index
    %c0_38 = arith.constant 0 : index
    %36 = vector.load %arg1[%c0_37, %c189, %c0_38] : memref<1x360x8xbf16, #tpu.memory_space<vmem>>, vector<1x80x8xbf16>
    %37 = vector.shape_cast %36 : vector<1x80x8xbf16> to vector<80x8xbf16>
    %c0_39 = arith.constant 0 : index
    %c96 = arith.constant 96 : index
    %38 = vector.load %arg7[%c0_39, %c96] : memref<80x128xbf16, #tpu.memory_space<vmem>>, vector<80x8xbf16>
    tpu.vector_store %arg7[%c0_39, %c96], %37 {strides = array<i32>} : memref<80x128xbf16, #tpu.memory_space<vmem>>, vector<80x8xbf16>,
    %c0_40 = arith.constant 0 : index
    %c279 = arith.constant 279 : index
    %c0_41 = arith.constant 0 : index
    %39 = vector.load %arg1[%c0_40, %c279, %c0_41] : memref<1x360x8xbf16, #tpu.memory_space<vmem>>, vector<1x80x8xbf16>
    %40 = vector.shape_cast %39 : vector<1x80x8xbf16> to vector<80x8xbf16>
    %c0_42 = arith.constant 0 : index
    %c104 = arith.constant 104 : index
    %41 = vector.load %arg7[%c0_42, %c104] : memref<80x128xbf16, #tpu.memory_space<vmem>>, vector<80x8xbf16>
    tpu.vector_store %arg7[%c0_42, %c104], %40 {strides = array<i32>} : memref<80x128xbf16, #tpu.memory_space<vmem>>, vector<80x8xbf16>,
    %c0_43 = arith.constant 0 : index
    %c190 = arith.constant 190 : index
    %c0_44 = arith.constant 0 : index
    %42 = vector.load %arg1[%c0_43, %c190, %c0_44] : memref<1x360x8xbf16, #tpu.memory_space<vmem>>, vector<1x80x8xbf16>
    %43 = vector.shape_cast %42 : vector<1x80x8xbf16> to vector<80x8xbf16>
    %c0_45 = arith.constant 0 : index
    %c112 = arith.constant 112 : index
    %44 = vector.load %arg7[%c0_45, %c112] : memref<80x128xbf16, #tpu.memory_space<vmem>>, vector<80x8xbf16>
    tpu.vector_store %arg7[%c0_45, %c112], %43 {strides = array<i32>} : memref<80x128xbf16, #tpu.memory_space<vmem>>, vector<80x8xbf16>,
    %c0_46 = arith.constant 0 : index
    %c280 = arith.constant 280 : index
    %c0_47 = arith.constant 0 : index
    %45 = vector.load %arg1[%c0_46, %c280, %c0_47] : memref<1x360x8xbf16, #tpu.memory_space<vmem>>, vector<1x80x8xbf16>
    %46 = vector.shape_cast %45 : vector<1x80x8xbf16> to vector<80x8xbf16>
    %c0_48 = arith.constant 0 : index
    %c120 = arith.constant 120 : index
    %47 = vector.load %arg7[%c0_48, %c120] : memref<80x128xbf16, #tpu.memory_space<vmem>>, vector<80x8xbf16>
    tpu.vector_store %arg7[%c0_48, %c120], %46 {strides = array<i32>} : memref<80x128xbf16, #tpu.memory_space<vmem>>, vector<80x8xbf16>,
    %c0_49 = arith.constant 0 : index
    %c0_50 = arith.constant 0 : index
    %48 = vector.load %arg7[%c0_49, %c0_50] : memref<80x128xbf16, #tpu.memory_space<vmem>>, vector<80x128xbf16>
    %c0_51 = arith.constant 0 : index
    %c0_52 = arith.constant 0 : index
    %49 = vector.load %arg2[%c0_51, %c0_52] : memref<128x128xbf16, #tpu.memory_space<vmem>>, vector<128x128xbf16>
    %cst = arith.constant dense<0.000000e+00> : vector<80x128xf32>
    %50 = tpu.matmul %48, %49, %cst {dimension_numbers = #tpu.dot_dimension_numbers<[1], [0], [0], [1], [0, 0, 1, 1], [], []>} : vector<80x128xbf16>, vector<128x128xbf16>, vector<80x128xf32> -> vector<80x128xf32>
    %c0_53 = arith.constant 0 : index
    %c0_54 = arith.constant 0 : index
    %51 = vector.load %arg3[%c0_53, %c0_54] : memref<80x1xf32, #tpu.memory_space<vmem>>, vector<80x1xf32>
    %52 = vector.broadcast %51 : vector<80x1xf32> to vector<80x128xf32>
    %53 = arith.mulf %50, %52 : vector<80x128xf32>
    %cst_55 = arith.constant dense<0.000000e+00> : vector<128xf32>
    %54 = vector.multi_reduction <add>, %53, %cst_55 [0] : vector<80x128xf32> to vector<128xf32>
    %55 = vector.shape_cast %54 : vector<128xf32> to vector<1x128xf32>
    %56 = arith.mulf %50, %53 : vector<80x128xf32>
    %cst_56 = arith.constant dense<0.000000e+00> : vector<128xf32>
    %57 = vector.multi_reduction <add>, %56, %cst_56 [0] : vector<80x128xf32> to vector<128xf32>
    %58 = vector.shape_cast %57 : vector<128xf32> to vector<1x128xf32>
    %cst_57 = arith.constant 1.562500e-02 : f32
    %59 = vector.broadcast %cst_57 : f32 to vector<1x128xf32>
    %60 = arith.mulf %55, %59 : vector<1x128xf32>
    %cst_58 = arith.constant 1.562500e-02 : f32
    %61 = vector.broadcast %cst_58 : f32 to vector<1x128xf32>
    %62 = arith.mulf %58, %61 : vector<1x128xf32>
    %63 = arith.mulf %60, %60 : vector<1x128xf32>
    %64 = arith.subf %62, %63 : vector<1x128xf32>
    %cst_59 = arith.constant 0.000000e+00 : f32
    %65 = vector.broadcast %cst_59 : f32 to vector<1x128xf32>
    %66 = arith.maximumf %64, %65 : vector<1x128xf32>
    %cst_60 = arith.constant 9.99999974E-6 : f32
    %67 = vector.broadcast %cst_60 : f32 to vector<1x128xf32>
    %68 = arith.addf %66, %67 : vector<1x128xf32>
    %69 = math.rsqrt %68 : vector<1x128xf32>
    %c0_61 = arith.constant 0 : index
    %c0_62 = arith.constant 0 : index
    %70 = vector.load %arg4[%c0_61, %c0_62] : memref<1x128xf32, #tpu.memory_space<vmem>>, vector<1x128xf32>
    %71 = arith.mulf %70, %69 : vector<1x128xf32>
    %c0_63 = arith.constant 0 : index
    %c0_64 = arith.constant 0 : index
    %72 = vector.load %arg5[%c0_63, %c0_64] : memref<1x128xf32, #tpu.memory_space<vmem>>, vector<1x128xf32>
    %73 = arith.mulf %60, %71 : vector<1x128xf32>
    %74 = arith.subf %72, %73 : vector<1x128xf32>
    %75 = vector.broadcast %71 : vector<1x128xf32> to vector<80x128xf32>
    %76 = arith.mulf %50, %75 : vector<80x128xf32>
    %77 = vector.broadcast %74 : vector<1x128xf32> to vector<80x128xf32>
    %78 = arith.addf %76, %77 : vector<80x128xf32>
    %cst_65 = arith.constant 0.000000e+00 : f32
    %79 = vector.broadcast %cst_65 : f32 to vector<80x128xf32>
    %80 = arith.cmpf oge, %78, %79 : vector<80x128xf32>
    %cst_66 = arith.constant 2.000000e-01 : f32
    %81 = vector.broadcast %cst_66 : f32 to vector<80x128xf32>
    %82 = arith.mulf %81, %78 : vector<80x128xf32>
    %83 = arith.select %80, %78, %82 : vector<80x128xi1>, vector<80x128xf32>
    %84 = arith.truncf %83 : vector<80x128xf32> to vector<80x128xbf16>
    %c0_67 = arith.constant 0 : index
    %c0_68 = arith.constant 0 : index
    %c0_69 = arith.constant 0 : index
    %85 = vector.load %arg6[%c0_67, %c0_68, %c0_69] : memref<1x80x128xbf16, #tpu.memory_space<vmem>>, vector<1x80x128xbf16>
    %86 = vector.shape_cast %85 : vector<1x80x128xbf16> to vector<80x128xbf16>
    %87 = vector.shape_cast %84 : vector<80x128xbf16> to vector<1x80x128xbf16>
    tpu.vector_store %arg6[%c0_67, %c0_68, %c0_69], %87 {strides = array<i32>} : memref<1x80x128xbf16, #tpu.memory_space<vmem>>, vector<1x80x128xbf16>,
    return
  }
  func.func @transform_0(%arg0: i32) -> (i32, i32, i32) {
    %c0_i32 = arith.constant 0 : i32
    %c0_i32_0 = arith.constant 0 : i32
    %c0_i32_1 = arith.constant 0 : i32
    return %arg0, %c0_i32, %c0_i32_0 : i32, i32, i32
  }
  func.func @transform_1(%arg0: i32) -> (i32, i32) {
    %c0_i32 = arith.constant 0 : i32
    %c0_i32_0 = arith.constant 0 : i32
    %c0_i32_1 = arith.constant 0 : i32
    return %c0_i32, %c0_i32_0 : i32, i32
  }
  func.func @transform_2(%arg0: i32) -> (i32, i32) {
    %c0_i32 = arith.constant 0 : i32
    %c0_i32_0 = arith.constant 0 : i32
    %c0_i32_1 = arith.constant 0 : i32
    return %c0_i32, %c0_i32_0 : i32, i32
  }
  func.func @transform_3(%arg0: i32) -> (i32, i32) {
    %c0_i32 = arith.constant 0 : i32
    %c0_i32_0 = arith.constant 0 : i32
    %c0_i32_1 = arith.constant 0 : i32
    return %c0_i32, %c0_i32_0 : i32, i32
  }
  func.func @transform_4(%arg0: i32) -> (i32, i32) {
    %c0_i32 = arith.constant 0 : i32
    %c0_i32_0 = arith.constant 0 : i32
    %c0_i32_1 = arith.constant 0 : i32
    return %c0_i32, %c0_i32_0 : i32, i32
  }
  func.func @transform_5(%arg0: i32) -> (i32, i32, i32) {
    %c0_i32 = arith.constant 0 : i32
    %c0_i32_0 = arith.constant 0 : i32
    %c0_i32_1 = arith.constant 0 : i32
    return %arg0, %c0_i32, %c0_i32_0 : i32, i32, i32
  }
}

module attributes {stable_mosaic.version = 11 : i64} {
  func.func @_cnn_block_kernel(%arg0: i32, %arg1: memref<1x360x8xbf16, #tpu.memory_space<vmem>>, %arg2: memref<128x128xbf16, #tpu.memory_space<vmem>>, %arg3: memref<80x1xf32, #tpu.memory_space<vmem>>, %arg4: memref<1x128xf32, #tpu.memory_space<vmem>>, %arg5: memref<1x128xf32, #tpu.memory_space<vmem>>, %arg6: memref<1x80x128xbf16, #tpu.memory_space<vmem>>, %arg7: memref<80x128xbf16, #tpu.memory_space<vmem>>) attributes {dimension_semantics = [#tpu.dimension_semantics<parallel>], iteration_bounds = array<i64: 2>, scalar_prefetch = 0 : i64, scratch_operands = 1 : i64, tpu.core_type = #tpu.core_type<tc>, window_params = [{transform_indices = @transform_0, window_bounds = array<i64: 1, 360, 8>}, {pipeline_mode = #tpu.pipeline_mode<synchronous>, transform_indices = @transform_1, window_bounds = array<i64: 128, 128>}, {pipeline_mode = #tpu.pipeline_mode<synchronous>, transform_indices = @transform_2, window_bounds = array<i64: 80, 1>}, {pipeline_mode = #tpu.pipeline_mode<synchronous>, transform_indices = @transform_3, window_bounds = array<i64: 1, 128>}, {pipeline_mode = #tpu.pipeline_mode<synchronous>, transform_indices = @transform_4, window_bounds = array<i64: 1, 128>}, {transform_indices = @transform_5, window_bounds = array<i64: 1, 80, 128>}]} {
    %c0 = arith.constant 0 : index
    %c0_0 = arith.constant 0 : index
    %c0_1 = arith.constant 0 : index
    %0 = vector.load %arg1[%c0, %c0_0, %c0_1] : memref<1x360x8xbf16, #tpu.memory_space<vmem>>, vector<1x80x8xbf16>
    %1 = vector.shape_cast %0 : vector<1x80x8xbf16> to vector<80x8xbf16>
    %c0_2 = arith.constant 0 : index
    %c0_3 = arith.constant 0 : index
    %2 = vector.load %arg7[%c0_2, %c0_3] : memref<80x128xbf16, #tpu.memory_space<vmem>>, vector<80x8xbf16>
    tpu.vector_store %arg7[%c0_2, %c0_3], %1 {strides = array<i32>} : memref<80x128xbf16, #tpu.memory_space<vmem>>, vector<80x8xbf16>,
    %c0_4 = arith.constant 0 : index
    %c90 = arith.constant 90 : index
    %c0_5 = arith.constant 0 : index
    %3 = vector.load %arg1[%c0_4, %c90, %c0_5] : memref<1x360x8xbf16, #tpu.memory_space<vmem>>, vector<1x80x8xbf16>
    %4 = vector.shape_cast %3 : vector<1x80x8xbf16> to vector<80x8xbf16>
    %c0_6 = arith.constant 0 : index
    %c8 = arith.constant 8 : index
    %5 = vector.load %arg7[%c0_6, %c8] : memref<80x128xbf16, #tpu.memory_space<vmem>>, vector<80x8xbf16>
    tpu.vector_store %arg7[%c0_6, %c8], %4 {strides = array<i32>} : memref<80x128xbf16, #tpu.memory_space<vmem>>, vector<80x8xbf16>,
    %c0_7 = arith.constant 0 : index
    %c1 = arith.constant 1 : index
    %c0_8 = arith.constant 0 : index
    %6 = vector.load %arg1[%c0_7, %c1, %c0_8] : memref<1x360x8xbf16, #tpu.memory_space<vmem>>, vector<1x80x8xbf16>
    %7 = vector.shape_cast %6 : vector<1x80x8xbf16> to vector<80x8xbf16>
    %c0_9 = arith.constant 0 : index
    %c16 = arith.constant 16 : index
    %8 = vector.load %arg7[%c0_9, %c16] : memref<80x128xbf16, #tpu.memory_space<vmem>>, vector<80x8xbf16>
    tpu.vector_store %arg7[%c0_9, %c16], %7 {strides = array<i32>} : memref<80x128xbf16, #tpu.memory_space<vmem>>, vector<80x8xbf16>,
    %c0_10 = arith.constant 0 : index
    %c91 = arith.constant 91 : index
    %c0_11 = arith.constant 0 : index
    %9 = vector.load %arg1[%c0_10, %c91, %c0_11] : memref<1x360x8xbf16, #tpu.memory_space<vmem>>, vector<1x80x8xbf16>
    %10 = vector.shape_cast %9 : vector<1x80x8xbf16> to vector<80x8xbf16>
    %c0_12 = arith.constant 0 : index
    %c24 = arith.constant 24 : index
    %11 = vector.load %arg7[%c0_12, %c24] : memref<80x128xbf16, #tpu.memory_space<vmem>>, vector<80x8xbf16>
    tpu.vector_store %arg7[%c0_12, %c24], %10 {strides = array<i32>} : memref<80x128xbf16, #tpu.memory_space<vmem>>, vector<80x8xbf16>,
    %c0_13 = arith.constant 0 : index
    %c180 = arith.constant 180 : index
    %c0_14 = arith.constant 0 : index
    %12 = vector.load %arg1[%c0_13, %c180, %c0_14] : memref<1x360x8xbf16, #tpu.memory_space<vmem>>, vector<1x80x8xbf16>
    %13 = vector.shape_cast %12 : vector<1x80x8xbf16> to vector<80x8xbf16>
    %c0_15 = arith.constant 0 : index
    %c32 = arith.constant 32 : index
    %14 = vector.load %arg7[%c0_15, %c32] : memref<80x128xbf16, #tpu.memory_space<vmem>>, vector<80x8xbf16>
    tpu.vector_store %arg7[%c0_15, %c32], %13 {strides = array<i32>} : memref<80x128xbf16, #tpu.memory_space<vmem>>, vector<80x8xbf16>,
    %c0_16 = arith.constant 0 : index
    %c270 = arith.constant 270 : index
    %c0_17 = arith.constant 0 : index
    %15 = vector.load %arg1[%c0_16, %c270, %c0_17] : memref<1x360x8xbf16, #tpu.memory_space<vmem>>, vector<1x80x8xbf16>
    %16 = vector.shape_cast %15 : vector<1x80x8xbf16> to vector<80x8xbf16>
    %c0_18 = arith.constant 0 : index
    %c40 = arith.constant 40 : index
    %17 = vector.load %arg7[%c0_18, %c40] : memref<80x128xbf16, #tpu.memory_space<vmem>>, vector<80x8xbf16>
    tpu.vector_store %arg7[%c0_18, %c40], %16 {strides = array<i32>} : memref<80x128xbf16, #tpu.memory_space<vmem>>, vector<80x8xbf16>,
    %c0_19 = arith.constant 0 : index
    %c181 = arith.constant 181 : index
    %c0_20 = arith.constant 0 : index
    %18 = vector.load %arg1[%c0_19, %c181, %c0_20] : memref<1x360x8xbf16, #tpu.memory_space<vmem>>, vector<1x80x8xbf16>
    %19 = vector.shape_cast %18 : vector<1x80x8xbf16> to vector<80x8xbf16>
    %c0_21 = arith.constant 0 : index
    %c48 = arith.constant 48 : index
    %20 = vector.load %arg7[%c0_21, %c48] : memref<80x128xbf16, #tpu.memory_space<vmem>>, vector<80x8xbf16>
    tpu.vector_store %arg7[%c0_21, %c48], %19 {strides = array<i32>} : memref<80x128xbf16, #tpu.memory_space<vmem>>, vector<80x8xbf16>,
    %c0_22 = arith.constant 0 : index
    %c271 = arith.constant 271 : index
    %c0_23 = arith.constant 0 : index
    %21 = vector.load %arg1[%c0_22, %c271, %c0_23] : memref<1x360x8xbf16, #tpu.memory_space<vmem>>, vector<1x80x8xbf16>
    %22 = vector.shape_cast %21 : vector<1x80x8xbf16> to vector<80x8xbf16>
    %c0_24 = arith.constant 0 : index
    %c56 = arith.constant 56 : index
    %23 = vector.load %arg7[%c0_24, %c56] : memref<80x128xbf16, #tpu.memory_space<vmem>>, vector<80x8xbf16>
    tpu.vector_store %arg7[%c0_24, %c56], %22 {strides = array<i32>} : memref<80x128xbf16, #tpu.memory_space<vmem>>, vector<80x8xbf16>,
    %c0_25 = arith.constant 0 : index
    %c9 = arith.constant 9 : index
    %c0_26 = arith.constant 0 : index
    %24 = vector.load %arg1[%c0_25, %c9, %c0_26] : memref<1x360x8xbf16, #tpu.memory_space<vmem>>, vector<1x80x8xbf16>
    %25 = vector.shape_cast %24 : vector<1x80x8xbf16> to vector<80x8xbf16>
    %c0_27 = arith.constant 0 : index
    %c64 = arith.constant 64 : index
    %26 = vector.load %arg7[%c0_27, %c64] : memref<80x128xbf16, #tpu.memory_space<vmem>>, vector<80x8xbf16>
    tpu.vector_store %arg7[%c0_27, %c64], %25 {strides = array<i32>} : memref<80x128xbf16, #tpu.memory_space<vmem>>, vector<80x8xbf16>,
    %c0_28 = arith.constant 0 : index
    %c99 = arith.constant 99 : index
    %c0_29 = arith.constant 0 : index
    %27 = vector.load %arg1[%c0_28, %c99, %c0_29] : memref<1x360x8xbf16, #tpu.memory_space<vmem>>, vector<1x80x8xbf16>
    %28 = vector.shape_cast %27 : vector<1x80x8xbf16> to vector<80x8xbf16>
    %c0_30 = arith.constant 0 : index
    %c72 = arith.constant 72 : index
    %29 = vector.load %arg7[%c0_30, %c72] : memref<80x128xbf16, #tpu.memory_space<vmem>>, vector<80x8xbf16>
    tpu.vector_store %arg7[%c0_30, %c72], %28 {strides = array<i32>} : memref<80x128xbf16, #tpu.memory_space<vmem>>, vector<80x8xbf16>,
    %c0_31 = arith.constant 0 : index
    %c10 = arith.constant 10 : index
    %c0_32 = arith.constant 0 : index
    %30 = vector.load %arg1[%c0_31, %c10, %c0_32] : memref<1x360x8xbf16, #tpu.memory_space<vmem>>, vector<1x80x8xbf16>
    %31 = vector.shape_cast %30 : vector<1x80x8xbf16> to vector<80x8xbf16>
    %c0_33 = arith.constant 0 : index
    %c80 = arith.constant 80 : index
    %32 = vector.load %arg7[%c0_33, %c80] : memref<80x128xbf16, #tpu.memory_space<vmem>>, vector<80x8xbf16>
    tpu.vector_store %arg7[%c0_33, %c80], %31 {strides = array<i32>} : memref<80x128xbf16, #tpu.memory_space<vmem>>, vector<80x8xbf16>,
    %c0_34 = arith.constant 0 : index
    %c100 = arith.constant 100 : index
    %c0_35 = arith.constant 0 : index
    %33 = vector.load %arg1[%c0_34, %c100, %c0_35] : memref<1x360x8xbf16, #tpu.memory_space<vmem>>, vector<1x80x8xbf16>
    %34 = vector.shape_cast %33 : vector<1x80x8xbf16> to vector<80x8xbf16>
    %c0_36 = arith.constant 0 : index
    %c88 = arith.constant 88 : index
    %35 = vector.load %arg7[%c0_36, %c88] : memref<80x128xbf16, #tpu.memory_space<vmem>>, vector<80x8xbf16>
    tpu.vector_store %arg7[%c0_36, %c88], %34 {strides = array<i32>} : memref<80x128xbf16, #tpu.memory_space<vmem>>, vector<80x8xbf16>,
    %c0_37 = arith.constant 0 : index
    %c189 = arith.constant 189 : index
    %c0_38 = arith.constant 0 : index
    %36 = vector.load %arg1[%c0_37, %c189, %c0_38] : memref<1x360x8xbf16, #tpu.memory_space<vmem>>, vector<1x80x8xbf16>
    %37 = vector.shape_cast %36 : vector<1x80x8xbf16> to vector<80x8xbf16>
    %c0_39 = arith.constant 0 : index
    %c96 = arith.constant 96 : index
    %38 = vector.load %arg7[%c0_39, %c96] : memref<80x128xbf16, #tpu.memory_space<vmem>>, vector<80x8xbf16>
    tpu.vector_store %arg7[%c0_39, %c96], %37 {strides = array<i32>} : memref<80x128xbf16, #tpu.memory_space<vmem>>, vector<80x8xbf16>,
    %c0_40 = arith.constant 0 : index
    %c279 = arith.constant 279 : index
    %c0_41 = arith.constant 0 : index
    %39 = vector.load %arg1[%c0_40, %c279, %c0_41] : memref<1x360x8xbf16, #tpu.memory_space<vmem>>, vector<1x80x8xbf16>
    %40 = vector.shape_cast %39 : vector<1x80x8xbf16> to vector<80x8xbf16>
    %c0_42 = arith.constant 0 : index
    %c104 = arith.constant 104 : index
    %41 = vector.load %arg7[%c0_42, %c104] : memref<80x128xbf16, #tpu.memory_space<vmem>>, vector<80x8xbf16>
    tpu.vector_store %arg7[%c0_42, %c104], %40 {strides = array<i32>} : memref<80x128xbf16, #tpu.memory_space<vmem>>, vector<80x8xbf16>,
    %c0_43 = arith.constant 0 : index
    %c190 = arith.constant 190 : index
    %c0_44 = arith.constant 0 : index
    %42 = vector.load %arg1[%c0_43, %c190, %c0_44] : memref<1x360x8xbf16, #tpu.memory_space<vmem>>, vector<1x80x8xbf16>
    %43 = vector.shape_cast %42 : vector<1x80x8xbf16> to vector<80x8xbf16>
    %c0_45 = arith.constant 0 : index
    %c112 = arith.constant 112 : index
    %44 = vector.load %arg7[%c0_45, %c112] : memref<80x128xbf16, #tpu.memory_space<vmem>>, vector<80x8xbf16>
    tpu.vector_store %arg7[%c0_45, %c112], %43 {strides = array<i32>} : memref<80x128xbf16, #tpu.memory_space<vmem>>, vector<80x8xbf16>,
    %c0_46 = arith.constant 0 : index
    %c280 = arith.constant 280 : index
    %c0_47 = arith.constant 0 : index
    %45 = vector.load %arg1[%c0_46, %c280, %c0_47] : memref<1x360x8xbf16, #tpu.memory_space<vmem>>, vector<1x80x8xbf16>
    %46 = vector.shape_cast %45 : vector<1x80x8xbf16> to vector<80x8xbf16>
    %c0_48 = arith.constant 0 : index
    %c120 = arith.constant 120 : index
    %47 = vector.load %arg7[%c0_48, %c120] : memref<80x128xbf16, #tpu.memory_space<vmem>>, vector<80x8xbf16>
    tpu.vector_store %arg7[%c0_48, %c120], %46 {strides = array<i32>} : memref<80x128xbf16, #tpu.memory_space<vmem>>, vector<80x8xbf16>,
    %c0_49 = arith.constant 0 : index
    %c0_50 = arith.constant 0 : index
    %48 = vector.load %arg7[%c0_49, %c0_50] : memref<80x128xbf16, #tpu.memory_space<vmem>>, vector<80x128xbf16>
    %c0_51 = arith.constant 0 : index
    %c0_52 = arith.constant 0 : index
    %49 = vector.load %arg2[%c0_51, %c0_52] : memref<128x128xbf16, #tpu.memory_space<vmem>>, vector<128x128xbf16>
    %cst = arith.constant dense<0.000000e+00> : vector<80x128xf32>
    %50 = tpu.matmul %48, %49, %cst {dimension_numbers = #tpu.dot_dimension_numbers<[1], [0], [0], [1], [0, 0, 1, 1], [], []>} : vector<80x128xbf16>, vector<128x128xbf16>, vector<80x128xf32> -> vector<80x128xf32>
    %c0_53 = arith.constant 0 : index
    %c0_54 = arith.constant 0 : index
    %51 = vector.load %arg3[%c0_53, %c0_54] : memref<80x1xf32, #tpu.memory_space<vmem>>, vector<80x1xf32>
    %52 = vector.broadcast %51 : vector<80x1xf32> to vector<80x128xf32>
    %53 = arith.mulf %50, %52 : vector<80x128xf32>
    %cst_55 = arith.constant dense<0.000000e+00> : vector<128xf32>
    %54 = vector.multi_reduction <add>, %53, %cst_55 [0] : vector<80x128xf32> to vector<128xf32>
    %55 = vector.shape_cast %54 : vector<128xf32> to vector<1x128xf32>
    %56 = arith.mulf %50, %53 : vector<80x128xf32>
    %cst_56 = arith.constant dense<0.000000e+00> : vector<128xf32>
    %57 = vector.multi_reduction <add>, %56, %cst_56 [0] : vector<80x128xf32> to vector<128xf32>
    %58 = vector.shape_cast %57 : vector<128xf32> to vector<1x128xf32>
    %cst_57 = arith.constant 1.562500e-02 : f32
    %59 = vector.broadcast %cst_57 : f32 to vector<1x128xf32>
    %60 = arith.mulf %55, %59 : vector<1x128xf32>
    %cst_58 = arith.constant 1.562500e-02 : f32
    %61 = vector.broadcast %cst_58 : f32 to vector<1x128xf32>
    %62 = arith.mulf %58, %61 : vector<1x128xf32>
    %63 = arith.mulf %60, %60 : vector<1x128xf32>
    %64 = arith.subf %62, %63 : vector<1x128xf32>
    %cst_59 = arith.constant 0.000000e+00 : f32
    %65 = vector.broadcast %cst_59 : f32 to vector<1x128xf32>
    %66 = arith.maximumf %64, %65 : vector<1x128xf32>
    %cst_60 = arith.constant 9.99999974E-6 : f32
    %67 = vector.broadcast %cst_60 : f32 to vector<1x128xf32>
    %68 = arith.addf %66, %67 : vector<1x128xf32>
    %69 = math.rsqrt %68 : vector<1x128xf32>
    %c0_61 = arith.constant 0 : index
    %c0_62 = arith.constant 0 : index
    %70 = vector.load %arg4[%c0_61, %c0_62] : memref<1x128xf32, #tpu.memory_space<vmem>>, vector<1x128xf32>
    %71 = arith.mulf %70, %69 : vector<1x128xf32>
    %c0_63 = arith.constant 0 : index
    %c0_64 = arith.constant 0 : index
    %72 = vector.load %arg5[%c0_63, %c0_64] : memref<1x128xf32, #tpu.memory_space<vmem>>, vector<1x128xf32>
    %73 = arith.mulf %60, %71 : vector<1x128xf32>
    %74 = arith.subf %72, %73 : vector<1x128xf32>
    %75 = vector.broadcast %71 : vector<1x128xf32> to vector<80x128xf32>
    %76 = arith.mulf %50, %75 : vector<80x128xf32>
    %77 = vector.broadcast %74 : vector<1x128xf32> to vector<80x128xf32>
    %78 = arith.addf %76, %77 : vector<80x128xf32>
    %cst_65 = arith.constant 0.000000e+00 : f32
    %79 = vector.broadcast %cst_65 : f32 to vector<80x128xf32>
    %80 = arith.cmpf oge, %78, %79 : vector<80x128xf32>
    %cst_66 = arith.constant 2.000000e-01 : f32
    %81 = vector.broadcast %cst_66 : f32 to vector<80x128xf32>
    %82 = arith.mulf %81, %78 : vector<80x128xf32>
    %83 = arith.select %80, %78, %82 : vector<80x128xi1>, vector<80x128xf32>
    %84 = arith.truncf %83 : vector<80x128xf32> to vector<80x128xbf16>
    %c0_67 = arith.constant 0 : index
    %c0_68 = arith.constant 0 : index
    %c0_69 = arith.constant 0 : index
    %85 = vector.load %arg6[%c0_67, %c0_68, %c0_69] : memref<1x80x128xbf16, #tpu.memory_space<vmem>>, vector<1x80x128xbf16>
    %86 = vector.shape_cast %85 : vector<1x80x128xbf16> to vector<80x128xbf16>
    %87 = vector.shape_cast %84 : vector<80x128xbf16> to vector<1x80x128xbf16>
    tpu.vector_store %arg6[%c0_67, %c0_68, %c0_69], %87 {strides = array<i32>} : memref<1x80x128xbf16, #tpu.memory_space<vmem>>, vector<1x80x128xbf16>,
    return
  }
  func.func @transform_0(%arg0: i32) -> (i32, i32, i32) {
    %c0_i32 = arith.constant 0 : i32
    %c0_i32_0 = arith.constant 0 : i32
    %c0_i32_1 = arith.constant 0 : i32
    return %arg0, %c0_i32, %c0_i32_0 : i32, i32, i32
  }
  func.func @transform_1(%arg0: i32) -> (i32, i32) {
    %c0_i32 = arith.constant 0 : i32
    %c0_i32_0 = arith.constant 0 : i32
    %c0_i32_1 = arith.constant 0 : i32
    return %c0_i32, %c0_i32_0 : i32, i32
  }
  func.func @transform_2(%arg0: i32) -> (i32, i32) {
    %c0_i32 = arith.constant 0 : i32
    %c0_i32_0 = arith.constant 0 : i32
    %c0_i32_1 = arith.constant 0 : i32
    return %c0_i32, %c0_i32_0 : i32, i32
  }
  func.func @transform_3(%arg0: i32) -> (i32, i32) {
    %c0_i32 = arith.constant 0 : i32
    %c0_i32_0 = arith.constant 0 : i32
    %c0_i32_1 = arith.constant 0 : i32
    return %c0_i32, %c0_i32_0 : i32, i32
  }
  func.func @transform_4(%arg0: i32) -> (i32, i32) {
    %c0_i32 = arith.constant 0 : i32
    %c0_i32_0 = arith.constant 0 : i32
    %c0_i32_1 = arith.constant 0 : i32
    return %c0_i32, %c0_i32_0 : i32, i32
  }
  func.func @transform_5(%arg0: i32) -> (i32, i32, i32) {
    %c0_i32 = arith.constant 0 : i32
    %c0_i32_0 = arith.constant 0 : i32
    %c0_i32_1 = arith.constant 0 : i32
    return %arg0, %c0_i32, %c0_i32_0 : i32, i32, i32
  }
}

</mosaic_0001>

<llo_original>
// kernel: tpu_custom_call.1
$region0: #{tpu_custom_call.1}
  #allocation0 [shape = 'u32[]', space=smem, size = 0x4, offset = 0x4, fixed_abs, tag = 'smem constant byte address 0x4 - core index']
  #allocation1 [shape = 'u32[144,128]{1,0:T(1,128)}', space=vmem, size = 0x12000, scoped, tag = 'internal scratch']
  #allocation2 [shape = 'bf16[80,128]{1,0:T(8,128)(2,1)}', space=vmem, size = 0x5000, scoped, tag = 'scratch operand']
  %s0 = inlined_call_operand.vmem [shape: bf16[2,360,8], index: 0, kind: input, shape index: {}]
  %s1 = inlined_call_operand.vmem [shape: bf16[128,128], index: 1, kind: input, shape index: {}]
  %s2 = inlined_call_operand.vmem [shape: f32[80,1], index: 2, kind: input, shape index: {}]
  %s3 = inlined_call_operand.vmem [shape: f32[1,128], index: 3, kind: input, shape index: {}]
  %s4 = inlined_call_operand.vmem [shape: f32[1,128], index: 4, kind: input, shape index: {}]
  %s5 = inlined_call_operand.hbm [shape: bf16[2,80,128], index: 5, kind: output, shape index: {}]
  %s6 = sld [smem:[#allocation0]]
  $region53: #{tpu_custom_call.1} parent=0
    _
  %s8 = ssub.s32 1, %s6
  %s9 = scalar_select 0, %s8, %s6
  $region1: #{tpu_custom_call.1} parent=0
    #allocation3 [shape = 'u8[40960]{0}', space=vmem, size = 0xa000, scoped, tag = 'output window, operand 0']
    #allocation4 [shape = 's32[2]{0}', space=sflag, size = 0x8, scoped, tag = 'scoped memory for tpu_custom_call.1']
    %10 = vsyncpa [#allocation4], 0
    %s11 = scalar_lea.sflag [#allocation4], 1
    %12 = vsyncpa %s11, 0
    loop: start=0, step=1, limit=4
    $region2: #{tpu_custom_call.1} parent=1 // loop_pre_header
      _
    $region3: #{tpu_custom_call.1} parent=1 // loop_header
      %s14 = sphi 0, %s18
      %p15 = scmp.ge.s32.totalorder %s14, 4
      %s24 = sphi 0, %s26
      %s27 = sphi 0, %s24
      %s28 = sphi 0, %s27
      %s44 = sphi 0, %s28
      %s48 = sphi 0, %s48
      %s50 = sphi 0, %s48
      %s51 = sphi 0, %s50
      %s65 = sphi 0, %s51
      %s69 = sphi 0, %s69
      %s71 = sphi 0, %s69
      %s72 = sphi 0, %s71
      %s86 = sphi 0, %s72
      %s90 = sphi 0, %s90
      %s92 = sphi 0, %s90
      %s93 = sphi 0, %s92
      %s107 = sphi 0, %s93
      %s111 = sphi 0, %s111
      %s113 = sphi 0, %s111
      %s114 = sphi 0, %s113
      %s128 = sphi 0, %s114
      %s134 = sphi 0, %s136
      %s137 = sphi 0, %s134
      %s138 = sphi 0, %s137
      %s154 = sphi 0, %s138
    $region4: #{tpu_custom_call.1} parent=1 // loop_header_branch
      %17 = sbr.rel (%p15) target = $region8
    $region5: #{tpu_custom_call.1} parent=1 // loop_body
      %s19 = ssub.s32 %s14, 1
      %s20 = ssub.s32 %s14, 2
      %s21 = sadd.s32 %s14, 1
      %s22 = ssub.s32 %s14, %s21
      %p23 = scmp.eq.s32.totalorder %s22, 0
      %s25 = sadd.s32 %s24, 1
      %s26 = scalar_select %p23, %s24, %s25
      %p29 = pneg %p23
      %p30 = scmp.eq.s32.totalorder %s14, 1
      %p31 = por %p29, %p30
      %p32 = scmp.ne.s32.totalorder %s24, %s27
      %p33 = scmp.eq.s32.totalorder %s14, 0
      %p34 = por %p32, %p33
      %p35 = scmp.ne.s32.totalorder %s24, %s27
      %p36 = scmp.eq.s32.totalorder %s19, 1
      %p37 = por %p35, %p36
      %p38 = scmp.ne.s32.totalorder %s27, %s28
      %p39 = scmp.eq.s32.totalorder %s19, 0
      %p40 = por %p38, %p39
      %p41 = scmp.ne.s32.totalorder %s27, %s28
      %p42 = scmp.eq.s32.totalorder %s20, 1
      %p43 = por %p41, %p42
      %p45 = scmp.ne.s32.totalorder %s28, %s44
      %p46 = scmp.eq.s32.totalorder %s20, 0
      %p47 = por %p45, %p46
      %s49 = sadd.s32 %s48, 1
      %p52 = scmp.eq.s32.totalorder %s14, 1
      %p53 = scmp.ne.s32.totalorder %s48, %s50
      %p54 = scmp.eq.s32.totalorder %s14, 0
      %p55 = por %p53, %p54
      %p56 = scmp.ne.s32.totalorder %s48, %s50
      %p57 = scmp.eq.s32.totalorder %s19, 1
      %p58 = por %p56, %p57
      %p59 = scmp.ne.s32.totalorder %s50, %s51
      %p60 = scmp.eq.s32.totalorder %s19, 0
      %p61 = por %p59, %p60
      %p62 = scmp.ne.s32.totalorder %s50, %s51
      %p63 = scmp.eq.s32.totalorder %s20, 1
      %p64 = por %p62, %p63
      %p66 = scmp.ne.s32.totalorder %s51, %s65
      %p67 = scmp.eq.s32.totalorder %s20, 0
      %p68 = por %p66, %p67
      %s70 = sadd.s32 %s69, 1
      %p73 = scmp.eq.s32.totalorder %s14, 1
      %p74 = scmp.ne.s32.totalorder %s69, %s71
      %p75 = scmp.eq.s32.totalorder %s14, 0
      %p76 = por %p74, %p75
      %p77 = scmp.ne.s32.totalorder %s69, %s71
      %p78 = scmp.eq.s32.totalorder %s19, 1
      %p79 = por %p77, %p78
      %p80 = scmp.ne.s32.totalorder %s71, %s72
      %p81 = scmp.eq.s32.totalorder %s19, 0
      %p82 = por %p80, %p81
      %p83 = scmp.ne.s32.totalorder %s71, %s72
      %p84 = scmp.eq.s32.totalorder %s20, 1
      %p85 = por %p83, %p84
      %p87 = scmp.ne.s32.totalorder %s72, %s86
      %p88 = scmp.eq.s32.totalorder %s20, 0
      %p89 = por %p87, %p88
      %s91 = sadd.s32 %s90, 1
      %p94 = scmp.eq.s32.totalorder %s14, 1
      %p95 = scmp.ne.s32.totalorder %s90, %s92
      %p96 = scmp.eq.s32.totalorder %s14, 0
      %p97 = por %p95, %p96
      %p98 = scmp.ne.s32.totalorder %s90, %s92
      %p99 = scmp.eq.s32.totalorder %s19, 1
      %p100 = por %p98, %p99
      %p101 = scmp.ne.s32.totalorder %s92, %s93
      %p102 = scmp.eq.s32.totalorder %s19, 0
      %p103 = por %p101, %p102
      %p104 = scmp.ne.s32.totalorder %s92, %s93
      %p105 = scmp.eq.s32.totalorder %s20, 1
      %p106 = por %p104, %p105
      %p108 = scmp.ne.s32.totalorder %s93, %s107
      %p109 = scmp.eq.s32.totalorder %s20, 0
      %p110 = por %p108, %p109
      %s112 = sadd.s32 %s111, 1
      %p115 = scmp.eq.s32.totalorder %s14, 1
      %p116 = scmp.ne.s32.totalorder %s111, %s113
      %p117 = scmp.eq.s32.totalorder %s14, 0
      %p118 = por %p116, %p117
      %p119 = scmp.ne.s32.totalorder %s111, %s113
      %p120 = scmp.eq.s32.totalorder %s19, 1
      %p121 = por %p119, %p120
      %p122 = scmp.ne.s32.totalorder %s113, %s114
      %p123 = scmp.eq.s32.totalorder %s19, 0
      %p124 = por %p122, %p123
      %p125 = scmp.ne.s32.totalorder %s113, %s114
      %p126 = scmp.eq.s32.totalorder %s20, 1
      %p127 = por %p125, %p126
      %p129 = scmp.ne.s32.totalorder %s114, %s128
      %p130 = scmp.eq.s32.totalorder %s20, 0
      %p131 = por %p129, %p130
      %s132 = ssub.s32 %s14, %s21
      %p133 = scmp.eq.s32.totalorder %s132, 0
      %s135 = sadd.s32 %s134, 1
      %s136 = scalar_select %p133, %s134, %s135
      %p139 = pneg %p133
      %p140 = scmp.eq.s32.totalorder %s14, 1
      %p141 = por %p139, %p140
      %p142 = scmp.ne.s32.totalorder %s134, %s137
      %p143 = scmp.eq.s32.totalorder %s14, 0
      %p144 = por %p142, %p143
      %p145 = scmp.ne.s32.totalorder %s134, %s137
      %p146 = scmp.eq.s32.totalorder %s19, 1
      %p147 = por %p145, %p146
      %p148 = scmp.ne.s32.totalorder %s137, %s138
      %p149 = scmp.eq.s32.totalorder %s19, 0
      %p150 = por %p148, %p149
      %p151 = scmp.ne.s32.totalorder %s137, %s138
      %p152 = scmp.eq.s32.totalorder %s20, 1
      %p153 = por %p151, %p152
      %p155 = scmp.ne.s32.totalorder %s138, %s154
      %p156 = scmp.eq.s32.totalorder %s20, 0
      %p157 = por %p155, %p156
      %p158 = scmp.le.s32.totalorder 1, %s14
      %p159 = scmp.lt.s32.totalorder %s14, 3
      %p160 = pnand %p158, %p159
      %p161 = pneg %p160
      // Predicated region
      $region9: #{tpu_custom_call.1} parent=5 // pred_check
        _
      $region10: #{tpu_custom_call.1} parent=5 // pred_check_branch
        %163 = sbr.rel (%p160) target = $region12
      $region11: #{tpu_custom_call.1} parent=5 // pred_region
        %s164 = ssub.s32 %s14, 1
        // Predicated region
        $region13: #{tpu_custom_call.1} parent=11 // pred_check
          %p165 = pneg %p61
        $region14: #{tpu_custom_call.1} parent=11 // pred_check_branch
          %167 = sbr.rel (%p165) target = $region16
        $region15: #{tpu_custom_call.1} parent=11 // pred_region
          _
        $region16: #{tpu_custom_call.1} parent=11 // pred_fallthru
          _
        // Predicated region
        $region17: #{tpu_custom_call.1} parent=11 // pred_check
          %p168 = pneg %p82
        $region18: #{tpu_custom_call.1} parent=11 // pred_check_branch
          %170 = sbr.rel (%p168) target = $region20
        $region19: #{tpu_custom_call.1} parent=11 // pred_region
          _
        $region20: #{tpu_custom_call.1} parent=11 // pred_fallthru
          _
        // Predicated region
        $region21: #{tpu_custom_call.1} parent=11 // pred_check
          %p171 = pneg %p103
        $region22: #{tpu_custom_call.1} parent=11 // pred_check_branch
          %173 = sbr.rel (%p171) target = $region24
        $region23: #{tpu_custom_call.1} parent=11 // pred_region
          _
        $region24: #{tpu_custom_call.1} parent=11 // pred_fallthru
          _
        // Predicated region
        $region25: #{tpu_custom_call.1} parent=11 // pred_check
          %p174 = pneg %p124
        $region26: #{tpu_custom_call.1} parent=11 // pred_check_branch
          %176 = sbr.rel (%p174) target = $region28
        $region27: #{tpu_custom_call.1} parent=11 // pred_region
          _
        $region28: #{tpu_custom_call.1} parent=11 // pred_fallthru
          _
      $region12: #{tpu_custom_call.1} parent=5 // pred_fallthru
        _
      %p177 = scmp.lt.s32.totalorder %s14, 2
      // Predicated region
      $region29: #{tpu_custom_call.1} parent=5 // pred_check
        %p178 = pneg %p177
      $region30: #{tpu_custom_call.1} parent=5 // pred_check_branch
        %180 = sbr.rel (%p178) target = $region32
      $region31: #{tpu_custom_call.1} parent=5 // pred_region
        // Predicated region
        $region33: #{tpu_custom_call.1} parent=31 // pred_check
          %p181 = pneg %p34
        $region34: #{tpu_custom_call.1} parent=31 // pred_check_branch
          %183 = sbr.rel (%p181) target = $region36
        $region35: #{tpu_custom_call.1} parent=31 // pred_region
          %p184 = scmp.lt.s32.totalorder %s14, 1
          %s185 = scalar_select %p184, %s14, 1
          %s186 = smul.addr %s185, 45
          %s187 = smul.addr %s186, 4
          %s188 = scalar_lea.vmem %s0, %s187
        $region36: #{tpu_custom_call.1} parent=31 // pred_fallthru
          _
      $region32: #{tpu_custom_call.1} parent=5 // pred_fallthru
        _
      %p189 = scmp.le.s32.totalorder 1, %s14
      %p190 = scmp.lt.s32.totalorder %s14, 3
      %p191 = pnand %p189, %p190
      %p192 = pneg %p191
      // Predicated region
      $region37: #{tpu_custom_call.1} parent=5 // pred_check
        _
      $region38: #{tpu_custom_call.1} parent=5 // pred_check_branch
        %194 = sbr.rel (%p191) target = $region40
      $region39: #{tpu_custom_call.1} parent=5 // pred_region
        %s195 = ssub.s32 %s14, 1
        %p196 = scmp.lt.s32.totalorder %s19, 1
        %s197 = scalar_select %p196, %s19, 1
        %s198 = smul.addr %s197, 45
        %s199 = smul.addr %s198, 4
        %s200 = scalar_lea.vmem %s0, %s199
        %p201 = pneg %p40
        %p202 = pneg %p37
        %p203 = pneg %p61
        %p204 = pneg %p58
        %p205 = pneg %p82
        %p206 = pneg %p79
        %p207 = pneg %p103
        %p208 = pneg %p100
        %p209 = pneg %p124
        %p210 = pneg %p121
        %p211 = pneg %p150
        %p212 = pneg %p147
        %s213 = sand.u32 %s137, 1
        %s214 = scalar_lea.sflag [#allocation4], %s213
        %s215 = sand.u32 %s137, 1
        %s216 = smul.addr %s215, 40
        %s217 = scalar_lea.vmem [#allocation3], %s216
        %p218 = scmp.lt.s32.totalorder %s19, 1
        %s219 = scalar_select %p218, %s19, 1
        %s220 = smul.addr %s219, 45
        %s221 = smul.addr %s220, 4
        %s222 = scalar_lea.vmem %s0, %s221
        %v224 = vld [vmem:[%s222] sm:$0xf]
        %v225 = vld [vmem:[%s222 + $0x4] sm:$0xf]
        %v226 = vld [vmem:[%s222 + $0x8] sm:$0xf]
        %v227 = vld [vmem:[%s222 + $0xc] sm:$0xf]
        %v228 = vld [vmem:[%s222 + $0x10] sm:$0xf]
        %v229 = vld [vmem:[%s222 + $0x14] sm:$0xf]
        %v230 = vld [vmem:[%s222 + $0x18] sm:$0xf]
        %v231 = vld [vmem:[%s222 + $0x1c] sm:$0xf]
        %v232 = vld [vmem:[%s222 + $0x20] sm:$0xf]
        %v233 = vld [vmem:[%s222 + $0x24] sm:$0xf]
        %vm234 = vcmask 60416
        %235 = vst.msk [vmem:[#allocation2] sm:$0xf] %vm234, %v224
        %236 = vst.msk [vmem:[#allocation2 + $0x4] sm:$0xf] %vm234, %v225
        %237 = vst.msk [vmem:[#allocation2 + $0x8] sm:$0xf] %vm234, %v226
        %238 = vst.msk [vmem:[#allocation2 + $0xc] sm:$0xf] %vm234, %v227
        %239 = vst.msk [vmem:[#allocation2 + $0x10] sm:$0xf] %vm234, %v228
        %240 = vst.msk [vmem:[#allocation2 + $0x14] sm:$0xf] %vm234, %v229
        %241 = vst.msk [vmem:[#allocation2 + $0x18] sm:$0xf] %vm234, %v230
        %242 = vst.msk [vmem:[#allocation2 + $0x1c] sm:$0xf] %vm234, %v231
        %243 = vst.msk [vmem:[#allocation2 + $0x20] sm:$0xf] %vm234, %v232
        %244 = vst.msk [vmem:[#allocation2 + $0x24] sm:$0xf] %vm234, %v233
        %v245 = vld [vmem:[%s222 + $0x2c] sm:$0xe]
        %v246 = vld [vmem:[%s222 + $0x30] sm:$0xf]
        %v247 = vld [vmem:[%s222 + $0x34] sm:$0xf]
        %v248 = vld [vmem:[%s222 + $0x38] sm:$0xf]
        %v249 = vld [vmem:[%s222 + $0x3c] sm:$0xf]
        %v250 = vld [vmem:[%s222 + $0x40] sm:$0xf]
        %v251 = vld [vmem:[%s222 + $0x44] sm:$0xf]
        %v252 = vld [vmem:[%s222 + $0x48] sm:$0xf]
        %v253 = vld [vmem:[%s222 + $0x4c] sm:$0xf]
        %v254 = vld [vmem:[%s222 + $0x50] sm:$0xf]
        %v255 = vld [vmem:[%s222 + $0x54] sm:$0x1]
        %vm267 = vcmask 1042432
        %vm268 = vcmask 1046532
        %vm269 = vmor %vm267, %vm268
        %v270 = vrot.slane %v245, 5
        %v271 = vrot.slane %v270, 4
        %v272 = vrot.slane %v246, 5
        %v273 = vsel %vm269, %v271, %v272
        %v274 = vrot.slane %v272, 4
        %v275 = vrot.slane %v247, 5
        %v276 = vsel %vm269, %v274, %v275
        %v277 = vrot.slane %v275, 4
        %v278 = vrot.slane %v248, 5
        %v279 = vsel %vm269, %v277, %v278
        %v280 = vrot.slane %v278, 4
        %v281 = vrot.slane %v249, 5
        %v282 = vsel %vm269, %v280, %v281
        %v283 = vrot.slane %v281, 4
        %v284 = vrot.slane %v250, 5
        %v285 = vsel %vm269, %v283, %v284
        %v286 = vrot.slane %v284, 4
        %v287 = vrot.slane %v251, 5
        %v288 = vsel %vm269, %v286, %v287
        %v289 = vrot.slane %v287, 4
        %v290 = vrot.slane %v252, 5
        %v291 = vsel %vm269, %v289, %v290
        %v292 = vrot.slane %v290, 4
        %v293 = vrot.slane %v253, 5
        %v294 = vsel %vm269, %v292, %v293
        %v295 = vrot.slane %v293, 4
        %v296 = vrot.slane %v254, 5
        %v297 = vsel %vm269, %v295, %v296
        %v298 = vrot.slane %v296, 4
        %v299 = vrot.slane %v255, 5
        %v300 = vsel %vm269, %v298, %v299
        %301 = vrot.lane.b32.xlu0 %v273, 8
        %v302 = vpop.permute.xlu0 %301
        %303 = vrot.lane.b32.xlu0 %v276, 8
        %v304 = vpop.permute.xlu0 %303
        %305 = vrot.lane.b32.xlu0 %v279, 8
        %v306 = vpop.permute.xlu0 %305
        %307 = vrot.lane.b32.xlu0 %v282, 8
        %v308 = vpop.permute.xlu0 %307
        %309 = vrot.lane.b32.xlu0 %v285, 8
        %v310 = vpop.permute.xlu0 %309
        %311 = vrot.lane.b32.xlu0 %v288, 8
        %v312 = vpop.permute.xlu0 %311
        %313 = vrot.lane.b32.xlu0 %v291, 8
        %v314 = vpop.permute.xlu0 %313
        %315 = vrot.lane.b32.xlu0 %v294, 8
        %v316 = vpop.permute.xlu0 %315
        %317 = vrot.lane.b32.xlu0 %v297, 8
        %v318 = vpop.permute.xlu0 %317
        %319 = vrot.lane.b32.xlu0 %v300, 8
        %v320 = vpop.permute.xlu0 %319
        %vm331 = vcmask 126016
        %332 = vst.msk [vmem:[#allocation2] sm:$0xf] %vm331, %v302
        %333 = vst.msk [vmem:[#allocation2 + $0x4] sm:$0xf] %vm331, %v304
        %334 = vst.msk [vmem:[#allocation2 + $0x8] sm:$0xf] %vm331, %v306
        %335 = vst.msk [vmem:[#allocation2 + $0xc] sm:$0xf] %vm331, %v308
        %336 = vst.msk [vmem:[#allocation2 + $0x10] sm:$0xf] %vm331, %v310
        %337 = vst.msk [vmem:[#allocation2 + $0x14] sm:$0xf] %vm331, %v312
        %338 = vst.msk [vmem:[#allocation2 + $0x18] sm:$0xf] %vm331, %v314
        %339 = vst.msk [vmem:[#allocation2 + $0x1c] sm:$0xf] %vm331, %v316
        %340 = vst.msk [vmem:[#allocation2 + $0x20] sm:$0xf] %vm331, %v318
        %341 = vst.msk [vmem:[#allocation2 + $0x24] sm:$0xf] %vm331, %v320
        %v342 = vld [vmem:[%s222] sm:$0xf]
        %v343 = vld [vmem:[%s222 + $0x4] sm:$0xf]
        %v344 = vld [vmem:[%s222 + $0x8] sm:$0xf]
        %v345 = vld [vmem:[%s222 + $0xc] sm:$0xf]
        %v346 = vld [vmem:[%s222 + $0x10] sm:$0xf]
        %v347 = vld [vmem:[%s222 + $0x14] sm:$0xf]
        %v348 = vld [vmem:[%s222 + $0x18] sm:$0xf]
        %v349 = vld [vmem:[%s222 + $0x1c] sm:$0xf]
        %v350 = vld [vmem:[%s222 + $0x20] sm:$0xf]
        %v351 = vld [vmem:[%s222 + $0x24] sm:$0xf]
        %v352 = vld [vmem:[%s222 + $0x28] sm:$0x1]
        %vm353 = vsmask.f32 3328
        %vm354 = vsmask.f32 7440
        %vm355 = vmor %vm353, %vm354
        %v357 = vshrl.u32 %v342, 16
        %v359 = vrot.slane %v357, 4
        %v360 = vshll.u32 %v342, 16
        %v362 = vrot.slane %v360, 5
        %v363 = vor.u32 %v359, %v362
        %v364 = vrot.slane %v363, 4
        %v366 = vshll.u32 %v343, 16
        %v368 = vrot.slane %v366, 5
        %v369 = vsel %vm355, %v364, %v368
        %v370 = vshrl.u32 %v343, 16
        %v372 = vrot.slane %v370, 4
        %v373 = vor.u32 %v372, %v368
        %v374 = vrot.slane %v373, 4
        %v376 = vshll.u32 %v344, 16
        %v378 = vrot.slane %v376, 5
        %v379 = vsel %vm355, %v374, %v378
        %v380 = vshrl.u32 %v344, 16
        %v382 = vrot.slane %v380, 4
        %v383 = vor.u32 %v382, %v378
        %v384 = vrot.slane %v383, 4
        %v386 = vshll.u32 %v345, 16
        %v388 = vrot.slane %v386, 5
        %v389 = vsel %vm355, %v384, %v388
        %v390 = vshrl.u32 %v345, 16
        %v392 = vrot.slane %v390, 4
        %v393 = vor.u32 %v392, %v388
        %v394 = vrot.slane %v393, 4
        %v396 = vshll.u32 %v346, 16
        %v398 = vrot.slane %v396, 5
        %v399 = vsel %vm355, %v394, %v398
        %v400 = vshrl.u32 %v346, 16
        %v402 = vrot.slane %v400, 4
        %v403 = vor.u32 %v402, %v398
        %v404 = vrot.slane %v403, 4
        %v406 = vshll.u32 %v347, 16
        %v408 = vrot.slane %v406, 5
        %v409 = vsel %vm355, %v404, %v408
        %v410 = vshrl.u32 %v347, 16
        %v412 = vrot.slane %v410, 4
        %v413 = vor.u32 %v412, %v408
        %v414 = vrot.slane %v413, 4
        %v416 = vshll.u32 %v348, 16
        %v418 = vrot.slane %v416, 5
        %v419 = vsel %vm355, %v414, %v418
        %v420 = vshrl.u32 %v348, 16
        %v422 = vrot.slane %v420, 4
        %v423 = vor.u32 %v422, %v418
        %v424 = vrot.slane %v423, 4
        %v426 = vshll.u32 %v349, 16
        %v428 = vrot.slane %v426, 5
        %v429 = vsel %vm355, %v424, %v428
        %v430 = vshrl.u32 %v349, 16
        %v432 = vrot.slane %v430, 4
        %v433 = vor.u32 %v432, %v428
        %v434 = vrot.slane %v433, 4
        %v436 = vshll.u32 %v350, 16
        %v438 = vrot.slane %v436, 5
        %v439 = vsel %vm355, %v434, %v438
        %v440 = vshrl.u32 %v350, 16
        %v442 = vrot.slane %v440, 4
        %v443 = vor.u32 %v442, %v438
        %v444 = vrot.slane %v443, 4
        %v446 = vshll.u32 %v351, 16
        %v448 = vrot.slane %v446, 5
        %v449 = vsel %vm355, %v444, %v448
        %v450 = vshrl.u32 %v351, 16
        %v452 = vrot.slane %v450, 4
        %v453 = vor.u32 %v452, %v448
        %v454 = vrot.slane %v453, 4
        %v456 = vshll.u32 %v352, 16
        %v458 = vrot.slane %v456, 5
        %v459 = vsel %vm355, %v454, %v458
        %460 = vrot.lane.b32.xlu0 %v369, 16
        %v461 = vpop.permute.xlu0 %460
        %462 = vrot.lane.b32.xlu0 %v379, 16
        %v463 = vpop.permute.xlu0 %462
        %464 = vrot.lane.b32.xlu0 %v389, 16
        %v465 = vpop.permute.xlu0 %464
        %466 = vrot.lane.b32.xlu0 %v399, 16
        %v467 = vpop.permute.xlu0 %466
        %468 = vrot.lane.b32.xlu0 %v409, 16
        %v469 = vpop.permute.xlu0 %468
        %470 = vrot.lane.b32.xlu0 %v419, 16
        %v471 = vpop.permute.xlu0 %470
        %472 = vrot.lane.b32.xlu0 %v429, 16
        %v473 = vpop.permute.xlu0 %472
        %474 = vrot.lane.b32.xlu0 %v439, 16
        %v475 = vpop.permute.xlu0 %474
        %476 = vrot.lane.b32.xlu0 %v449, 16
        %v477 = vpop.permute.xlu0 %476
        %478 = vrot.lane.b32.xlu0 %v459, 16
        %v479 = vpop.permute.xlu0 %478
        %vm490 = vcmask 191616
        %491 = vst.msk [vmem:[#allocation2] sm:$0xf] %vm490, %v461
        %492 = vst.msk [vmem:[#allocation2 + $0x4] sm:$0xf] %vm490, %v463
        %493 = vst.msk [vmem:[#allocation2 + $0x8] sm:$0xf] %vm490, %v465
        %494 = vst.msk [vmem:[#allocation2 + $0xc] sm:$0xf] %vm490, %v467
        %495 = vst.msk [vmem:[#allocation2 + $0x10] sm:$0xf] %vm490, %v469
        %496 = vst.msk [vmem:[#allocation2 + $0x14] sm:$0xf] %vm490, %v471
        %497 = vst.msk [vmem:[#allocation2 + $0x18] sm:$0xf] %vm490, %v473
        %498 = vst.msk [vmem:[#allocation2 + $0x1c] sm:$0xf] %vm490, %v475
        %499 = vst.msk [vmem:[#allocation2 + $0x20] sm:$0xf] %vm490, %v477
        %500 = vst.msk [vmem:[#allocation2 + $0x24] sm:$0xf] %vm490, %v479
        %v501 = vld [vmem:[%s222 + $0x2c] sm:$0xe]
        %v502 = vld [vmem:[%s222 + $0x30] sm:$0xf]
        %v503 = vld [vmem:[%s222 + $0x34] sm:$0xf]
        %v504 = vld [vmem:[%s222 + $0x38] sm:$0xf]
        %v505 = vld [vmem:[%s222 + $0x3c] sm:$0xf]
        %v506 = vld [vmem:[%s222 + $0x40] sm:$0xf]
        %v507 = vld [vmem:[%s222 + $0x44] sm:$0xf]
        %v508 = vld [vmem:[%s222 + $0x48] sm:$0xf]
        %v509 = vld [vmem:[%s222 + $0x4c] sm:$0xf]
        %v510 = vld [vmem:[%s222 + $0x50] sm:$0xf]
        %v511 = vld [vmem:[%s222 + $0x54] sm:$0x3]
        %vm512 = vsmask.f32 2304
        %vm513 = vsmask.f32 6416
        %vm514 = vmor %vm512, %vm513
        %v516 = vshrl.u32 %v501, 16
        %v518 = vrot.slane %v516, 5
        %v519 = vshll.u32 %v501, 16
        %v521 = vrot.slane %v519, 6
        %v522 = vor.u32 %v518, %v521
        %v523 = vrot.slane %v522, 4
        %v525 = vshrl.u32 %v502, 16
        %v527 = vrot.slane %v525, 5
        %v528 = vshll.u32 %v502, 16
        %v530 = vrot.slane %v528, 6
        %v531 = vor.u32 %v527, %v530
        %v532 = vsel %vm514, %v523, %v531
        %v533 = vrot.slane %v531, 4
        %v535 = vshrl.u32 %v503, 16
        %v537 = vrot.slane %v535, 5
        %v538 = vshll.u32 %v503, 16
        %v540 = vrot.slane %v538, 6
        %v541 = vor.u32 %v537, %v540
        %v542 = vsel %vm514, %v533, %v541
        %v543 = vrot.slane %v541, 4
        %v545 = vshrl.u32 %v504, 16
        %v547 = vrot.slane %v545, 5
        %v548 = vshll.u32 %v504, 16
        %v550 = vrot.slane %v548, 6
        %v551 = vor.u32 %v547, %v550
        %v552 = vsel %vm514, %v543, %v551
        %v553 = vrot.slane %v551, 4
        %v555 = vshrl.u32 %v505, 16
        %v557 = vrot.slane %v555, 5
        %v558 = vshll.u32 %v505, 16
        %v560 = vrot.slane %v558, 6
        %v561 = vor.u32 %v557, %v560
        %v562 = vsel %vm514, %v553, %v561
        %v563 = vrot.slane %v561, 4
        %v565 = vshrl.u32 %v506, 16
        %v567 = vrot.slane %v565, 5
        %v568 = vshll.u32 %v506, 16
        %v570 = vrot.slane %v568, 6
        %v571 = vor.u32 %v567, %v570
        %v572 = vsel %vm514, %v563, %v571
        %v573 = vrot.slane %v571, 4
        %v575 = vshrl.u32 %v507, 16
        %v577 = vrot.slane %v575, 5
        %v578 = vshll.u32 %v507, 16
        %v580 = vrot.slane %v578, 6
        %v581 = vor.u32 %v577, %v580
        %v582 = vsel %vm514, %v573, %v581
        %v583 = vrot.slane %v581, 4
        %v585 = vshrl.u32 %v508, 16
        %v587 = vrot.slane %v585, 5
        %v588 = vshll.u32 %v508, 16
        %v590 = vrot.slane %v588, 6
        %v591 = vor.u32 %v587, %v590
        %v592 = vsel %vm514, %v583, %v591
        %v593 = vrot.slane %v591, 4
        %v595 = vshrl.u32 %v509, 16
        %v597 = vrot.slane %v595, 5
        %v598 = vshll.u32 %v509, 16
        %v600 = vrot.slane %v598, 6
        %v601 = vor.u32 %v597, %v600
        %v602 = vsel %vm514, %v593, %v601
        %v603 = vrot.slane %v601, 4
        %v605 = vshrl.u32 %v510, 16
        %v607 = vrot.slane %v605, 5
        %v608 = vshll.u32 %v510, 16
        %v610 = vrot.slane %v608, 6
        %v611 = vor.u32 %v607, %v610
        %v612 = vsel %vm514, %v603, %v611
        %v613 = vrot.slane %v611, 4
        %v615 = vshrl.u32 %v511, 16
        %v617 = vrot.slane %v615, 5
        %v618 = vshll.u32 %v511, 16
        %v620 = vrot.slane %v618, 6
        %v621 = vor.u32 %v617, %v620
        %v622 = vsel %vm514, %v613, %v621
        %623 = vrot.lane.b32.xlu0 %v532, 24
        %v624 = vpop.permute.xlu0 %623
        %625 = vrot.lane.b32.xlu0 %v542, 24
        %v626 = vpop.permute.xlu0 %625
        %627 = vrot.lane.b32.xlu0 %v552, 24
        %v628 = vpop.permute.xlu0 %627
        %629 = vrot.lane.b32.xlu0 %v562, 24
        %v630 = vpop.permute.xlu0 %629
        %631 = vrot.lane.b32.xlu0 %v572, 24
        %v632 = vpop.permute.xlu0 %631
        %633 = vrot.lane.b32.xlu0 %v582, 24
        %v634 = vpop.permute.xlu0 %633
        %635 = vrot.lane.b32.xlu0 %v592, 24
        %v636 = vpop.permute.xlu0 %635
        %637 = vrot.lane.b32.xlu0 %v602, 24
        %v638 = vpop.permute.xlu0 %637
        %639 = vrot.lane.b32.xlu0 %v612, 24
        %v640 = vpop.permute.xlu0 %639
        %641 = vrot.lane.b32.xlu0 %v622, 24
        %v642 = vpop.permute.xlu0 %641
        %vm653 = vcmask 257216
        %654 = vst.msk [vmem:[#allocation2] sm:$0xf] %vm653, %v624
        %655 = vst.msk [vmem:[#allocation2 + $0x4] sm:$0xf] %vm653, %v626
        %656 = vst.msk [vmem:[#allocation2 + $0x8] sm:$0xf] %vm653, %v628
        %657 = vst.msk [vmem:[#allocation2 + $0xc] sm:$0xf] %vm653, %v630
        %658 = vst.msk [vmem:[#allocation2 + $0x10] sm:$0xf] %vm653, %v632
        %659 = vst.msk [vmem:[#allocation2 + $0x14] sm:$0xf] %vm653, %v634
        %660 = vst.msk [vmem:[#allocation2 + $0x18] sm:$0xf] %vm653, %v636
        %661 = vst.msk [vmem:[#allocation2 + $0x1c] sm:$0xf] %vm653, %v638
        %662 = vst.msk [vmem:[#allocation2 + $0x20] sm:$0xf] %vm653, %v640
        %663 = vst.msk [vmem:[#allocation2 + $0x24] sm:$0xf] %vm653, %v642
        %v664 = vld [vmem:[%s222 + $0x58] sm:$0xc]
        %v665 = vld [vmem:[%s222 + $0x5c] sm:$0xf]
        %v666 = vld [vmem:[%s222 + $0x60] sm:$0xf]
        %v667 = vld [vmem:[%s222 + $0x64] sm:$0xf]
        %v668 = vld [vmem:[%s222 + $0x68] sm:$0xf]
        %v669 = vld [vmem:[%s222 + $0x6c] sm:$0xf]
        %v670 = vld [vmem:[%s222 + $0x70] sm:$0xf]
        %v671 = vld [vmem:[%s222 + $0x74] sm:$0xf]
        %v672 = vld [vmem:[%s222 + $0x78] sm:$0xf]
        %v673 = vld [vmem:[%s222 + $0x7c] sm:$0xf]
        %v674 = vld [vmem:[%s222 + $0x80] sm:$0x3]
        %vm686 = vcmask 1041408
        %vm687 = vcmask 1045508
        %vm688 = vmor %vm686, %vm687
        %v689 = vrot.slane %v664, 6
        %v690 = vrot.slane %v689, 4
        %v691 = vrot.slane %v665, 6
        %v692 = vsel %vm688, %v690, %v691
        %v693 = vrot.slane %v691, 4
        %v694 = vrot.slane %v666, 6
        %v695 = vsel %vm688, %v693, %v694
        %v696 = vrot.slane %v694, 4
        %v697 = vrot.slane %v667, 6
        %v698 = vsel %vm688, %v696, %v697
        %v699 = vrot.slane %v697, 4
        %v700 = vrot.slane %v668, 6
        %v701 = vsel %vm688, %v699, %v700
        %v702 = vrot.slane %v700, 4
        %v703 = vrot.slane %v669, 6
        %v704 = vsel %vm688, %v702, %v703
        %v705 = vrot.slane %v703, 4
        %v706 = vrot.slane %v670, 6
        %v707 = vsel %vm688, %v705, %v706
        %v708 = vrot.slane %v706, 4
        %v709 = vrot.slane %v671, 6
        %v710 = vsel %vm688, %v708, %v709
        %v711 = vrot.slane %v709, 4
        %v712 = vrot.slane %v672, 6
        %v713 = vsel %vm688, %v711, %v712
        %v714 = vrot.slane %v712, 4
        %v715 = vrot.slane %v673, 6
        %v716 = vsel %vm688, %v714, %v715
        %v717 = vrot.slane %v715, 4
        %v718 = vrot.slane %v674, 6
        %v719 = vsel %vm688, %v717, %v718
        %720 = vrot.lane.b32.xlu0 %v692, 32
        %v721 = vpop.permute.xlu0 %720
        %722 = vrot.lane.b32.xlu0 %v695, 32
        %v723 = vpop.permute.xlu0 %722
        %724 = vrot.lane.b32.xlu0 %v698, 32
        %v725 = vpop.permute.xlu0 %724
        %726 = vrot.lane.b32.xlu0 %v701, 32
        %v727 = vpop.permute.xlu0 %726
        %728 = vrot.lane.b32.xlu0 %v704, 32
        %v729 = vpop.permute.xlu0 %728
        %730 = vrot.lane.b32.xlu0 %v707, 32
        %v731 = vpop.permute.xlu0 %730
        %732 = vrot.lane.b32.xlu0 %v710, 32
        %v733 = vpop.permute.xlu0 %732
        %734 = vrot.lane.b32.xlu0 %v713, 32
        %v735 = vpop.permute.xlu0 %734
        %736 = vrot.lane.b32.xlu0 %v716, 32
        %v737 = vpop.permute.xlu0 %736
        %738 = vrot.lane.b32.xlu0 %v719, 32
        %v739 = vpop.permute.xlu0 %738
        %vm750 = vcmask 322816
        %751 = vst.msk [vmem:[#allocation2] sm:$0xf] %vm750, %v721
        %752 = vst.msk [vmem:[#allocation2 + $0x4] sm:$0xf] %vm750, %v723
        %753 = vst.msk [vmem:[#allocation2 + $0x8] sm:$0xf] %vm750, %v725
        %754 = vst.msk [vmem:[#allocation2 + $0xc] sm:$0xf] %vm750, %v727
        %755 = vst.msk [vmem:[#allocation2 + $0x10] sm:$0xf] %vm750, %v729
        %756 = vst.msk [vmem:[#allocation2 + $0x14] sm:$0xf] %vm750, %v731
        %757 = vst.msk [vmem:[#allocation2 + $0x18] sm:$0xf] %vm750, %v733
        %758 = vst.msk [vmem:[#allocation2 + $0x1c] sm:$0xf] %vm750, %v735
        %759 = vst.msk [vmem:[#allocation2 + $0x20] sm:$0xf] %vm750, %v737
        %760 = vst.msk [vmem:[#allocation2 + $0x24] sm:$0xf] %vm750, %v739
        %v761 = vld [vmem:[%s222 + $0x84] sm:$0x8]
        %v762 = vld [vmem:[%s222 + $0x88] sm:$0xf]
        %v763 = vld [vmem:[%s222 + $0x8c] sm:$0xf]
        %v764 = vld [vmem:[%s222 + $0x90] sm:$0xf]
        %v765 = vld [vmem:[%s222 + $0x94] sm:$0xf]
        %v766 = vld [vmem:[%s222 + $0x98] sm:$0xf]
        %v767 = vld [vmem:[%s222 + $0x9c] sm:$0xf]
        %v768 = vld [vmem:[%s222 + $0xa0] sm:$0xf]
        %v769 = vld [vmem:[%s222 + $0xa4] sm:$0xf]
        %v770 = vld [vmem:[%s222 + $0xa8] sm:$0xf]
        %v771 = vld [vmem:[%s222 + $0xac] sm:$0x7]
        %vm783 = vcmask 1040384
        %vm784 = vcmask 1044484
        %vm785 = vmor %vm783, %vm784
        %v786 = vrot.slane %v761, 7
        %v787 = vrot.slane %v786, 4
        %v788 = vrot.slane %v762, 7
        %v789 = vsel %vm785, %v787, %v788
        %v790 = vrot.slane %v788, 4
        %v791 = vrot.slane %v763, 7
        %v792 = vsel %vm785, %v790, %v791
        %v793 = vrot.slane %v791, 4
        %v794 = vrot.slane %v764, 7
        %v795 = vsel %vm785, %v793, %v794
        %v796 = vrot.slane %v794, 4
        %v797 = vrot.slane %v765, 7
        %v798 = vsel %vm785, %v796, %v797
        %v799 = vrot.slane %v797, 4
        %v800 = vrot.slane %v766, 7
        %v801 = vsel %vm785, %v799, %v800
        %v802 = vrot.slane %v800, 4
        %v803 = vrot.slane %v767, 7
        %v804 = vsel %vm785, %v802, %v803
        %v805 = vrot.slane %v803, 4
        %v806 = vrot.slane %v768, 7
        %v807 = vsel %vm785, %v805, %v806
        %v808 = vrot.slane %v806, 4
        %v809 = vrot.slane %v769, 7
        %v810 = vsel %vm785, %v808, %v809
        %v811 = vrot.slane %v809, 4
        %v812 = vrot.slane %v770, 7
        %v813 = vsel %vm785, %v811, %v812
        %v814 = vrot.slane %v812, 4
        %v815 = vrot.slane %v771, 7
        %v816 = vsel %vm785, %v814, %v815
        %817 = vrot.lane.b32.xlu0 %v789, 40
        %v818 = vpop.permute.xlu0 %817
        %819 = vrot.lane.b32.xlu0 %v792, 40
        %v820 = vpop.permute.xlu0 %819
        %821 = vrot.lane.b32.xlu0 %v795, 40
        %v822 = vpop.permute.xlu0 %821
        %823 = vrot.lane.b32.xlu0 %v798, 40
        %v824 = vpop.permute.xlu0 %823
        %825 = vrot.lane.b32.xlu0 %v801, 40
        %v826 = vpop.permute.xlu0 %825
        %827 = vrot.lane.b32.xlu0 %v804, 40
        %v828 = vpop.permute.xlu0 %827
        %829 = vrot.lane.b32.xlu0 %v807, 40
        %v830 = vpop.permute.xlu0 %829
        %831 = vrot.lane.b32.xlu0 %v810, 40
        %v832 = vpop.permute.xlu0 %831
        %833 = vrot.lane.b32.xlu0 %v813, 40
        %v834 = vpop.permute.xlu0 %833
        %835 = vrot.lane.b32.xlu0 %v816, 40
        %v836 = vpop.permute.xlu0 %835
        %vm847 = vcmask 388416
        %848 = vst.msk [vmem:[#allocation2] sm:$0xf] %vm847, %v818
        %849 = vst.msk [vmem:[#allocation2 + $0x4] sm:$0xf] %vm847, %v820
        %850 = vst.msk [vmem:[#allocation2 + $0x8] sm:$0xf] %vm847, %v822
        %851 = vst.msk [vmem:[#allocation2 + $0xc] sm:$0xf] %vm847, %v824
        %852 = vst.msk [vmem:[#allocation2 + $0x10] sm:$0xf] %vm847, %v826
        %853 = vst.msk [vmem:[#allocation2 + $0x14] sm:$0xf] %vm847, %v828
        %854 = vst.msk [vmem:[#allocation2 + $0x18] sm:$0xf] %vm847, %v830
        %855 = vst.msk [vmem:[#allocation2 + $0x1c] sm:$0xf] %vm847, %v832
        %856 = vst.msk [vmem:[#allocation2 + $0x20] sm:$0xf] %vm847, %v834
        %857 = vst.msk [vmem:[#allocation2 + $0x24] sm:$0xf] %vm847, %v836
        %v858 = vld [vmem:[%s222 + $0x58] sm:$0xc]
        %v859 = vld [vmem:[%s222 + $0x5c] sm:$0xf]
        %v860 = vld [vmem:[%s222 + $0x60] sm:$0xf]
        %v861 = vld [vmem:[%s222 + $0x64] sm:$0xf]
        %v862 = vld [vmem:[%s222 + $0x68] sm:$0xf]
        %v863 = vld [vmem:[%s222 + $0x6c] sm:$0xf]
        %v864 = vld [vmem:[%s222 + $0x70] sm:$0xf]
        %v865 = vld [vmem:[%s222 + $0x74] sm:$0xf]
        %v866 = vld [vmem:[%s222 + $0x78] sm:$0xf]
        %v867 = vld [vmem:[%s222 + $0x7c] sm:$0xf]
        %v868 = vld [vmem:[%s222 + $0x80] sm:$0x7]
        %vm869 = vsmask.f32 1280
        %vm870 = vsmask.f32 5392
        %vm871 = vmor %vm869, %vm870
        %v873 = vshrl.u32 %v858, 16
        %v875 = vrot.slane %v873, 6
        %v876 = vshll.u32 %v858, 16
        %v878 = vrot.slane %v876, 7
        %v879 = vor.u32 %v875, %v878
        %v880 = vrot.slane %v879, 4
        %v882 = vshrl.u32 %v859, 16
        %v884 = vrot.slane %v882, 6
        %v885 = vshll.u32 %v859, 16
        %v887 = vrot.slane %v885, 7
        %v888 = vor.u32 %v884, %v887
        %v889 = vsel %vm871, %v880, %v888
        %v890 = vrot.slane %v888, 4
        %v892 = vshrl.u32 %v860, 16
        %v894 = vrot.slane %v892, 6
        %v895 = vshll.u32 %v860, 16
        %v897 = vrot.slane %v895, 7
        %v898 = vor.u32 %v894, %v897
        %v899 = vsel %vm871, %v890, %v898
        %v900 = vrot.slane %v898, 4
        %v902 = vshrl.u32 %v861, 16
        %v904 = vrot.slane %v902, 6
        %v905 = vshll.u32 %v861, 16
        %v907 = vrot.slane %v905, 7
        %v908 = vor.u32 %v904, %v907
        %v909 = vsel %vm871, %v900, %v908
        %v910 = vrot.slane %v908, 4
        %v912 = vshrl.u32 %v862, 16
        %v914 = vrot.slane %v912, 6
        %v915 = vshll.u32 %v862, 16
        %v917 = vrot.slane %v915, 7
        %v918 = vor.u32 %v914, %v917
        %v919 = vsel %vm871, %v910, %v918
        %v920 = vrot.slane %v918, 4
        %v922 = vshrl.u32 %v863, 16
        %v924 = vrot.slane %v922, 6
        %v925 = vshll.u32 %v863, 16
        %v927 = vrot.slane %v925, 7
        %v928 = vor.u32 %v924, %v927
        %v929 = vsel %vm871, %v920, %v928
        %v930 = vrot.slane %v928, 4
        %v932 = vshrl.u32 %v864, 16
        %v934 = vrot.slane %v932, 6
        %v935 = vshll.u32 %v864, 16
        %v937 = vrot.slane %v935, 7
        %v938 = vor.u32 %v934, %v937
        %v939 = vsel %vm871, %v930, %v938
        %v940 = vrot.slane %v938, 4
        %v942 = vshrl.u32 %v865, 16
        %v944 = vrot.slane %v942, 6
        %v945 = vshll.u32 %v865, 16
        %v947 = vrot.slane %v945, 7
        %v948 = vor.u32 %v944, %v947
        %v949 = vsel %vm871, %v940, %v948
        %v950 = vrot.slane %v948, 4
        %v952 = vshrl.u32 %v866, 16
        %v954 = vrot.slane %v952, 6
        %v955 = vshll.u32 %v866, 16
        %v957 = vrot.slane %v955, 7
        %v958 = vor.u32 %v954, %v957
        %v959 = vsel %vm871, %v950, %v958
        %v960 = vrot.slane %v958, 4
        %v962 = vshrl.u32 %v867, 16
        %v964 = vrot.slane %v962, 6
        %v965 = vshll.u32 %v867, 16
        %v967 = vrot.slane %v965, 7
        %v968 = vor.u32 %v964, %v967
        %v969 = vsel %vm871, %v960, %v968
        %v970 = vrot.slane %v968, 4
        %v972 = vshrl.u32 %v868, 16
        %v974 = vrot.slane %v972, 6
        %v975 = vshll.u32 %v868, 16
        %v977 = vrot.slane %v975, 7
        %v978 = vor.u32 %v974, %v977
        %v979 = vsel %vm871, %v970, %v978
        %980 = vrot.lane.b32.xlu0 %v889, 48
        %v981 = vpop.permute.xlu0 %980
        %982 = vrot.lane.b32.xlu0 %v899, 48
        %v983 = vpop.permute.xlu0 %982
        %984 = vrot.lane.b32.xlu0 %v909, 48
        %v985 = vpop.permute.xlu0 %984
        %986 = vrot.lane.b32.xlu0 %v919, 48
        %v987 = vpop.permute.xlu0 %986
        %988 = vrot.lane.b32.xlu0 %v929, 48
        %v989 = vpop.permute.xlu0 %988
        %990 = vrot.lane.b32.xlu0 %v939, 48
        %v991 = vpop.permute.xlu0 %990
        %992 = vrot.lane.b32.xlu0 %v949, 48
        %v993 = vpop.permute.xlu0 %992
        %994 = vrot.lane.b32.xlu0 %v959, 48
        %v995 = vpop.permute.xlu0 %994
        %996 = vrot.lane.b32.xlu0 %v969, 48
        %v997 = vpop.permute.xlu0 %996
        %998 = vrot.lane.b32.xlu0 %v979, 48
        %v999 = vpop.permute.xlu0 %998
        %vm1010 = vcmask 454016
        %1011 = vst.msk [vmem:[#allocation2] sm:$0xf] %vm1010, %v981
        %1012 = vst.msk [vmem:[#allocation2 + $0x4] sm:$0xf] %vm1010, %v983
        %1013 = vst.msk [vmem:[#allocation2 + $0x8] sm:$0xf] %vm1010, %v985
        %1014 = vst.msk [vmem:[#allocation2 + $0xc] sm:$0xf] %vm1010, %v987
        %1015 = vst.msk [vmem:[#allocation2 + $0x10] sm:$0xf] %vm1010, %v989
        %1016 = vst.msk [vmem:[#allocation2 + $0x14] sm:$0xf] %vm1010, %v991
        %1017 = vst.msk [vmem:[#allocation2 + $0x18] sm:$0xf] %vm1010, %v993
        %1018 = vst.msk [vmem:[#allocation2 + $0x1c] sm:$0xf] %vm1010, %v995
        %1019 = vst.msk [vmem:[#allocation2 + $0x20] sm:$0xf] %vm1010, %v997
        %1020 = vst.msk [vmem:[#allocation2 + $0x24] sm:$0xf] %vm1010, %v999
        %v1021 = vld [vmem:[%s222 + $0x84] sm:$0x8]
        %v1022 = vld [vmem:[%s222 + $0x88] sm:$0xf]
        %v1023 = vld [vmem:[%s222 + $0x8c] sm:$0xf]
        %v1024 = vld [vmem:[%s222 + $0x90] sm:$0xf]
        %v1025 = vld [vmem:[%s222 + $0x94] sm:$0xf]
        %v1026 = vld [vmem:[%s222 + $0x98] sm:$0xf]
        %v1027 = vld [vmem:[%s222 + $0x9c] sm:$0xf]
        %v1028 = vld [vmem:[%s222 + $0xa0] sm:$0xf]
        %v1029 = vld [vmem:[%s222 + $0xa4] sm:$0xf]
        %v1030 = vld [vmem:[%s222 + $0xa8] sm:$0xf]
        %v1031 = vld [vmem:[%s222 + $0xac] sm:$0xf]
        %vm1032 = vsmask.f32 256
        %vm1033 = vsmask.f32 4368
        %vm1034 = vmor %vm1032, %vm1033
        %v1036 = vshrl.u32 %v1021, 16
        %v1038 = vrot.slane %v1036, 7
        %v1039 = vrot.slane %v1038, 4
        %v1041 = vshrl.u32 %v1022, 16
        %v1043 = vrot.slane %v1041, 7
        %v1044 = vshll.u32 %v1022, 16
        %v1046 = vor.u32 %v1043, %v1044
        %v1047 = vsel %vm1034, %v1039, %v1046
        %v1048 = vrot.slane %v1043, 4
        %v1050 = vshrl.u32 %v1023, 16
        %v1052 = vrot.slane %v1050, 7
        %v1053 = vshll.u32 %v1023, 16
        %v1055 = vor.u32 %v1052, %v1053
        %v1056 = vsel %vm1034, %v1048, %v1055
        %v1057 = vrot.slane %v1052, 4
        %v1059 = vshrl.u32 %v1024, 16
        %v1061 = vrot.slane %v1059, 7
        %v1062 = vshll.u32 %v1024, 16
        %v1064 = vor.u32 %v1061, %v1062
        %v1065 = vsel %vm1034, %v1057, %v1064
        %v1066 = vrot.slane %v1061, 4
        %v1068 = vshrl.u32 %v1025, 16
        %v1070 = vrot.slane %v1068, 7
        %v1071 = vshll.u32 %v1025, 16
        %v1073 = vor.u32 %v1070, %v1071
        %v1074 = vsel %vm1034, %v1066, %v1073
        %v1075 = vrot.slane %v1070, 4
        %v1077 = vshrl.u32 %v1026, 16
        %v1079 = vrot.slane %v1077, 7
        %v1080 = vshll.u32 %v1026, 16
        %v1082 = vor.u32 %v1079, %v1080
        %v1083 = vsel %vm1034, %v1075, %v1082
        %v1084 = vrot.slane %v1079, 4
        %v1086 = vshrl.u32 %v1027, 16
        %v1088 = vrot.slane %v1086, 7
        %v1089 = vshll.u32 %v1027, 16
        %v1091 = vor.u32 %v1088, %v1089
        %v1092 = vsel %vm1034, %v1084, %v1091
        %v1093 = vrot.slane %v1088, 4
        %v1095 = vshrl.u32 %v1028, 16
        %v1097 = vrot.slane %v1095, 7
        %v1098 = vshll.u32 %v1028, 16
        %v1100 = vor.u32 %v1097, %v1098
        %v1101 = vsel %vm1034, %v1093, %v1100
        %v1102 = vrot.slane %v1097, 4
        %v1104 = vshrl.u32 %v1029, 16
        %v1106 = vrot.slane %v1104, 7
        %v1107 = vshll.u32 %v1029, 16
        %v1109 = vor.u32 %v1106, %v1107
        %v1110 = vsel %vm1034, %v1102, %v1109
        %v1111 = vrot.slane %v1106, 4
        %v1113 = vshrl.u32 %v1030, 16
        %v1115 = vrot.slane %v1113, 7
        %v1116 = vshll.u32 %v1030, 16
        %v1118 = vor.u32 %v1115, %v1116
        %v1119 = vsel %vm1034, %v1111, %v1118
        %v1120 = vrot.slane %v1115, 4
        %v1122 = vshrl.u32 %v1031, 16
        %v1124 = vrot.slane %v1122, 7
        %v1125 = vshll.u32 %v1031, 16
        %v1127 = vor.u32 %v1124, %v1125
        %v1128 = vsel %vm1034, %v1120, %v1127
        %1129 = vrot.lane.b32.xlu0 %v1047, 56
        %v1130 = vpop.permute.xlu0 %1129
        %1131 = vrot.lane.b32.xlu0 %v1056, 56
        %v1132 = vpop.permute.xlu0 %1131
        %1133 = vrot.lane.b32.xlu0 %v1065, 56
        %v1134 = vpop.permute.xlu0 %1133
        %1135 = vrot.lane.b32.xlu0 %v1074, 56
        %v1136 = vpop.permute.xlu0 %1135
        %1137 = vrot.lane.b32.xlu0 %v1083, 56
        %v1138 = vpop.permute.xlu0 %1137
        %1139 = vrot.lane.b32.xlu0 %v1092, 56
        %v1140 = vpop.permute.xlu0 %1139
        %1141 = vrot.lane.b32.xlu0 %v1101, 56
        %v1142 = vpop.permute.xlu0 %1141
        %1143 = vrot.lane.b32.xlu0 %v1110, 56
        %v1144 = vpop.permute.xlu0 %1143
        %1145 = vrot.lane.b32.xlu0 %v1119, 56
        %v1146 = vpop.permute.xlu0 %1145
        %1147 = vrot.lane.b32.xlu0 %v1128, 56
        %v1148 = vpop.permute.xlu0 %1147
        %vm1159 = vcmask 519616
        %1160 = vst.msk [vmem:[#allocation2] sm:$0xf] %vm1159, %v1130
        %1161 = vst.msk [vmem:[#allocation2 + $0x4] sm:$0xf] %vm1159, %v1132
        %1162 = vst.msk [vmem:[#allocation2 + $0x8] sm:$0xf] %vm1159, %v1134
        %1163 = vst.msk [vmem:[#allocation2 + $0xc] sm:$0xf] %vm1159, %v1136
        %1164 = vst.msk [vmem:[#allocation2 + $0x10] sm:$0xf] %vm1159, %v1138
        %1165 = vst.msk [vmem:[#allocation2 + $0x14] sm:$0xf] %vm1159, %v1140
        %1166 = vst.msk [vmem:[#allocation2 + $0x18] sm:$0xf] %vm1159, %v1142
        %1167 = vst.msk [vmem:[#allocation2 + $0x1c] sm:$0xf] %vm1159, %v1144
        %1168 = vst.msk [vmem:[#allocation2 + $0x20] sm:$0xf] %vm1159, %v1146
        %1169 = vst.msk [vmem:[#allocation2 + $0x24] sm:$0xf] %vm1159, %v1148
        %v1170 = vld [vmem:[%s222 + $0x4] sm:$0xf]
        %v1171 = vld [vmem:[%s222 + $0x8] sm:$0xf]
        %v1172 = vld [vmem:[%s222 + $0xc] sm:$0xf]
        %v1173 = vld [vmem:[%s222 + $0x10] sm:$0xf]
        %v1174 = vld [vmem:[%s222 + $0x14] sm:$0xf]
        %v1175 = vld [vmem:[%s222 + $0x18] sm:$0xf]
        %v1176 = vld [vmem:[%s222 + $0x1c] sm:$0xf]
        %v1177 = vld [vmem:[%s222 + $0x20] sm:$0xf]
        %v1178 = vld [vmem:[%s222 + $0x24] sm:$0xf]
        %v1179 = vld [vmem:[%s222 + $0x28] sm:$0xf]
        %v1180 = vld [vmem:[%s222 + $0x2c] sm:$0x1]
        %v1182 = vshrl.u32 %v1170, 16
        %v1184 = vrot.slane %v1182, 4
        %v1185 = vshll.u32 %v1170, 16
        %v1187 = vrot.slane %v1185, 5
        %v1188 = vor.u32 %v1184, %v1187
        %v1189 = vrot.slane %v1188, 4
        %v1191 = vshll.u32 %v1171, 16
        %v1193 = vrot.slane %v1191, 5
        %v1194 = vsel %vm355, %v1189, %v1193
        %v1195 = vshrl.u32 %v1171, 16
        %v1197 = vrot.slane %v1195, 4
        %v1198 = vor.u32 %v1197, %v1193
        %v1199 = vrot.slane %v1198, 4
        %v1201 = vshll.u32 %v1172, 16
        %v1203 = vrot.slane %v1201, 5
        %v1204 = vsel %vm355, %v1199, %v1203
        %v1205 = vshrl.u32 %v1172, 16
        %v1207 = vrot.slane %v1205, 4
        %v1208 = vor.u32 %v1207, %v1203
        %v1209 = vrot.slane %v1208, 4
        %v1211 = vshll.u32 %v1173, 16
        %v1213 = vrot.slane %v1211, 5
        %v1214 = vsel %vm355, %v1209, %v1213
        %v1215 = vshrl.u32 %v1173, 16
        %v1217 = vrot.slane %v1215, 4
        %v1218 = vor.u32 %v1217, %v1213
        %v1219 = vrot.slane %v1218, 4
        %v1221 = vshll.u32 %v1174, 16
        %v1223 = vrot.slane %v1221, 5
        %v1224 = vsel %vm355, %v1219, %v1223
        %v1225 = vshrl.u32 %v1174, 16
        %v1227 = vrot.slane %v1225, 4
        %v1228 = vor.u32 %v1227, %v1223
        %v1229 = vrot.slane %v1228, 4
        %v1231 = vshll.u32 %v1175, 16
        %v1233 = vrot.slane %v1231, 5
        %v1234 = vsel %vm355, %v1229, %v1233
        %v1235 = vshrl.u32 %v1175, 16
        %v1237 = vrot.slane %v1235, 4
        %v1238 = vor.u32 %v1237, %v1233
        %v1239 = vrot.slane %v1238, 4
        %v1241 = vshll.u32 %v1176, 16
        %v1243 = vrot.slane %v1241, 5
        %v1244 = vsel %vm355, %v1239, %v1243
        %v1245 = vshrl.u32 %v1176, 16
        %v1247 = vrot.slane %v1245, 4
        %v1248 = vor.u32 %v1247, %v1243
        %v1249 = vrot.slane %v1248, 4
        %v1251 = vshll.u32 %v1177, 16
        %v1253 = vrot.slane %v1251, 5
        %v1254 = vsel %vm355, %v1249, %v1253
        %v1255 = vshrl.u32 %v1177, 16
        %v1257 = vrot.slane %v1255, 4
        %v1258 = vor.u32 %v1257, %v1253
        %v1259 = vrot.slane %v1258, 4
        %v1261 = vshll.u32 %v1178, 16
        %v1263 = vrot.slane %v1261, 5
        %v1264 = vsel %vm355, %v1259, %v1263
        %v1265 = vshrl.u32 %v1178, 16
        %v1267 = vrot.slane %v1265, 4
        %v1268 = vor.u32 %v1267, %v1263
        %v1269 = vrot.slane %v1268, 4
        %v1271 = vshll.u32 %v1179, 16
        %v1273 = vrot.slane %v1271, 5
        %v1274 = vsel %vm355, %v1269, %v1273
        %v1275 = vshrl.u32 %v1179, 16
        %v1277 = vrot.slane %v1275, 4
        %v1278 = vor.u32 %v1277, %v1273
        %v1279 = vrot.slane %v1278, 4
        %v1281 = vshll.u32 %v1180, 16
        %v1283 = vrot.slane %v1281, 5
        %v1284 = vsel %vm355, %v1279, %v1283
        %1285 = vrot.lane.b32.xlu0 %v1194, 64
        %v1286 = vpop.permute.xlu0 %1285
        %1287 = vrot.lane.b32.xlu0 %v1204, 64
        %v1288 = vpop.permute.xlu0 %1287
        %1289 = vrot.lane.b32.xlu0 %v1214, 64
        %v1290 = vpop.permute.xlu0 %1289
        %1291 = vrot.lane.b32.xlu0 %v1224, 64
        %v1292 = vpop.permute.xlu0 %1291
        %1293 = vrot.lane.b32.xlu0 %v1234, 64
        %v1294 = vpop.permute.xlu0 %1293
        %1295 = vrot.lane.b32.xlu0 %v1244, 64
        %v1296 = vpop.permute.xlu0 %1295
        %1297 = vrot.lane.b32.xlu0 %v1254, 64
        %v1298 = vpop.permute.xlu0 %1297
        %1299 = vrot.lane.b32.xlu0 %v1264, 64
        %v1300 = vpop.permute.xlu0 %1299
        %1301 = vrot.lane.b32.xlu0 %v1274, 64
        %v1302 = vpop.permute.xlu0 %1301
        %1303 = vrot.lane.b32.xlu0 %v1284, 64
        %v1304 = vpop.permute.xlu0 %1303
        %vm1315 = vcmask 585216
        %1316 = vst.msk [vmem:[#allocation2] sm:$0xf] %vm1315, %v1286
        %1317 = vst.msk [vmem:[#allocation2 + $0x4] sm:$0xf] %vm1315, %v1288
        %1318 = vst.msk [vmem:[#allocation2 + $0x8] sm:$0xf] %vm1315, %v1290
        %1319 = vst.msk [vmem:[#allocation2 + $0xc] sm:$0xf] %vm1315, %v1292
        %1320 = vst.msk [vmem:[#allocation2 + $0x10] sm:$0xf] %vm1315, %v1294
        %1321 = vst.msk [vmem:[#allocation2 + $0x14] sm:$0xf] %vm1315, %v1296
        %1322 = vst.msk [vmem:[#allocation2 + $0x18] sm:$0xf] %vm1315, %v1298
        %1323 = vst.msk [vmem:[#allocation2 + $0x1c] sm:$0xf] %vm1315, %v1300
        %1324 = vst.msk [vmem:[#allocation2 + $0x20] sm:$0xf] %vm1315, %v1302
        %1325 = vst.msk [vmem:[#allocation2 + $0x24] sm:$0xf] %vm1315, %v1304
        %v1326 = vld [vmem:[%s222 + $0x30] sm:$0xe]
        %v1327 = vld [vmem:[%s222 + $0x34] sm:$0xf]
        %v1328 = vld [vmem:[%s222 + $0x38] sm:$0xf]
        %v1329 = vld [vmem:[%s222 + $0x3c] sm:$0xf]
        %v1330 = vld [vmem:[%s222 + $0x40] sm:$0xf]
        %v1331 = vld [vmem:[%s222 + $0x44] sm:$0xf]
        %v1332 = vld [vmem:[%s222 + $0x48] sm:$0xf]
        %v1333 = vld [vmem:[%s222 + $0x4c] sm:$0xf]
        %v1334 = vld [vmem:[%s222 + $0x50] sm:$0xf]
        %v1335 = vld [vmem:[%s222 + $0x54] sm:$0xf]
        %v1336 = vld [vmem:[%s222 + $0x58] sm:$0x3]
        %v1338 = vshrl.u32 %v1326, 16
        %v1340 = vrot.slane %v1338, 5
        %v1341 = vshll.u32 %v1326, 16
        %v1343 = vrot.slane %v1341, 6
        %v1344 = vor.u32 %v1340, %v1343
        %v1345 = vrot.slane %v1344, 4
        %v1347 = vshrl.u32 %v1327, 16
        %v1349 = vrot.slane %v1347, 5
        %v1350 = vshll.u32 %v1327, 16
        %v1352 = vrot.slane %v1350, 6
        %v1353 = vor.u32 %v1349, %v1352
        %v1354 = vsel %vm514, %v1345, %v1353
        %v1355 = vrot.slane %v1353, 4
        %v1357 = vshrl.u32 %v1328, 16
        %v1359 = vrot.slane %v1357, 5
        %v1360 = vshll.u32 %v1328, 16
        %v1362 = vrot.slane %v1360, 6
        %v1363 = vor.u32 %v1359, %v1362
        %v1364 = vsel %vm514, %v1355, %v1363
        %v1365 = vrot.slane %v1363, 4
        %v1367 = vshrl.u32 %v1329, 16
        %v1369 = vrot.slane %v1367, 5
        %v1370 = vshll.u32 %v1329, 16
        %v1372 = vrot.slane %v1370, 6
        %v1373 = vor.u32 %v1369, %v1372
        %v1374 = vsel %vm514, %v1365, %v1373
        %v1375 = vrot.slane %v1373, 4
        %v1377 = vshrl.u32 %v1330, 16
        %v1379 = vrot.slane %v1377, 5
        %v1380 = vshll.u32 %v1330, 16
        %v1382 = vrot.slane %v1380, 6
        %v1383 = vor.u32 %v1379, %v1382
        %v1384 = vsel %vm514, %v1375, %v1383
        %v1385 = vrot.slane %v1383, 4
        %v1387 = vshrl.u32 %v1331, 16
        %v1389 = vrot.slane %v1387, 5
        %v1390 = vshll.u32 %v1331, 16
        %v1392 = vrot.slane %v1390, 6
        %v1393 = vor.u32 %v1389, %v1392
        %v1394 = vsel %vm514, %v1385, %v1393
        %v1395 = vrot.slane %v1393, 4
        %v1397 = vshrl.u32 %v1332, 16
        %v1399 = vrot.slane %v1397, 5
        %v1400 = vshll.u32 %v1332, 16
        %v1402 = vrot.slane %v1400, 6
        %v1403 = vor.u32 %v1399, %v1402
        %v1404 = vsel %vm514, %v1395, %v1403
        %v1405 = vrot.slane %v1403, 4
        %v1407 = vshrl.u32 %v1333, 16
        %v1409 = vrot.slane %v1407, 5
        %v1410 = vshll.u32 %v1333, 16
        %v1412 = vrot.slane %v1410, 6
        %v1413 = vor.u32 %v1409, %v1412
        %v1414 = vsel %vm514, %v1405, %v1413
        %v1415 = vrot.slane %v1413, 4
        %v1417 = vshrl.u32 %v1334, 16
        %v1419 = vrot.slane %v1417, 5
        %v1420 = vshll.u32 %v1334, 16
        %v1422 = vrot.slane %v1420, 6
        %v1423 = vor.u32 %v1419, %v1422
        %v1424 = vsel %vm514, %v1415, %v1423
        %v1425 = vrot.slane %v1423, 4
        %v1427 = vshrl.u32 %v1335, 16
        %v1429 = vrot.slane %v1427, 5
        %v1430 = vshll.u32 %v1335, 16
        %v1432 = vrot.slane %v1430, 6
        %v1433 = vor.u32 %v1429, %v1432
        %v1434 = vsel %vm514, %v1425, %v1433
        %v1435 = vrot.slane %v1433, 4
        %v1437 = vshrl.u32 %v1336, 16
        %v1439 = vrot.slane %v1437, 5
        %v1440 = vshll.u32 %v1336, 16
        %v1442 = vrot.slane %v1440, 6
        %v1443 = vor.u32 %v1439, %v1442
        %v1444 = vsel %vm514, %v1435, %v1443
        %1445 = vrot.lane.b32.xlu0 %v1354, 72
        %v1446 = vpop.permute.xlu0 %1445
        %1447 = vrot.lane.b32.xlu0 %v1364, 72
        %v1448 = vpop.permute.xlu0 %1447
        %1449 = vrot.lane.b32.xlu0 %v1374, 72
        %v1450 = vpop.permute.xlu0 %1449
        %1451 = vrot.lane.b32.xlu0 %v1384, 72
        %v1452 = vpop.permute.xlu0 %1451
        %1453 = vrot.lane.b32.xlu0 %v1394, 72
        %v1454 = vpop.permute.xlu0 %1453
        %1455 = vrot.lane.b32.xlu0 %v1404, 72
        %v1456 = vpop.permute.xlu0 %1455
        %1457 = vrot.lane.b32.xlu0 %v1414, 72
        %v1458 = vpop.permute.xlu0 %1457
        %1459 = vrot.lane.b32.xlu0 %v1424, 72
        %v1460 = vpop.permute.xlu0 %1459
        %1461 = vrot.lane.b32.xlu0 %v1434, 72
        %v1462 = vpop.permute.xlu0 %1461
        %1463 = vrot.lane.b32.xlu0 %v1444, 72
        %v1464 = vpop.permute.xlu0 %1463
        %vm1475 = vcmask 650816
        %1476 = vst.msk [vmem:[#allocation2] sm:$0xf] %vm1475, %v1446
        %1477 = vst.msk [vmem:[#allocation2 + $0x4] sm:$0xf] %vm1475, %v1448
        %1478 = vst.msk [vmem:[#allocation2 + $0x8] sm:$0xf] %vm1475, %v1450
        %1479 = vst.msk [vmem:[#allocation2 + $0xc] sm:$0xf] %vm1475, %v1452
        %1480 = vst.msk [vmem:[#allocation2 + $0x10] sm:$0xf] %vm1475, %v1454
        %1481 = vst.msk [vmem:[#allocation2 + $0x14] sm:$0xf] %vm1475, %v1456
        %1482 = vst.msk [vmem:[#allocation2 + $0x18] sm:$0xf] %vm1475, %v1458
        %1483 = vst.msk [vmem:[#allocation2 + $0x1c] sm:$0xf] %vm1475, %v1460
        %1484 = vst.msk [vmem:[#allocation2 + $0x20] sm:$0xf] %vm1475, %v1462
        %1485 = vst.msk [vmem:[#allocation2 + $0x24] sm:$0xf] %vm1475, %v1464
        %v1486 = vld [vmem:[%s222 + $0x4] sm:$0xe]
        %v1487 = vld [vmem:[%s222 + $0x8] sm:$0xf]
        %v1488 = vld [vmem:[%s222 + $0xc] sm:$0xf]
        %v1489 = vld [vmem:[%s222 + $0x10] sm:$0xf]
        %v1490 = vld [vmem:[%s222 + $0x14] sm:$0xf]
        %v1491 = vld [vmem:[%s222 + $0x18] sm:$0xf]
        %v1492 = vld [vmem:[%s222 + $0x1c] sm:$0xf]
        %v1493 = vld [vmem:[%s222 + $0x20] sm:$0xf]
        %v1494 = vld [vmem:[%s222 + $0x24] sm:$0xf]
        %v1495 = vld [vmem:[%s222 + $0x28] sm:$0xf]
        %v1496 = vld [vmem:[%s222 + $0x2c] sm:$0x1]
        %v1508 = vrot.slane %v1486, 5
        %v1509 = vrot.slane %v1508, 4
        %v1510 = vrot.slane %v1487, 5
        %v1511 = vsel %vm269, %v1509, %v1510
        %v1512 = vrot.slane %v1510, 4
        %v1513 = vrot.slane %v1488, 5
        %v1514 = vsel %vm269, %v1512, %v1513
        %v1515 = vrot.slane %v1513, 4
        %v1516 = vrot.slane %v1489, 5
        %v1517 = vsel %vm269, %v1515, %v1516
        %v1518 = vrot.slane %v1516, 4
        %v1519 = vrot.slane %v1490, 5
        %v1520 = vsel %vm269, %v1518, %v1519
        %v1521 = vrot.slane %v1519, 4
        %v1522 = vrot.slane %v1491, 5
        %v1523 = vsel %vm269, %v1521, %v1522
        %v1524 = vrot.slane %v1522, 4
        %v1525 = vrot.slane %v1492, 5
        %v1526 = vsel %vm269, %v1524, %v1525
        %v1527 = vrot.slane %v1525, 4
        %v1528 = vrot.slane %v1493, 5
        %v1529 = vsel %vm269, %v1527, %v1528
        %v1530 = vrot.slane %v1528, 4
        %v1531 = vrot.slane %v1494, 5
        %v1532 = vsel %vm269, %v1530, %v1531
        %v1533 = vrot.slane %v1531, 4
        %v1534 = vrot.slane %v1495, 5
        %v1535 = vsel %vm269, %v1533, %v1534
        %v1536 = vrot.slane %v1534, 4
        %v1537 = vrot.slane %v1496, 5
        %v1538 = vsel %vm269, %v1536, %v1537
        %1539 = vrot.lane.b32.xlu0 %v1511, 80
        %v1540 = vpop.permute.xlu0 %1539
        %1541 = vrot.lane.b32.xlu0 %v1514, 80
        %v1542 = vpop.permute.xlu0 %1541
        %1543 = vrot.lane.b32.xlu0 %v1517, 80
        %v1544 = vpop.permute.xlu0 %1543
        %1545 = vrot.lane.b32.xlu0 %v1520, 80
        %v1546 = vpop.permute.xlu0 %1545
        %1547 = vrot.lane.b32.xlu0 %v1523, 80
        %v1548 = vpop.permute.xlu0 %1547
        %1549 = vrot.lane.b32.xlu0 %v1526, 80
        %v1550 = vpop.permute.xlu0 %1549
        %1551 = vrot.lane.b32.xlu0 %v1529, 80
        %v1552 = vpop.permute.xlu0 %1551
        %1553 = vrot.lane.b32.xlu0 %v1532, 80
        %v1554 = vpop.permute.xlu0 %1553
        %1555 = vrot.lane.b32.xlu0 %v1535, 80
        %v1556 = vpop.permute.xlu0 %1555
        %1557 = vrot.lane.b32.xlu0 %v1538, 80
        %v1558 = vpop.permute.xlu0 %1557
        %vm1569 = vcmask 716416
        %1570 = vst.msk [vmem:[#allocation2] sm:$0xf] %vm1569, %v1540
        %1571 = vst.msk [vmem:[#allocation2 + $0x4] sm:$0xf] %vm1569, %v1542
        %1572 = vst.msk [vmem:[#allocation2 + $0x8] sm:$0xf] %vm1569, %v1544
        %1573 = vst.msk [vmem:[#allocation2 + $0xc] sm:$0xf] %vm1569, %v1546
        %1574 = vst.msk [vmem:[#allocation2 + $0x10] sm:$0xf] %vm1569, %v1548
        %1575 = vst.msk [vmem:[#allocation2 + $0x14] sm:$0xf] %vm1569, %v1550
        %1576 = vst.msk [vmem:[#allocation2 + $0x18] sm:$0xf] %vm1569, %v1552
        %1577 = vst.msk [vmem:[#allocation2 + $0x1c] sm:$0xf] %vm1569, %v1554
        %1578 = vst.msk [vmem:[#allocation2 + $0x20] sm:$0xf] %vm1569, %v1556
        %1579 = vst.msk [vmem:[#allocation2 + $0x24] sm:$0xf] %vm1569, %v1558
        %v1580 = vld [vmem:[%s222 + $0x30] sm:$0xc]
        %v1581 = vld [vmem:[%s222 + $0x34] sm:$0xf]
        %v1582 = vld [vmem:[%s222 + $0x38] sm:$0xf]
        %v1583 = vld [vmem:[%s222 + $0x3c] sm:$0xf]
        %v1584 = vld [vmem:[%s222 + $0x40] sm:$0xf]
        %v1585 = vld [vmem:[%s222 + $0x44] sm:$0xf]
        %v1586 = vld [vmem:[%s222 + $0x48] sm:$0xf]
        %v1587 = vld [vmem:[%s222 + $0x4c] sm:$0xf]
        %v1588 = vld [vmem:[%s222 + $0x50] sm:$0xf]
        %v1589 = vld [vmem:[%s222 + $0x54] sm:$0xf]
        %v1590 = vld [vmem:[%s222 + $0x58] sm:$0x3]
        %v1602 = vrot.slane %v1580, 6
        %v1603 = vrot.slane %v1602, 4
        %v1604 = vrot.slane %v1581, 6
        %v1605 = vsel %vm688, %v1603, %v1604
        %v1606 = vrot.slane %v1604, 4
        %v1607 = vrot.slane %v1582, 6
        %v1608 = vsel %vm688, %v1606, %v1607
        %v1609 = vrot.slane %v1607, 4
        %v1610 = vrot.slane %v1583, 6
        %v1611 = vsel %vm688, %v1609, %v1610
        %v1612 = vrot.slane %v1610, 4
        %v1613 = vrot.slane %v1584, 6
        %v1614 = vsel %vm688, %v1612, %v1613
        %v1615 = vrot.slane %v1613, 4
        %v1616 = vrot.slane %v1585, 6
        %v1617 = vsel %vm688, %v1615, %v1616
        %v1618 = vrot.slane %v1616, 4
        %v1619 = vrot.slane %v1586, 6
        %v1620 = vsel %vm688, %v1618, %v1619
        %v1621 = vrot.slane %v1619, 4
        %v1622 = vrot.slane %v1587, 6
        %v1623 = vsel %vm688, %v1621, %v1622
        %v1624 = vrot.slane %v1622, 4
        %v1625 = vrot.slane %v1588, 6
        %v1626 = vsel %vm688, %v1624, %v1625
        %v1627 = vrot.slane %v1625, 4
        %v1628 = vrot.slane %v1589, 6
        %v1629 = vsel %vm688, %v1627, %v1628
        %v1630 = vrot.slane %v1628, 4
        %v1631 = vrot.slane %v1590, 6
        %v1632 = vsel %vm688, %v1630, %v1631
        %1633 = vrot.lane.b32.xlu0 %v1605, 88
        %v1634 = vpop.permute.xlu0 %1633
        %1635 = vrot.lane.b32.xlu0 %v1608, 88
        %v1636 = vpop.permute.xlu0 %1635
        %1637 = vrot.lane.b32.xlu0 %v1611, 88
        %v1638 = vpop.permute.xlu0 %1637
        %1639 = vrot.lane.b32.xlu0 %v1614, 88
        %v1640 = vpop.permute.xlu0 %1639
        %1641 = vrot.lane.b32.xlu0 %v1617, 88
        %v1642 = vpop.permute.xlu0 %1641
        %1643 = vrot.lane.b32.xlu0 %v1620, 88
        %v1644 = vpop.permute.xlu0 %1643
        %1645 = vrot.lane.b32.xlu0 %v1623, 88
        %v1646 = vpop.permute.xlu0 %1645
        %1647 = vrot.lane.b32.xlu0 %v1626, 88
        %v1648 = vpop.permute.xlu0 %1647
        %1649 = vrot.lane.b32.xlu0 %v1629, 88
        %v1650 = vpop.permute.xlu0 %1649
        %1651 = vrot.lane.b32.xlu0 %v1632, 88
        %v1652 = vpop.permute.xlu0 %1651
        %vm1663 = vcmask 782016
        %1664 = vst.msk [vmem:[#allocation2] sm:$0xf] %vm1663, %v1634
        %1665 = vst.msk [vmem:[#allocation2 + $0x4] sm:$0xf] %vm1663, %v1636
        %1666 = vst.msk [vmem:[#allocation2 + $0x8] sm:$0xf] %vm1663, %v1638
        %1667 = vst.msk [vmem:[#allocation2 + $0xc] sm:$0xf] %vm1663, %v1640
        %1668 = vst.msk [vmem:[#allocation2 + $0x10] sm:$0xf] %vm1663, %v1642
        %1669 = vst.msk [vmem:[#allocation2 + $0x14] sm:$0xf] %vm1663, %v1644
        %1670 = vst.msk [vmem:[#allocation2 + $0x18] sm:$0xf] %vm1663, %v1646
        %1671 = vst.msk [vmem:[#allocation2 + $0x1c] sm:$0xf] %vm1663, %v1648
        %1672 = vst.msk [vmem:[#allocation2 + $0x20] sm:$0xf] %vm1663, %v1650
        %1673 = vst.msk [vmem:[#allocation2 + $0x24] sm:$0xf] %vm1663, %v1652
        %v1674 = vld [vmem:[%s222 + $0x5c] sm:$0xc]
        %v1675 = vld [vmem:[%s222 + $0x60] sm:$0xf]
        %v1676 = vld [vmem:[%s222 + $0x64] sm:$0xf]
        %v1677 = vld [vmem:[%s222 + $0x68] sm:$0xf]
        %v1678 = vld [vmem:[%s222 + $0x6c] sm:$0xf]
        %v1679 = vld [vmem:[%s222 + $0x70] sm:$0xf]
        %v1680 = vld [vmem:[%s222 + $0x74] sm:$0xf]
        %v1681 = vld [vmem:[%s222 + $0x78] sm:$0xf]
        %v1682 = vld [vmem:[%s222 + $0x7c] sm:$0xf]
        %v1683 = vld [vmem:[%s222 + $0x80] sm:$0xf]
        %v1684 = vld [vmem:[%s222 + $0x84] sm:$0x7]
        %v1686 = vshrl.u32 %v1674, 16
        %v1688 = vrot.slane %v1686, 6
        %v1689 = vshll.u32 %v1674, 16
        %v1691 = vrot.slane %v1689, 7
        %v1692 = vor.u32 %v1688, %v1691
        %v1693 = vrot.slane %v1692, 4
        %v1695 = vshrl.u32 %v1675, 16
        %v1697 = vrot.slane %v1695, 6
        %v1698 = vshll.u32 %v1675, 16
        %v1700 = vrot.slane %v1698, 7
        %v1701 = vor.u32 %v1697, %v1700
        %v1702 = vsel %vm871, %v1693, %v1701
        %v1703 = vrot.slane %v1701, 4
        %v1705 = vshrl.u32 %v1676, 16
        %v1707 = vrot.slane %v1705, 6
        %v1708 = vshll.u32 %v1676, 16
        %v1710 = vrot.slane %v1708, 7
        %v1711 = vor.u32 %v1707, %v1710
        %v1712 = vsel %vm871, %v1703, %v1711
        %v1713 = vrot.slane %v1711, 4
        %v1715 = vshrl.u32 %v1677, 16
        %v1717 = vrot.slane %v1715, 6
        %v1718 = vshll.u32 %v1677, 16
        %v1720 = vrot.slane %v1718, 7
        %v1721 = vor.u32 %v1717, %v1720
        %v1722 = vsel %vm871, %v1713, %v1721
        %v1723 = vrot.slane %v1721, 4
        %v1725 = vshrl.u32 %v1678, 16
        %v1727 = vrot.slane %v1725, 6
        %v1728 = vshll.u32 %v1678, 16
        %v1730 = vrot.slane %v1728, 7
        %v1731 = vor.u32 %v1727, %v1730
        %v1732 = vsel %vm871, %v1723, %v1731
        %v1733 = vrot.slane %v1731, 4
        %v1735 = vshrl.u32 %v1679, 16
        %v1737 = vrot.slane %v1735, 6
        %v1738 = vshll.u32 %v1679, 16
        %v1740 = vrot.slane %v1738, 7
        %v1741 = vor.u32 %v1737, %v1740
        %v1742 = vsel %vm871, %v1733, %v1741
        %v1743 = vrot.slane %v1741, 4
        %v1745 = vshrl.u32 %v1680, 16
        %v1747 = vrot.slane %v1745, 6
        %v1748 = vshll.u32 %v1680, 16
        %v1750 = vrot.slane %v1748, 7
        %v1751 = vor.u32 %v1747, %v1750
        %v1752 = vsel %vm871, %v1743, %v1751
        %v1753 = vrot.slane %v1751, 4
        %v1755 = vshrl.u32 %v1681, 16
        %v1757 = vrot.slane %v1755, 6
        %v1758 = vshll.u32 %v1681, 16
        %v1760 = vrot.slane %v1758, 7
        %v1761 = vor.u32 %v1757, %v1760
        %v1762 = vsel %vm871, %v1753, %v1761
        %v1763 = vrot.slane %v1761, 4
        %v1765 = vshrl.u32 %v1682, 16
        %v1767 = vrot.slane %v1765, 6
        %v1768 = vshll.u32 %v1682, 16
        %v1770 = vrot.slane %v1768, 7
        %v1771 = vor.u32 %v1767, %v1770
        %v1772 = vsel %vm871, %v1763, %v1771
        %v1773 = vrot.slane %v1771, 4
        %v1775 = vshrl.u32 %v1683, 16
        %v1777 = vrot.slane %v1775, 6
        %v1778 = vshll.u32 %v1683, 16
        %v1780 = vrot.slane %v1778, 7
        %v1781 = vor.u32 %v1777, %v1780
        %v1782 = vsel %vm871, %v1773, %v1781
        %v1783 = vrot.slane %v1781, 4
        %v1785 = vshrl.u32 %v1684, 16
        %v1787 = vrot.slane %v1785, 6
        %v1788 = vshll.u32 %v1684, 16
        %v1790 = vrot.slane %v1788, 7
        %v1791 = vor.u32 %v1787, %v1790
        %v1792 = vsel %vm871, %v1783, %v1791
        %1793 = vrot.lane.b32.xlu0 %v1702, 96
        %v1794 = vpop.permute.xlu0 %1793
        %1795 = vrot.lane.b32.xlu0 %v1712, 96
        %v1796 = vpop.permute.xlu0 %1795
        %1797 = vrot.lane.b32.xlu0 %v1722, 96
        %v1798 = vpop.permute.xlu0 %1797
        %1799 = vrot.lane.b32.xlu0 %v1732, 96
        %v1800 = vpop.permute.xlu0 %1799
        %1801 = vrot.lane.b32.xlu0 %v1742, 96
        %v1802 = vpop.permute.xlu0 %1801
        %1803 = vrot.lane.b32.xlu0 %v1752, 96
        %v1804 = vpop.permute.xlu0 %1803
        %1805 = vrot.lane.b32.xlu0 %v1762, 96
        %v1806 = vpop.permute.xlu0 %1805
        %1807 = vrot.lane.b32.xlu0 %v1772, 96
        %v1808 = vpop.permute.xlu0 %1807
        %1809 = vrot.lane.b32.xlu0 %v1782, 96
        %v1810 = vpop.permute.xlu0 %1809
        %1811 = vrot.lane.b32.xlu0 %v1792, 96
        %v1812 = vpop.permute.xlu0 %1811
        %vm1823 = vcmask 847616
        %1824 = vst.msk [vmem:[#allocation2] sm:$0xf] %vm1823, %v1794
        %1825 = vst.msk [vmem:[#allocation2 + $0x4] sm:$0xf] %vm1823, %v1796
        %1826 = vst.msk [vmem:[#allocation2 + $0x8] sm:$0xf] %vm1823, %v1798
        %1827 = vst.msk [vmem:[#allocation2 + $0xc] sm:$0xf] %vm1823, %v1800
        %1828 = vst.msk [vmem:[#allocation2 + $0x10] sm:$0xf] %vm1823, %v1802
        %1829 = vst.msk [vmem:[#allocation2 + $0x14] sm:$0xf] %vm1823, %v1804
        %1830 = vst.msk [vmem:[#allocation2 + $0x18] sm:$0xf] %vm1823, %v1806
        %1831 = vst.msk [vmem:[#allocation2 + $0x1c] sm:$0xf] %vm1823, %v1808
        %1832 = vst.msk [vmem:[#allocation2 + $0x20] sm:$0xf] %vm1823, %v1810
        %1833 = vst.msk [vmem:[#allocation2 + $0x24] sm:$0xf] %vm1823, %v1812
        %v1834 = vld [vmem:[%s222 + $0x88] sm:$0x8]
        %v1835 = vld [vmem:[%s222 + $0x8c] sm:$0xf]
        %v1836 = vld [vmem:[%s222 + $0x90] sm:$0xf]
        %v1837 = vld [vmem:[%s222 + $0x94] sm:$0xf]
        %v1838 = vld [vmem:[%s222 + $0x98] sm:$0xf]
        %v1839 = vld [vmem:[%s222 + $0x9c] sm:$0xf]
        %v1840 = vld [vmem:[%s222 + $0xa0] sm:$0xf]
        %v1841 = vld [vmem:[%s222 + $0xa4] sm:$0xf]
        %v1842 = vld [vmem:[%s222 + $0xa8] sm:$0xf]
        %v1843 = vld [vmem:[%s222 + $0xac] sm:$0xf]
        %v1844 = vld [vmem:[%s222 + $0xb0] sm:$0xf]
        %v1846 = vshrl.u32 %v1834, 16
        %v1848 = vrot.slane %v1846, 7
        %v1849 = vrot.slane %v1848, 4
        %v1851 = vshrl.u32 %v1835, 16
        %v1853 = vrot.slane %v1851, 7
        %v1854 = vshll.u32 %v1835, 16
        %v1856 = vor.u32 %v1853, %v1854
        %v1857 = vsel %vm1034, %v1849, %v1856
        %v1858 = vrot.slane %v1853, 4
        %v1860 = vshrl.u32 %v1836, 16
        %v1862 = vrot.slane %v1860, 7
        %v1863 = vshll.u32 %v1836, 16
        %v1865 = vor.u32 %v1862, %v1863
        %v1866 = vsel %vm1034, %v1858, %v1865
        %v1867 = vrot.slane %v1862, 4
        %v1869 = vshrl.u32 %v1837, 16
        %v1871 = vrot.slane %v1869, 7
        %v1872 = vshll.u32 %v1837, 16
        %v1874 = vor.u32 %v1871, %v1872
        %v1875 = vsel %vm1034, %v1867, %v1874
        %v1876 = vrot.slane %v1871, 4
        %v1878 = vshrl.u32 %v1838, 16
        %v1880 = vrot.slane %v1878, 7
        %v1881 = vshll.u32 %v1838, 16
        %v1883 = vor.u32 %v1880, %v1881
        %v1884 = vsel %vm1034, %v1876, %v1883
        %v1885 = vrot.slane %v1880, 4
        %v1887 = vshrl.u32 %v1839, 16
        %v1889 = vrot.slane %v1887, 7
        %v1890 = vshll.u32 %v1839, 16
        %v1892 = vor.u32 %v1889, %v1890
        %v1893 = vsel %vm1034, %v1885, %v1892
        %v1894 = vrot.slane %v1889, 4
        %v1896 = vshrl.u32 %v1840, 16
        %v1898 = vrot.slane %v1896, 7
        %v1899 = vshll.u32 %v1840, 16
        %v1901 = vor.u32 %v1898, %v1899
        %v1902 = vsel %vm1034, %v1894, %v1901
        %v1903 = vrot.slane %v1898, 4
        %v1905 = vshrl.u32 %v1841, 16
        %v1907 = vrot.slane %v1905, 7
        %v1908 = vshll.u32 %v1841, 16
        %v1910 = vor.u32 %v1907, %v1908
        %v1911 = vsel %vm1034, %v1903, %v1910
        %v1912 = vrot.slane %v1907, 4
        %v1914 = vshrl.u32 %v1842, 16
        %v1916 = vrot.slane %v1914, 7
        %v1917 = vshll.u32 %v1842, 16
        %v1919 = vor.u32 %v1916, %v1917
        %v1920 = vsel %vm1034, %v1912, %v1919
        %v1921 = vrot.slane %v1916, 4
        %v1923 = vshrl.u32 %v1843, 16
        %v1925 = vrot.slane %v1923, 7
        %v1926 = vshll.u32 %v1843, 16
        %v1928 = vor.u32 %v1925, %v1926
        %v1929 = vsel %vm1034, %v1921, %v1928
        %v1930 = vrot.slane %v1925, 4
        %v1932 = vshrl.u32 %v1844, 16
        %v1934 = vrot.slane %v1932, 7
        %v1935 = vshll.u32 %v1844, 16
        %v1937 = vor.u32 %v1934, %v1935
        %v1938 = vsel %vm1034, %v1930, %v1937
        %1939 = vrot.lane.b32.xlu0 %v1857, 104
        %v1940 = vpop.permute.xlu0 %1939
        %1941 = vrot.lane.b32.xlu0 %v1866, 104
        %v1942 = vpop.permute.xlu0 %1941
        %1943 = vrot.lane.b32.xlu0 %v1875, 104
        %v1944 = vpop.permute.xlu0 %1943
        %1945 = vrot.lane.b32.xlu0 %v1884, 104
        %v1946 = vpop.permute.xlu0 %1945
        %1947 = vrot.lane.b32.xlu0 %v1893, 104
        %v1948 = vpop.permute.xlu0 %1947
        %1949 = vrot.lane.b32.xlu0 %v1902, 104
        %v1950 = vpop.permute.xlu0 %1949
        %1951 = vrot.lane.b32.xlu0 %v1911, 104
        %v1952 = vpop.permute.xlu0 %1951
        %1953 = vrot.lane.b32.xlu0 %v1920, 104
        %v1954 = vpop.permute.xlu0 %1953
        %1955 = vrot.lane.b32.xlu0 %v1929, 104
        %v1956 = vpop.permute.xlu0 %1955
        %1957 = vrot.lane.b32.xlu0 %v1938, 104
        %v1958 = vpop.permute.xlu0 %1957
        %vm1969 = vcmask 913216
        %1970 = vst.msk [vmem:[#allocation2] sm:$0xf] %vm1969, %v1940
        %1971 = vst.msk [vmem:[#allocation2 + $0x4] sm:$0xf] %vm1969, %v1942
        %1972 = vst.msk [vmem:[#allocation2 + $0x8] sm:$0xf] %vm1969, %v1944
        %1973 = vst.msk [vmem:[#allocation2 + $0xc] sm:$0xf] %vm1969, %v1946
        %1974 = vst.msk [vmem:[#allocation2 + $0x10] sm:$0xf] %vm1969, %v1948
        %1975 = vst.msk [vmem:[#allocation2 + $0x14] sm:$0xf] %vm1969, %v1950
        %1976 = vst.msk [vmem:[#allocation2 + $0x18] sm:$0xf] %vm1969, %v1952
        %1977 = vst.msk [vmem:[#allocation2 + $0x1c] sm:$0xf] %vm1969, %v1954
        %1978 = vst.msk [vmem:[#allocation2 + $0x20] sm:$0xf] %vm1969, %v1956
        %1979 = vst.msk [vmem:[#allocation2 + $0x24] sm:$0xf] %vm1969, %v1958
        %v1980 = vld [vmem:[%s222 + $0x5c] sm:$0x8]
        %v1981 = vld [vmem:[%s222 + $0x60] sm:$0xf]
        %v1982 = vld [vmem:[%s222 + $0x64] sm:$0xf]
        %v1983 = vld [vmem:[%s222 + $0x68] sm:$0xf]
        %v1984 = vld [vmem:[%s222 + $0x6c] sm:$0xf]
        %v1985 = vld [vmem:[%s222 + $0x70] sm:$0xf]
        %v1986 = vld [vmem:[%s222 + $0x74] sm:$0xf]
        %v1987 = vld [vmem:[%s222 + $0x78] sm:$0xf]
        %v1988 = vld [vmem:[%s222 + $0x7c] sm:$0xf]
        %v1989 = vld [vmem:[%s222 + $0x80] sm:$0xf]
        %v1990 = vld [vmem:[%s222 + $0x84] sm:$0x7]
        %v2002 = vrot.slane %v1980, 7
        %v2003 = vrot.slane %v2002, 4
        %v2004 = vrot.slane %v1981, 7
        %v2005 = vsel %vm785, %v2003, %v2004
        %v2006 = vrot.slane %v2004, 4
        %v2007 = vrot.slane %v1982, 7
        %v2008 = vsel %vm785, %v2006, %v2007
        %v2009 = vrot.slane %v2007, 4
        %v2010 = vrot.slane %v1983, 7
        %v2011 = vsel %vm785, %v2009, %v2010
        %v2012 = vrot.slane %v2010, 4
        %v2013 = vrot.slane %v1984, 7
        %v2014 = vsel %vm785, %v2012, %v2013
        %v2015 = vrot.slane %v2013, 4
        %v2016 = vrot.slane %v1985, 7
        %v2017 = vsel %vm785, %v2015, %v2016
        %v2018 = vrot.slane %v2016, 4
        %v2019 = vrot.slane %v1986, 7
        %v2020 = vsel %vm785, %v2018, %v2019
        %v2021 = vrot.slane %v2019, 4
        %v2022 = vrot.slane %v1987, 7
        %v2023 = vsel %vm785, %v2021, %v2022
        %v2024 = vrot.slane %v2022, 4
        %v2025 = vrot.slane %v1988, 7
        %v2026 = vsel %vm785, %v2024, %v2025
        %v2027 = vrot.slane %v2025, 4
        %v2028 = vrot.slane %v1989, 7
        %v2029 = vsel %vm785, %v2027, %v2028
        %v2030 = vrot.slane %v2028, 4
        %v2031 = vrot.slane %v1990, 7
        %v2032 = vsel %vm785, %v2030, %v2031
        %2033 = vrot.lane.b32.xlu0 %v2005, 112
        %v2034 = vpop.permute.xlu0 %2033
        %2035 = vrot.lane.b32.xlu0 %v2008, 112
        %v2036 = vpop.permute.xlu0 %2035
        %2037 = vrot.lane.b32.xlu0 %v2011, 112
        %v2038 = vpop.permute.xlu0 %2037
        %2039 = vrot.lane.b32.xlu0 %v2014, 112
        %v2040 = vpop.permute.xlu0 %2039
        %2041 = vrot.lane.b32.xlu0 %v2017, 112
        %v2042 = vpop.permute.xlu0 %2041
        %2043 = vrot.lane.b32.xlu0 %v2020, 112
        %v2044 = vpop.permute.xlu0 %2043
        %2045 = vrot.lane.b32.xlu0 %v2023, 112
        %v2046 = vpop.permute.xlu0 %2045
        %2047 = vrot.lane.b32.xlu0 %v2026, 112
        %v2048 = vpop.permute.xlu0 %2047
        %2049 = vrot.lane.b32.xlu0 %v2029, 112
        %v2050 = vpop.permute.xlu0 %2049
        %2051 = vrot.lane.b32.xlu0 %v2032, 112
        %v2052 = vpop.permute.xlu0 %2051
        %vm2063 = vcmask 978816
        %2064 = vst.msk [vmem:[#allocation2] sm:$0xf] %vm2063, %v2034
        %2065 = vst.msk [vmem:[#allocation2 + $0x4] sm:$0xf] %vm2063, %v2036
        %2066 = vst.msk [vmem:[#allocation2 + $0x8] sm:$0xf] %vm2063, %v2038
        %2067 = vst.msk [vmem:[#allocation2 + $0xc] sm:$0xf] %vm2063, %v2040
        %2068 = vst.msk [vmem:[#allocation2 + $0x10] sm:$0xf] %vm2063, %v2042
        %2069 = vst.msk [vmem:[#allocation2 + $0x14] sm:$0xf] %vm2063, %v2044
        %2070 = vst.msk [vmem:[#allocation2 + $0x18] sm:$0xf] %vm2063, %v2046
        %2071 = vst.msk [vmem:[#allocation2 + $0x1c] sm:$0xf] %vm2063, %v2048
        %2072 = vst.msk [vmem:[#allocation2 + $0x20] sm:$0xf] %vm2063, %v2050
        %2073 = vst.msk [vmem:[#allocation2 + $0x24] sm:$0xf] %vm2063, %v2052
        %v2074 = vld [vmem:[%s222 + $0x8c] sm:$0xf]
        %v2075 = vld [vmem:[%s222 + $0x90] sm:$0xf]
        %v2076 = vld [vmem:[%s222 + $0x94] sm:$0xf]
        %v2077 = vld [vmem:[%s222 + $0x98] sm:$0xf]
        %v2078 = vld [vmem:[%s222 + $0x9c] sm:$0xf]
        %v2079 = vld [vmem:[%s222 + $0xa0] sm:$0xf]
        %v2080 = vld [vmem:[%s222 + $0xa4] sm:$0xf]
        %v2081 = vld [vmem:[%s222 + $0xa8] sm:$0xf]
        %v2082 = vld [vmem:[%s222 + $0xac] sm:$0xf]
        %v2083 = vld [vmem:[%s222 + $0xb0] sm:$0xf]
        %2094 = vrot.lane.b32.xlu0 %v2074, 120
        %v2095 = vpop.permute.xlu0 %2094
        %2096 = vrot.lane.b32.xlu0 %v2075, 120
        %v2097 = vpop.permute.xlu0 %2096
        %2098 = vrot.lane.b32.xlu0 %v2076, 120
        %v2099 = vpop.permute.xlu0 %2098
        %2100 = vrot.lane.b32.xlu0 %v2077, 120
        %v2101 = vpop.permute.xlu0 %2100
        %2102 = vrot.lane.b32.xlu0 %v2078, 120
        %v2103 = vpop.permute.xlu0 %2102
        %2104 = vrot.lane.b32.xlu0 %v2079, 120
        %v2105 = vpop.permute.xlu0 %2104
        %2106 = vrot.lane.b32.xlu0 %v2080, 120
        %v2107 = vpop.permute.xlu0 %2106
        %2108 = vrot.lane.b32.xlu0 %v2081, 120
        %v2109 = vpop.permute.xlu0 %2108
        %2110 = vrot.lane.b32.xlu0 %v2082, 120
        %v2111 = vpop.permute.xlu0 %2110
        %2112 = vrot.lane.b32.xlu0 %v2083, 120
        %v2113 = vpop.permute.xlu0 %2112
        %vm2124 = vcmask 1044416
        %2125 = vst.msk [vmem:[#allocation2] sm:$0xf] %vm2124, %v2095
        %2126 = vst.msk [vmem:[#allocation2 + $0x4] sm:$0xf] %vm2124, %v2097
        %2127 = vst.msk [vmem:[#allocation2 + $0x8] sm:$0xf] %vm2124, %v2099
        %2128 = vst.msk [vmem:[#allocation2 + $0xc] sm:$0xf] %vm2124, %v2101
        %2129 = vst.msk [vmem:[#allocation2 + $0x10] sm:$0xf] %vm2124, %v2103
        %2130 = vst.msk [vmem:[#allocation2 + $0x14] sm:$0xf] %vm2124, %v2105
        %2131 = vst.msk [vmem:[#allocation2 + $0x18] sm:$0xf] %vm2124, %v2107
        %2132 = vst.msk [vmem:[#allocation2 + $0x1c] sm:$0xf] %vm2124, %v2109
        %2133 = vst.msk [vmem:[#allocation2 + $0x20] sm:$0xf] %vm2124, %v2111
        %2134 = vst.msk [vmem:[#allocation2 + $0x24] sm:$0xf] %vm2124, %v2113
        %v2135 = vld [vmem:[#allocation2] sm:$0xf]
        %v2136 = vld [vmem:[#allocation2 + $0x4] sm:$0xf]
        %v2137 = vld [vmem:[#allocation2 + $0x8] sm:$0xf]
        %v2138 = vld [vmem:[#allocation2 + $0xc] sm:$0xf]
        %v2139 = vld [vmem:[#allocation2 + $0x10] sm:$0xf]
        %v2140 = vld [vmem:[#allocation2 + $0x14] sm:$0xf]
        %v2141 = vld [vmem:[#allocation2 + $0x18] sm:$0xf]
        %v2142 = vld [vmem:[#allocation2 + $0x1c] sm:$0xf]
        %v2143 = vld [vmem:[#allocation2 + $0x20] sm:$0xf]
        %v2144 = vld [vmem:[#allocation2 + $0x24] sm:$0xf]
        %v2145 = vld [vmem:[%s1] sm:$0xf]
        %v2146 = vld [vmem:[%s1 + $0x4] sm:$0xf]
        %v2147 = vld [vmem:[%s1 + $0x8] sm:$0xf]
        %v2148 = vld [vmem:[%s1 + $0xc] sm:$0xf]
        %v2149 = vld [vmem:[%s1 + $0x10] sm:$0xf]
        %v2150 = vld [vmem:[%s1 + $0x14] sm:$0xf]
        %v2151 = vld [vmem:[%s1 + $0x18] sm:$0xf]
        %v2152 = vld [vmem:[%s1 + $0x1c] sm:$0xf]
        %v2153 = vld [vmem:[%s1 + $0x20] sm:$0xf]
        %v2154 = vld [vmem:[%s1 + $0x24] sm:$0xf]
        %v2155 = vld [vmem:[%s1 + $0x28] sm:$0xf]
        %v2156 = vld [vmem:[%s1 + $0x2c] sm:$0xf]
        %v2157 = vld [vmem:[%s1 + $0x30] sm:$0xf]
        %v2158 = vld [vmem:[%s1 + $0x34] sm:$0xf]
        %v2159 = vld [vmem:[%s1 + $0x38] sm:$0xf]
        %v2160 = vld [vmem:[%s1 + $0x3c] sm:$0xf]
        %v2171 = vunpack.c.l.b16 %v2135
        %v2172 = vunpack.c.l.b16 %v2136
        %v2173 = vunpack.c.l.b16 %v2137
        %v2174 = vunpack.c.l.b16 %v2138
        %v2175 = vunpack.c.l.b16 %v2139
        %v2176 = vunpack.c.l.b16 %v2140
        %v2177 = vunpack.c.l.b16 %v2141
        %v2178 = vunpack.c.l.b16 %v2142
        %v2179 = vunpack.c.l.b16 %v2143
        %v2180 = vunpack.c.l.b16 %v2144
        %v2181 = vpack.c.b16 %v2172, %v2171
        %v2182 = vpack.c.b16 %v2174, %v2173
        %v2183 = vpack.c.b16 %v2176, %v2175
        %v2184 = vpack.c.b16 %v2178, %v2177
        %v2185 = vpack.c.b16 %v2180, %v2179
        %v2207 = vunpack.c.l.b16 %v2145
        %v2208 = vunpack.c.l.b16 %v2146
        %v2209 = vunpack.c.l.b16 %v2147
        %v2210 = vunpack.c.l.b16 %v2148
        %v2211 = vunpack.c.l.b16 %v2149
        %v2212 = vunpack.c.l.b16 %v2150
        %v2213 = vunpack.c.l.b16 %v2151
        %v2214 = vunpack.c.l.b16 %v2152
        %v2215 = vunpack.c.l.b16 %v2153
        %v2216 = vunpack.c.l.b16 %v2154
        %v2217 = vunpack.c.l.b16 %v2155
        %v2218 = vunpack.c.l.b16 %v2156
        %v2219 = vunpack.c.l.b16 %v2157
        %v2220 = vunpack.c.l.b16 %v2158
        %v2221 = vunpack.c.l.b16 %v2159
        %v2222 = vunpack.c.l.b16 %v2160
        %v2223 = vpack.c.b16 %v2208, %v2207
        %v2224 = vpack.c.b16 %v2210, %v2209
        %v2225 = vpack.c.b16 %v2212, %v2211
        %v2226 = vpack.c.b16 %v2214, %v2213
        %v2227 = vpack.c.b16 %v2216, %v2215
        %v2228 = vpack.c.b16 %v2218, %v2217
        %v2229 = vpack.c.b16 %v2220, %v2219
        %v2230 = vpack.c.b16 %v2222, %v2221
        %2239 = vmatprep.subr.bf16.mxu0 0
        %2240 = vmatpush1.bf16.msra.mxu0 %v2230
        %2241 = vmatprep.subr.bf16.mxu0 0
        %2242 = vmatpush1.bf16.msra.mxu0 %v2229
        %2243 = vmatprep.subr.bf16.mxu0 0
        %2244 = vmatpush1.bf16.msra.mxu0 %v2228
        %2245 = vmatprep.subr.bf16.mxu0 0
        %2246 = vmatpush1.bf16.msra.mxu0 %v2227
        %2247 = vmatprep.subr.bf16.mxu0 0
        %2248 = vmatpush1.bf16.msra.mxu0 %v2226
        %2249 = vmatprep.subr.bf16.mxu0 0
        %2250 = vmatpush1.bf16.msra.mxu0 %v2225
        %2251 = vmatprep.subr.bf16.mxu0 0
        %2252 = vmatpush1.bf16.msra.mxu0 %v2224
        %2253 = vmatprep.subr.bf16.mxu0 0
        %2254 = vmatpush1.bf16.msra.mxu0 %v2223
        %2255 = vmatprep.subr.bf16.mxu0 0
        %2256 = vmatpush2.bf16.msra.mxu0 0
        %2257 = vmatprep.subr.bf16.mxu0 0
        %2258 = vmatpush2.bf16.msra.mxu0 0
        %2259 = vmatprep.subr.bf16.mxu0 0
        %2260 = vmatpush2.bf16.msra.mxu0 0
        %2261 = vmatprep.subr.bf16.mxu0 0
        %2262 = vmatpush2.bf16.msra.mxu0 0
        %2263 = vmatprep.subr.bf16.mxu0 0
        %2264 = vmatpush2.bf16.msra.mxu0 0
        %2265 = vmatprep.subr.bf16.mxu0 0
        %2266 = vmatpush2.bf16.msra.mxu0 0
        %2267 = vmatprep.subr.bf16.mxu0 0
        %2268 = vmatpush2.bf16.msra.mxu0 0
        %2269 = vmatprep.subr.bf16.mxu0 0
        %2270 = vmatpush2.bf16.msra.mxu0 0
        %2271 = vmatprep.mubr.bf16.mxu0 0
        %2272 = vmatmul.mubr.bf16.gmra.mxu0 %v2181
        %v2273 = vpop.f32.mrf.mxu0
        %v2274 = vadd.f32 0.0, %v2273
        %v2275 = vpop.f32.mrf.mxu0
        %v2276 = vpop.f32.mrf.mxu0
        %v2277 = vadd.f32 0.0, %v2276
        %v2278 = vpop.f32.mrf.mxu0
        %2279 = vmatprep.mubr.bf16.mxu0 0
        %2280 = vmatmul.mubr.bf16.gmra.mxu0 %v2182
        %v2281 = vpop.f32.mrf.mxu0
        %v2282 = vadd.f32 0.0, %v2281
        %v2283 = vpop.f32.mrf.mxu0
        %v2284 = vpop.f32.mrf.mxu0
        %v2285 = vadd.f32 0.0, %v2284
        %v2286 = vpop.f32.mrf.mxu0
        %2287 = vmatprep.mubr.bf16.mxu0 0
        %2288 = vmatmul.mubr.bf16.gmra.mxu0 %v2183
        %v2289 = vpop.f32.mrf.mxu0
        %v2290 = vadd.f32 0.0, %v2289
        %v2291 = vpop.f32.mrf.mxu0
        %v2292 = vpop.f32.mrf.mxu0
        %v2293 = vadd.f32 0.0, %v2292
        %v2294 = vpop.f32.mrf.mxu0
        %2295 = vmatprep.mubr.bf16.mxu0 0
        %2296 = vmatmul.mubr.bf16.gmra.mxu0 %v2184
        %v2297 = vpop.f32.mrf.mxu0
        %v2298 = vadd.f32 0.0, %v2297
        %v2299 = vpop.f32.mrf.mxu0
        %v2300 = vpop.f32.mrf.mxu0
        %v2301 = vadd.f32 0.0, %v2300
        %v2302 = vpop.f32.mrf.mxu0
        %2303 = vmatprep.mubr.bf16.mxu0 0
        %2304 = vmatmul.mubr.bf16.gmra.mxu0 %v2185
        %v2305 = vpop.f32.mrf.mxu0
        %v2306 = vadd.f32 0.0, %v2305
        %v2307 = vpop.f32.mrf.mxu0
        %v2308 = vpop.f32.mrf.mxu0
        %v2309 = vadd.f32 0.0, %v2308
        %v2310 = vpop.f32.mrf.mxu0
        %2311 = vdwg.mxu0
        %v2312 = vld [vmem:[%s2] sm:$0xff]
        %v2313 = vld [vmem:[%s2 + $0x8] sm:$0xff]
        %v2314 = vld [vmem:[%s2 + $0x10] sm:$0xff]
        %v2315 = vld [vmem:[%s2 + $0x18] sm:$0xff]
        %v2316 = vld [vmem:[%s2 + $0x20] sm:$0xff]
        %v2317 = vld [vmem:[%s2 + $0x28] sm:$0xff]
        %v2318 = vld [vmem:[%s2 + $0x30] sm:$0xff]
        %v2319 = vld [vmem:[%s2 + $0x38] sm:$0xff]
        %v2320 = vld [vmem:[%s2 + $0x40] sm:$0xff]
        %v2321 = vld [vmem:[%s2 + $0x48] sm:$0xff]
        %2323 = vset.pattern.permute.xlu0 0
        %2324 = vperm.xlu0 %2323, %v2312
        %v2325 = vpop.permute.xlu0 %2324
        %2328 = vset.pattern.permute.xlu0 0
        %2329 = vperm.xlu0 %2328, %v2313
        %v2330 = vpop.permute.xlu0 %2329
        %2333 = vset.pattern.permute.xlu0 0
        %2334 = vperm.xlu0 %2333, %v2314
        %v2335 = vpop.permute.xlu0 %2334
        %2338 = vset.pattern.permute.xlu0 0
        %2339 = vperm.xlu0 %2338, %v2315
        %v2340 = vpop.permute.xlu0 %2339
        %2343 = vset.pattern.permute.xlu0 0
        %2344 = vperm.xlu0 %2343, %v2316
        %v2345 = vpop.permute.xlu0 %2344
        %2348 = vset.pattern.permute.xlu0 0
        %2349 = vperm.xlu0 %2348, %v2317
        %v2350 = vpop.permute.xlu0 %2349
        %2353 = vset.pattern.permute.xlu0 0
        %2354 = vperm.xlu0 %2353, %v2318
        %v2355 = vpop.permute.xlu0 %2354
        %2358 = vset.pattern.permute.xlu0 0
        %2359 = vperm.xlu0 %2358, %v2319
        %v2360 = vpop.permute.xlu0 %2359
        %2363 = vset.pattern.permute.xlu0 0
        %2364 = vperm.xlu0 %2363, %v2320
        %v2365 = vpop.permute.xlu0 %2364
        %2368 = vset.pattern.permute.xlu0 0
        %2369 = vperm.xlu0 %2368, %v2321
        %v2370 = vpop.permute.xlu0 %2369
        %v2372 = vmul.f32 %v2274, %v2325
        %v2373 = vmul.f32 %v2277, %v2330
        %v2374 = vmul.f32 %v2282, %v2335
        %v2375 = vmul.f32 %v2285, %v2340
        %v2376 = vmul.f32 %v2290, %v2345
        %v2377 = vmul.f32 %v2293, %v2350
        %v2378 = vmul.f32 %v2298, %v2355
        %v2379 = vmul.f32 %v2301, %v2360
        %v2380 = vmul.f32 %v2306, %v2365
        %v2381 = vmul.f32 %v2309, %v2370
        %v2382 = vadd.f32 %v2372, %v2373
        %v2383 = vadd.f32 %v2382, %v2374
        %v2384 = vadd.f32 %v2383, %v2375
        %v2385 = vadd.f32 %v2384, %v2376
        %v2386 = vadd.f32 %v2385, %v2377
        %v2387 = vadd.f32 %v2386, %v2378
        %v2388 = vadd.f32 %v2387, %v2379
        %v2389 = vadd.f32 %v2388, %v2380
        %v2390 = vadd.f32 %v2389, %v2381
        %v2391 = vrot.slane %v2390, 4
        %v2392 = vadd.f32 %v2390, %v2391
        %v2393 = vrot.slane %v2392, 2
        %v2394 = vadd.f32 %v2392, %v2393
        %v2395 = vrot.slane %v2394, 1
        %v2396 = vadd.f32 %v2394, %v2395
        %v2397 = vmul.f32 %v2274, %v2372
        %v2398 = vmul.f32 %v2277, %v2373
        %v2399 = vmul.f32 %v2282, %v2374
        %v2400 = vmul.f32 %v2285, %v2375
        %v2401 = vmul.f32 %v2290, %v2376
        %v2402 = vmul.f32 %v2293, %v2377
        %v2403 = vmul.f32 %v2298, %v2378
        %v2404 = vmul.f32 %v2301, %v2379
        %v2405 = vmul.f32 %v2306, %v2380
        %v2406 = vmul.f32 %v2309, %v2381
        %v2407 = vadd.f32 %v2397, %v2398
        %v2408 = vadd.f32 %v2407, %v2399
        %v2409 = vadd.f32 %v2408, %v2400
        %v2410 = vadd.f32 %v2409, %v2401
        %v2411 = vadd.f32 %v2410, %v2402
        %v2412 = vadd.f32 %v2411, %v2403
        %v2413 = vadd.f32 %v2412, %v2404
        %v2414 = vadd.f32 %v2413, %v2405
        %v2415 = vadd.f32 %v2414, %v2406
        %v2416 = vrot.slane %v2415, 4
        %v2417 = vadd.f32 %v2415, %v2416
        %v2418 = vrot.slane %v2417, 2
        %v2419 = vadd.f32 %v2417, %v2418
        %v2420 = vrot.slane %v2419, 1
        %v2421 = vadd.f32 %v2419, %v2420
        %v2422 = vmul.f32 %v2396, 0.015625
        %v2423 = vmul.f32 %v2421, 0.015625
        %v2424 = vmul.f32 %v2422, %v2422
        %v2425 = vsub.f32 %v2423, %v2424
        %v2426 = vmax.f32 %v2425, 0.0
        %v2427 = vadd.f32 %v2426, 1e-05
        %v2428 = vrsqrt.pop %v2427
        %v2429 = vld [vmem:[%s3] sm:$0x1]
        %v2430 = vmul.f32 %v2429, %v2428
        %v2431 = vld [vmem:[%s4] sm:$0x1]
        %v2432 = vmul.f32 %v2422, %v2430
        %v2433 = vsub.f32 %v2431, %v2432
        %v2435 = vlaneseq
        %v2436 = vshrl.u32 %v2435, 7
        %v2437 = vsub.s32 0, %v2436
        %v2438 = vrot.slane %v2430, %v2437
        %v2440 = vmul.f32 %v2274, %v2438
        %v2441 = vmul.f32 %v2277, %v2438
        %v2442 = vmul.f32 %v2282, %v2438
        %v2443 = vmul.f32 %v2285, %v2438
        %v2444 = vmul.f32 %v2290, %v2438
        %v2445 = vmul.f32 %v2293, %v2438
        %v2446 = vmul.f32 %v2298, %v2438
        %v2447 = vmul.f32 %v2301, %v2438
        %v2448 = vmul.f32 %v2306, %v2438
        %v2449 = vmul.f32 %v2309, %v2438
        %v2451 = vlaneseq
        %v2452 = vshrl.u32 %v2451, 7
        %v2453 = vsub.s32 0, %v2452
        %v2454 = vrot.slane %v2433, %v2453
        %v2456 = vadd.f32 %v2440, %v2454
        %v2457 = vadd.f32 %v2441, %v2454
        %v2458 = vadd.f32 %v2442, %v2454
        %v2459 = vadd.f32 %v2443, %v2454
        %v2460 = vadd.f32 %v2444, %v2454
        %v2461 = vadd.f32 %v2445, %v2454
        %v2462 = vadd.f32 %v2446, %v2454
        %v2463 = vadd.f32 %v2447, %v2454
        %v2464 = vadd.f32 %v2448, %v2454
        %v2465 = vadd.f32 %v2449, %v2454
        %vm2466 = vcmp.ge.f32.partialorder %v2456, 0.0
        %vm2467 = vcmp.ge.f32.partialorder %v2457, 0.0
        %vm2468 = vcmp.ge.f32.partialorder %v2458, 0.0
        %vm2469 = vcmp.ge.f32.partialorder %v2459, 0.0
        %vm2470 = vcmp.ge.f32.partialorder %v2460, 0.0
        %vm2471 = vcmp.ge.f32.partialorder %v2461, 0.0
        %vm2472 = vcmp.ge.f32.partialorder %v2462, 0.0
        %vm2473 = vcmp.ge.f32.partialorder %v2463, 0.0
        %vm2474 = vcmp.ge.f32.partialorder %v2464, 0.0
        %vm2475 = vcmp.ge.f32.partialorder %v2465, 0.0
        %v2476 = vmul.f32 %v2456, 0.2
        %v2477 = vmul.f32 %v2457, 0.2
        %v2478 = vmul.f32 %v2458, 0.2
        %v2479 = vmul.f32 %v2459, 0.2
        %v2480 = vmul.f32 %v2460, 0.2
        %v2481 = vmul.f32 %v2461, 0.2
        %v2482 = vmul.f32 %v2462, 0.2
        %v2483 = vmul.f32 %v2463, 0.2
        %v2484 = vmul.f32 %v2464, 0.2
        %v2485 = vmul.f32 %v2465, 0.2
        %v2486 = vsel %vm2466, %v2456, %v2476
        %v2487 = vsel %vm2467, %v2457, %v2477
        %v2488 = vsel %vm2468, %v2458, %v2478
        %v2489 = vsel %vm2469, %v2459, %v2479
        %v2490 = vsel %vm2470, %v2460, %v2480
        %v2491 = vsel %vm2471, %v2461, %v2481
        %v2492 = vsel %vm2472, %v2462, %v2482
        %v2493 = vsel %vm2473, %v2463, %v2483
        %v2494 = vsel %vm2474, %v2464, %v2484
        %v2495 = vsel %vm2475, %v2465, %v2485
        %v2496 = vpack.c.bf16 %v2487, %v2486
        %v2497 = vpack.c.bf16 %v2489, %v2488
        %v2498 = vpack.c.bf16 %v2491, %v2490
        %v2499 = vpack.c.bf16 %v2493, %v2492
        %v2500 = vpack.c.bf16 %v2495, %v2494
        %v2506 = vunpack.c.l.b16 %v2496
        %v2507 = vunpack.c.h.b16 %v2496
        %v2508 = vunpack.c.l.b16 %v2497
        %v2509 = vunpack.c.h.b16 %v2497
        %v2510 = vunpack.c.l.b16 %v2498
        %v2511 = vunpack.c.h.b16 %v2498
        %v2512 = vunpack.c.l.b16 %v2499
        %v2513 = vunpack.c.h.b16 %v2499
        %v2514 = vunpack.c.l.b16 %v2500
        %v2515 = vunpack.c.h.b16 %v2500
        %v2516 = vpack.c.b16 %v2506, %v2506
        %v2517 = vpack.c.b16 %v2507, %v2507
        %v2518 = vpack.c.b16 %v2508, %v2508
        %v2519 = vpack.c.b16 %v2509, %v2509
        %v2520 = vpack.c.b16 %v2510, %v2510
        %v2521 = vpack.c.b16 %v2511, %v2511
        %v2522 = vpack.c.b16 %v2512, %v2512
        %v2523 = vpack.c.b16 %v2513, %v2513
        %v2524 = vpack.c.b16 %v2514, %v2514
        %v2525 = vpack.c.b16 %v2515, %v2515
        %2536 = vst [vmem:[%s217] sm:$0xf] %v2516
        %2537 = vst [vmem:[%s217 + $0x4] sm:$0xf] %v2517
        %2538 = vst [vmem:[%s217 + $0x8] sm:$0xf] %v2518
        %2539 = vst [vmem:[%s217 + $0xc] sm:$0xf] %v2519
        %2540 = vst [vmem:[%s217 + $0x10] sm:$0xf] %v2520
        %2541 = vst [vmem:[%s217 + $0x14] sm:$0xf] %v2521
        %2542 = vst [vmem:[%s217 + $0x18] sm:$0xf] %v2522
        %2543 = vst [vmem:[%s217 + $0x1c] sm:$0xf] %v2523
        %2544 = vst [vmem:[%s217 + $0x20] sm:$0xf] %v2524
        %2545 = vst [vmem:[%s217 + $0x24] sm:$0xf] %v2525
        %s2546 = sand.u32 %s137, 1
        %s2547 = scalar_lea.sflag [#allocation4], %s2546
        %s2548 = sand.u32 %s137, 1
        %s2549 = smul.addr %s2548, 40
        %s2550 = scalar_lea.vmem [#allocation3], %s2549
        // Predicated region
        $region41: #{tpu_custom_call.1} parent=39 // pred_check
          %p2551 = pneg %p147
        $region42: #{tpu_custom_call.1} parent=39 // pred_check_branch
          %2553 = sbr.rel (%p2551) target = $region44
        $region43: #{tpu_custom_call.1} parent=39 // pred_region
          %s2555 = ssub.s32 640, 640
          %2556 = vsyncadd %s2547, %s2555
          %s2557 = smul.addr %s19, 10
          %s2558 = smul.addr %s2557, 64
          %s2559 = scalar_lea.hbm %s5, %s2558
          %s2560 = sshll.u32 %s2550, 4
          %s2561 = int_to_ptr.vmem [resolvable:$true] %s2560
          %2566 = dma.vmem_to_hbm [thread:$0]  %s2561, 640, %s2559, %s2547, 64, 64, 4
        $region44: #{tpu_custom_call.1} parent=39 // pred_fallthru
          _
      $region40: #{tpu_custom_call.1} parent=5 // pred_fallthru
        _
      %p2567 = scmp.le.s32.totalorder 2, %s14
      // Predicated region
      $region45: #{tpu_custom_call.1} parent=5 // pred_check
        %p2568 = pneg %p2567
      $region46: #{tpu_custom_call.1} parent=5 // pred_check_branch
        %2570 = sbr.rel (%p2568) target = $region48
      $region47: #{tpu_custom_call.1} parent=5 // pred_region
        %s2571 = ssub.s32 %s14, 2
        // Predicated region
        $region49: #{tpu_custom_call.1} parent=47 // pred_check
          %p2572 = pneg %p153
        $region50: #{tpu_custom_call.1} parent=47 // pred_check_branch
          %2574 = sbr.rel (%p2572) target = $region52
        $region51: #{tpu_custom_call.1} parent=47 // pred_region
          %s2575 = sand.u32 %s138, 1
          %s2576 = scalar_lea.sflag [#allocation4], %s2575
          %s2577 = sand.u32 %s138, 1
          %s2578 = smul.addr %s2577, 40
          %s2579 = scalar_lea.vmem [#allocation3], %s2578
          %2580 = dma.done %s2576, 640
        $region52: #{tpu_custom_call.1} parent=47 // pred_fallthru
          _
      $region48: #{tpu_custom_call.1} parent=5 // pred_fallthru
        _
    $region6: #{tpu_custom_call.1} parent=1 // loop_footer
      %s18 = sadd.s32 1, %s14
    $region7: #{tpu_custom_call.1} parent=1 // loop_footer_branch
      %13 = sbr.rel target = $region3
    $region8: #{tpu_custom_call.1} parent=1 // loop_exit
      _
    %2581 = vsyncpa [#allocation4], 1
    %s2582 = scalar_lea.sflag [#allocation4], 1
    %2583 = vsyncpa %s2582, 1

// kernel: tpu_custom_call.1
$region0: #{tpu_custom_call.1}
  #allocation0 [shape = 'u32[]', space=smem, size = 0x4, offset = 0x4, fixed_abs, tag = 'smem constant byte address 0x4 - core index']
  #allocation1 [shape = 'u32[144,128]{1,0:T(1,128)}', space=vmem, size = 0x12000, scoped, tag = 'internal scratch']
  #allocation2 [shape = 'bf16[80,128]{1,0:T(8,128)(2,1)}', space=vmem, size = 0x5000, scoped, tag = 'scratch operand']
  %s0 = inlined_call_operand.vmem [shape: bf16[2,360,8], index: 0, kind: input, shape index: {}]
  %s1 = inlined_call_operand.vmem [shape: bf16[128,128], index: 1, kind: input, shape index: {}]
  %s2 = inlined_call_operand.vmem [shape: f32[80,1], index: 2, kind: input, shape index: {}]
  %s3 = inlined_call_operand.vmem [shape: f32[1,128], index: 3, kind: input, shape index: {}]
  %s4 = inlined_call_operand.vmem [shape: f32[1,128], index: 4, kind: input, shape index: {}]
  %s5 = inlined_call_operand.hbm [shape: bf16[2,80,128], index: 5, kind: output, shape index: {}]
  %s6 = sld [smem:[#allocation0]]
  $region53: #{tpu_custom_call.1} parent=0
    _
  %s8 = ssub.s32 1, %s6
  %s9 = scalar_select 0, %s8, %s6
  $region1: #{tpu_custom_call.1} parent=0
    #allocation3 [shape = 'u8[40960]{0}', space=vmem, size = 0xa000, scoped, tag = 'output window, operand 0']
    #allocation4 [shape = 's32[2]{0}', space=sflag, size = 0x8, scoped, tag = 'scoped memory for tpu_custom_call.1']
    %10 = vsyncpa [#allocation4], 0
    %s11 = scalar_lea.sflag [#allocation4], 1
    %12 = vsyncpa %s11, 0
    loop: start=0, step=1, limit=4
    $region2: #{tpu_custom_call.1} parent=1 // loop_pre_header
      _
    $region3: #{tpu_custom_call.1} parent=1 // loop_header
      %s14 = sphi 0, %s18
      %p15 = scmp.ge.s32.totalorder %s14, 4
      %s24 = sphi 0, %s26
      %s27 = sphi 0, %s24
      %s28 = sphi 0, %s27
      %s44 = sphi 0, %s28
      %s48 = sphi 0, %s48
      %s50 = sphi 0, %s48
      %s51 = sphi 0, %s50
      %s65 = sphi 0, %s51
      %s69 = sphi 0, %s69
      %s71 = sphi 0, %s69
      %s72 = sphi 0, %s71
      %s86 = sphi 0, %s72
      %s90 = sphi 0, %s90
      %s92 = sphi 0, %s90
      %s93 = sphi 0, %s92
      %s107 = sphi 0, %s93
      %s111 = sphi 0, %s111
      %s113 = sphi 0, %s111
      %s114 = sphi 0, %s113
      %s128 = sphi 0, %s114
      %s134 = sphi 0, %s136
      %s137 = sphi 0, %s134
      %s138 = sphi 0, %s137
      %s154 = sphi 0, %s138
    $region4: #{tpu_custom_call.1} parent=1 // loop_header_branch
      %17 = sbr.rel (%p15) target = $region8
    $region5: #{tpu_custom_call.1} parent=1 // loop_body
      %s19 = ssub.s32 %s14, 1
      %s20 = ssub.s32 %s14, 2
      %s21 = sadd.s32 %s14, 1
      %s22 = ssub.s32 %s14, %s21
      %p23 = scmp.eq.s32.totalorder %s22, 0
      %s25 = sadd.s32 %s24, 1
      %s26 = scalar_select %p23, %s24, %s25
      %p29 = pneg %p23
      %p30 = scmp.eq.s32.totalorder %s14, 1
      %p31 = por %p29, %p30
      %p32 = scmp.ne.s32.totalorder %s24, %s27
      %p33 = scmp.eq.s32.totalorder %s14, 0
      %p34 = por %p32, %p33
      %p35 = scmp.ne.s32.totalorder %s24, %s27
      %p36 = scmp.eq.s32.totalorder %s19, 1
      %p37 = por %p35, %p36
      %p38 = scmp.ne.s32.totalorder %s27, %s28
      %p39 = scmp.eq.s32.totalorder %s19, 0
      %p40 = por %p38, %p39
      %p41 = scmp.ne.s32.totalorder %s27, %s28
      %p42 = scmp.eq.s32.totalorder %s20, 1
      %p43 = por %p41, %p42
      %p45 = scmp.ne.s32.totalorder %s28, %s44
      %p46 = scmp.eq.s32.totalorder %s20, 0
      %p47 = por %p45, %p46
      %s49 = sadd.s32 %s48, 1
      %p52 = scmp.eq.s32.totalorder %s14, 1
      %p53 = scmp.ne.s32.totalorder %s48, %s50
      %p54 = scmp.eq.s32.totalorder %s14, 0
      %p55 = por %p53, %p54
      %p56 = scmp.ne.s32.totalorder %s48, %s50
      %p57 = scmp.eq.s32.totalorder %s19, 1
      %p58 = por %p56, %p57
      %p59 = scmp.ne.s32.totalorder %s50, %s51
      %p60 = scmp.eq.s32.totalorder %s19, 0
      %p61 = por %p59, %p60
      %p62 = scmp.ne.s32.totalorder %s50, %s51
      %p63 = scmp.eq.s32.totalorder %s20, 1
      %p64 = por %p62, %p63
      %p66 = scmp.ne.s32.totalorder %s51, %s65
      %p67 = scmp.eq.s32.totalorder %s20, 0
      %p68 = por %p66, %p67
      %s70 = sadd.s32 %s69, 1
      %p73 = scmp.eq.s32.totalorder %s14, 1
      %p74 = scmp.ne.s32.totalorder %s69, %s71
      %p75 = scmp.eq.s32.totalorder %s14, 0
      %p76 = por %p74, %p75
      %p77 = scmp.ne.s32.totalorder %s69, %s71
      %p78 = scmp.eq.s32.totalorder %s19, 1
      %p79 = por %p77, %p78
      %p80 = scmp.ne.s32.totalorder %s71, %s72
      %p81 = scmp.eq.s32.totalorder %s19, 0
      %p82 = por %p80, %p81
      %p83 = scmp.ne.s32.totalorder %s71, %s72
      %p84 = scmp.eq.s32.totalorder %s20, 1
      %p85 = por %p83, %p84
      %p87 = scmp.ne.s32.totalorder %s72, %s86
      %p88 = scmp.eq.s32.totalorder %s20, 0
      %p89 = por %p87, %p88
      %s91 = sadd.s32 %s90, 1
      %p94 = scmp.eq.s32.totalorder %s14, 1
      %p95 = scmp.ne.s32.totalorder %s90, %s92
      %p96 = scmp.eq.s32.totalorder %s14, 0
      %p97 = por %p95, %p96
      %p98 = scmp.ne.s32.totalorder %s90, %s92
      %p99 = scmp.eq.s32.totalorder %s19, 1
      %p100 = por %p98, %p99
      %p101 = scmp.ne.s32.totalorder %s92, %s93
      %p102 = scmp.eq.s32.totalorder %s19, 0
      %p103 = por %p101, %p102
      %p104 = scmp.ne.s32.totalorder %s92, %s93
      %p105 = scmp.eq.s32.totalorder %s20, 1
      %p106 = por %p104, %p105
      %p108 = scmp.ne.s32.totalorder %s93, %s107
      %p109 = scmp.eq.s32.totalorder %s20, 0
      %p110 = por %p108, %p109
      %s112 = sadd.s32 %s111, 1
      %p115 = scmp.eq.s32.totalorder %s14, 1
      %p116 = scmp.ne.s32.totalorder %s111, %s113
      %p117 = scmp.eq.s32.totalorder %s14, 0
      %p118 = por %p116, %p117
      %p119 = scmp.ne.s32.totalorder %s111, %s113
      %p120 = scmp.eq.s32.totalorder %s19, 1
      %p121 = por %p119, %p120
      %p122 = scmp.ne.s32.totalorder %s113, %s114
      %p123 = scmp.eq.s32.totalorder %s19, 0
      %p124 = por %p122, %p123
      %p125 = scmp.ne.s32.totalorder %s113, %s114
      %p126 = scmp.eq.s32.totalorder %s20, 1
      %p127 = por %p125, %p126
      %p129 = scmp.ne.s32.totalorder %s114, %s128
      %p130 = scmp.eq.s32.totalorder %s20, 0
      %p131 = por %p129, %p130
      %s132 = ssub.s32 %s14, %s21
      %p133 = scmp.eq.s32.totalorder %s132, 0
      %s135 = sadd.s32 %s134, 1
      %s136 = scalar_select %p133, %s134, %s135
      %p139 = pneg %p133
      %p140 = scmp.eq.s32.totalorder %s14, 1
      %p141 = por %p139, %p140
      %p142 = scmp.ne.s32.totalorder %s134, %s137
      %p143 = scmp.eq.s32.totalorder %s14, 0
      %p144 = por %p142, %p143
      %p145 = scmp.ne.s32.totalorder %s134, %s137
      %p146 = scmp.eq.s32.totalorder %s19, 1
      %p147 = por %p145, %p146
      %p148 = scmp.ne.s32.totalorder %s137, %s138
      %p149 = scmp.eq.s32.totalorder %s19, 0
      %p150 = por %p148, %p149
      %p151 = scmp.ne.s32.totalorder %s137, %s138
      %p152 = scmp.eq.s32.totalorder %s20, 1
      %p153 = por %p151, %p152
      %p155 = scmp.ne.s32.totalorder %s138, %s154
      %p156 = scmp.eq.s32.totalorder %s20, 0
      %p157 = por %p155, %p156
      %p158 = scmp.le.s32.totalorder 1, %s14
      %p159 = scmp.lt.s32.totalorder %s14, 3
      %p160 = pnand %p158, %p159
      %p161 = pneg %p160
      // Predicated region
      $region9: #{tpu_custom_call.1} parent=5 // pred_check
        _
      $region10: #{tpu_custom_call.1} parent=5 // pred_check_branch
        %163 = sbr.rel (%p160) target = $region12
      $region11: #{tpu_custom_call.1} parent=5 // pred_region
        %s164 = ssub.s32 %s14, 1
        // Predicated region
        $region13: #{tpu_custom_call.1} parent=11 // pred_check
          %p165 = pneg %p61
        $region14: #{tpu_custom_call.1} parent=11 // pred_check_branch
          %167 = sbr.rel (%p165) target = $region16
        $region15: #{tpu_custom_call.1} parent=11 // pred_region
          _
        $region16: #{tpu_custom_call.1} parent=11 // pred_fallthru
          _
        // Predicated region
        $region17: #{tpu_custom_call.1} parent=11 // pred_check
          %p168 = pneg %p82
        $region18: #{tpu_custom_call.1} parent=11 // pred_check_branch
          %170 = sbr.rel (%p168) target = $region20
        $region19: #{tpu_custom_call.1} parent=11 // pred_region
          _
        $region20: #{tpu_custom_call.1} parent=11 // pred_fallthru
          _
        // Predicated region
        $region21: #{tpu_custom_call.1} parent=11 // pred_check
          %p171 = pneg %p103
        $region22: #{tpu_custom_call.1} parent=11 // pred_check_branch
          %173 = sbr.rel (%p171) target = $region24
        $region23: #{tpu_custom_call.1} parent=11 // pred_region
          _
        $region24: #{tpu_custom_call.1} parent=11 // pred_fallthru
          _
        // Predicated region
        $region25: #{tpu_custom_call.1} parent=11 // pred_check
          %p174 = pneg %p124
        $region26: #{tpu_custom_call.1} parent=11 // pred_check_branch
          %176 = sbr.rel (%p174) target = $region28
        $region27: #{tpu_custom_call.1} parent=11 // pred_region
          _
        $region28: #{tpu_custom_call.1} parent=11 // pred_fallthru
          _
      $region12: #{tpu_custom_call.1} parent=5 // pred_fallthru
        _
      %p177 = scmp.lt.s32.totalorder %s14, 2
      // Predicated region
      $region29: #{tpu_custom_call.1} parent=5 // pred_check
        %p178 = pneg %p177
      $region30: #{tpu_custom_call.1} parent=5 // pred_check_branch
        %180 = sbr.rel (%p178) target = $region32
      $region31: #{tpu_custom_call.1} parent=5 // pred_region
        // Predicated region
        $region33: #{tpu_custom_call.1} parent=31 // pred_check
          %p181 = pneg %p34
        $region34: #{tpu_custom_call.1} parent=31 // pred_check_branch
          %183 = sbr.rel (%p181) target = $region36
        $region35: #{tpu_custom_call.1} parent=31 // pred_region
          %p184 = scmp.lt.s32.totalorder %s14, 1
          %s185 = scalar_select %p184, %s14, 1
          %s186 = smul.addr %s185, 45
          %s187 = smul.addr %s186, 4
          %s188 = scalar_lea.vmem %s0, %s187
        $region36: #{tpu_custom_call.1} parent=31 // pred_fallthru
          _
      $region32: #{tpu_custom_call.1} parent=5 // pred_fallthru
        _
      %p189 = scmp.le.s32.totalorder 1, %s14
      %p190 = scmp.lt.s32.totalorder %s14, 3
      %p191 = pnand %p189, %p190
      %p192 = pneg %p191
      // Predicated region
      $region37: #{tpu_custom_call.1} parent=5 // pred_check
        _
      $region38: #{tpu_custom_call.1} parent=5 // pred_check_branch
        %194 = sbr.rel (%p191) target = $region40
      $region39: #{tpu_custom_call.1} parent=5 // pred_region
        %s195 = ssub.s32 %s14, 1
        %p196 = scmp.lt.s32.totalorder %s19, 1
        %s197 = scalar_select %p196, %s19, 1
        %s198 = smul.addr %s197, 45
        %s199 = smul.addr %s198, 4
        %s200 = scalar_lea.vmem %s0, %s199
        %p201 = pneg %p40
        %p202 = pneg %p37
        %p203 = pneg %p61
        %p204 = pneg %p58
        %p205 = pneg %p82
        %p206 = pneg %p79
        %p207 = pneg %p103
        %p208 = pneg %p100
        %p209 = pneg %p124
        %p210 = pneg %p121
        %p211 = pneg %p150
        %p212 = pneg %p147
        %s213 = sand.u32 %s137, 1
        %s214 = scalar_lea.sflag [#allocation4], %s213
        %s215 = sand.u32 %s137, 1
        %s216 = smul.addr %s215, 40
        %s217 = scalar_lea.vmem [#allocation3], %s216
        %p218 = scmp.lt.s32.totalorder %s19, 1
        %s219 = scalar_select %p218, %s19, 1
        %s220 = smul.addr %s219, 45
        %s221 = smul.addr %s220, 4
        %s222 = scalar_lea.vmem %s0, %s221
        %v224 = vld [vmem:[%s222] sm:$0xf]
        %v225 = vld [vmem:[%s222 + $0x4] sm:$0xf]
        %v226 = vld [vmem:[%s222 + $0x8] sm:$0xf]
        %v227 = vld [vmem:[%s222 + $0xc] sm:$0xf]
        %v228 = vld [vmem:[%s222 + $0x10] sm:$0xf]
        %v229 = vld [vmem:[%s222 + $0x14] sm:$0xf]
        %v230 = vld [vmem:[%s222 + $0x18] sm:$0xf]
        %v231 = vld [vmem:[%s222 + $0x1c] sm:$0xf]
        %v232 = vld [vmem:[%s222 + $0x20] sm:$0xf]
        %v233 = vld [vmem:[%s222 + $0x24] sm:$0xf]
        %vm234 = vcmask 60416
        %235 = vst.msk [vmem:[#allocation2] sm:$0xf] %vm234, %v224
        %236 = vst.msk [vmem:[#allocation2 + $0x4] sm:$0xf] %vm234, %v225
        %237 = vst.msk [vmem:[#allocation2 + $0x8] sm:$0xf] %vm234, %v226
        %238 = vst.msk [vmem:[#allocation2 + $0xc] sm:$0xf] %vm234, %v227
        %239 = vst.msk [vmem:[#allocation2 + $0x10] sm:$0xf] %vm234, %v228
        %240 = vst.msk [vmem:[#allocation2 + $0x14] sm:$0xf] %vm234, %v229
        %241 = vst.msk [vmem:[#allocation2 + $0x18] sm:$0xf] %vm234, %v230
        %242 = vst.msk [vmem:[#allocation2 + $0x1c] sm:$0xf] %vm234, %v231
        %243 = vst.msk [vmem:[#allocation2 + $0x20] sm:$0xf] %vm234, %v232
        %244 = vst.msk [vmem:[#allocation2 + $0x24] sm:$0xf] %vm234, %v233
        %v245 = vld [vmem:[%s222 + $0x2c] sm:$0xe]
        %v246 = vld [vmem:[%s222 + $0x30] sm:$0xf]
        %v247 = vld [vmem:[%s222 + $0x34] sm:$0xf]
        %v248 = vld [vmem:[%s222 + $0x38] sm:$0xf]
        %v249 = vld [vmem:[%s222 + $0x3c] sm:$0xf]
        %v250 = vld [vmem:[%s222 + $0x40] sm:$0xf]
        %v251 = vld [vmem:[%s222 + $0x44] sm:$0xf]
        %v252 = vld [vmem:[%s222 + $0x48] sm:$0xf]
        %v253 = vld [vmem:[%s222 + $0x4c] sm:$0xf]
        %v254 = vld [vmem:[%s222 + $0x50] sm:$0xf]
        %v255 = vld [vmem:[%s222 + $0x54] sm:$0x1]
        %vm267 = vcmask 1042432
        %vm268 = vcmask 1046532
        %vm269 = vmor %vm267, %vm268
        %v270 = vrot.slane %v245, 5
        %v271 = vrot.slane %v270, 4
        %v272 = vrot.slane %v246, 5
        %v273 = vsel %vm269, %v271, %v272
        %v274 = vrot.slane %v272, 4
        %v275 = vrot.slane %v247, 5
        %v276 = vsel %vm269, %v274, %v275
        %v277 = vrot.slane %v275, 4
        %v278 = vrot.slane %v248, 5
        %v279 = vsel %vm269, %v277, %v278
        %v280 = vrot.slane %v278, 4
        %v281 = vrot.slane %v249, 5
        %v282 = vsel %vm269, %v280, %v281
        %v283 = vrot.slane %v281, 4
        %v284 = vrot.slane %v250, 5
        %v285 = vsel %vm269, %v283, %v284
        %v286 = vrot.slane %v284, 4
        %v287 = vrot.slane %v251, 5
        %v288 = vsel %vm269, %v286, %v287
        %v289 = vrot.slane %v287, 4
        %v290 = vrot.slane %v252, 5
        %v291 = vsel %vm269, %v289, %v290
        %v292 = vrot.slane %v290, 4
        %v293 = vrot.slane %v253, 5
        %v294 = vsel %vm269, %v292, %v293
        %v295 = vrot.slane %v293, 4
        %v296 = vrot.slane %v254, 5
        %v297 = vsel %vm269, %v295, %v296
        %v298 = vrot.slane %v296, 4
        %v299 = vrot.slane %v255, 5
        %v300 = vsel %vm269, %v298, %v299
        %301 = vrot.lane.b32.xlu0 %v273, 8
        %v302 = vpop.permute.xlu0 %301
        %303 = vrot.lane.b32.xlu0 %v276, 8
        %v304 = vpop.permute.xlu0 %303
        %305 = vrot.lane.b32.xlu0 %v279, 8
        %v306 = vpop.permute.xlu0 %305
        %307 = vrot.lane.b32.xlu0 %v282, 8
        %v308 = vpop.permute.xlu0 %307
        %309 = vrot.lane.b32.xlu0 %v285, 8
        %v310 = vpop.permute.xlu0 %309
        %311 = vrot.lane.b32.xlu0 %v288, 8
        %v312 = vpop.permute.xlu0 %311
        %313 = vrot.lane.b32.xlu0 %v291, 8
        %v314 = vpop.permute.xlu0 %313
        %315 = vrot.lane.b32.xlu0 %v294, 8
        %v316 = vpop.permute.xlu0 %315
        %317 = vrot.lane.b32.xlu0 %v297, 8
        %v318 = vpop.permute.xlu0 %317
        %319 = vrot.lane.b32.xlu0 %v300, 8
        %v320 = vpop.permute.xlu0 %319
        %vm331 = vcmask 126016
        %332 = vst.msk [vmem:[#allocation2] sm:$0xf] %vm331, %v302
        %333 = vst.msk [vmem:[#allocation2 + $0x4] sm:$0xf] %vm331, %v304
        %334 = vst.msk [vmem:[#allocation2 + $0x8] sm:$0xf] %vm331, %v306
        %335 = vst.msk [vmem:[#allocation2 + $0xc] sm:$0xf] %vm331, %v308
        %336 = vst.msk [vmem:[#allocation2 + $0x10] sm:$0xf] %vm331, %v310
        %337 = vst.msk [vmem:[#allocation2 + $0x14] sm:$0xf] %vm331, %v312
        %338 = vst.msk [vmem:[#allocation2 + $0x18] sm:$0xf] %vm331, %v314
        %339 = vst.msk [vmem:[#allocation2 + $0x1c] sm:$0xf] %vm331, %v316
        %340 = vst.msk [vmem:[#allocation2 + $0x20] sm:$0xf] %vm331, %v318
        %341 = vst.msk [vmem:[#allocation2 + $0x24] sm:$0xf] %vm331, %v320
        %v342 = vld [vmem:[%s222] sm:$0xf]
        %v343 = vld [vmem:[%s222 + $0x4] sm:$0xf]
        %v344 = vld [vmem:[%s222 + $0x8] sm:$0xf]
        %v345 = vld [vmem:[%s222 + $0xc] sm:$0xf]
        %v346 = vld [vmem:[%s222 + $0x10] sm:$0xf]
        %v347 = vld [vmem:[%s222 + $0x14] sm:$0xf]
        %v348 = vld [vmem:[%s222 + $0x18] sm:$0xf]
        %v349 = vld [vmem:[%s222 + $0x1c] sm:$0xf]
        %v350 = vld [vmem:[%s222 + $0x20] sm:$0xf]
        %v351 = vld [vmem:[%s222 + $0x24] sm:$0xf]
        %v352 = vld [vmem:[%s222 + $0x28] sm:$0x1]
        %vm353 = vsmask.f32 3328
        %vm354 = vsmask.f32 7440
        %vm355 = vmor %vm353, %vm354
        %v357 = vshrl.u32 %v342, 16
        %v359 = vrot.slane %v357, 4
        %v360 = vshll.u32 %v342, 16
        %v362 = vrot.slane %v360, 5
        %v363 = vor.u32 %v359, %v362
        %v364 = vrot.slane %v363, 4
        %v366 = vshll.u32 %v343, 16
        %v368 = vrot.slane %v366, 5
        %v369 = vsel %vm355, %v364, %v368
        %v370 = vshrl.u32 %v343, 16
        %v372 = vrot.slane %v370, 4
        %v373 = vor.u32 %v372, %v368
        %v374 = vrot.slane %v373, 4
        %v376 = vshll.u32 %v344, 16
        %v378 = vrot.slane %v376, 5
        %v379 = vsel %vm355, %v374, %v378
        %v380 = vshrl.u32 %v344, 16
        %v382 = vrot.slane %v380, 4
        %v383 = vor.u32 %v382, %v378
        %v384 = vrot.slane %v383, 4
        %v386 = vshll.u32 %v345, 16
        %v388 = vrot.slane %v386, 5
        %v389 = vsel %vm355, %v384, %v388
        %v390 = vshrl.u32 %v345, 16
        %v392 = vrot.slane %v390, 4
        %v393 = vor.u32 %v392, %v388
        %v394 = vrot.slane %v393, 4
        %v396 = vshll.u32 %v346, 16
        %v398 = vrot.slane %v396, 5
        %v399 = vsel %vm355, %v394, %v398
        %v400 = vshrl.u32 %v346, 16
        %v402 = vrot.slane %v400, 4
        %v403 = vor.u32 %v402, %v398
        %v404 = vrot.slane %v403, 4
        %v406 = vshll.u32 %v347, 16
        %v408 = vrot.slane %v406, 5
        %v409 = vsel %vm355, %v404, %v408
        %v410 = vshrl.u32 %v347, 16
        %v412 = vrot.slane %v410, 4
        %v413 = vor.u32 %v412, %v408
        %v414 = vrot.slane %v413, 4
        %v416 = vshll.u32 %v348, 16
        %v418 = vrot.slane %v416, 5
        %v419 = vsel %vm355, %v414, %v418
        %v420 = vshrl.u32 %v348, 16
        %v422 = vrot.slane %v420, 4
        %v423 = vor.u32 %v422, %v418
        %v424 = vrot.slane %v423, 4
        %v426 = vshll.u32 %v349, 16
        %v428 = vrot.slane %v426, 5
        %v429 = vsel %vm355, %v424, %v428
        %v430 = vshrl.u32 %v349, 16
        %v432 = vrot.slane %v430, 4
        %v433 = vor.u32 %v432, %v428
        %v434 = vrot.slane %v433, 4
        %v436 = vshll.u32 %v350, 16
        %v438 = vrot.slane %v436, 5
        %v439 = vsel %vm355, %v434, %v438
        %v440 = vshrl.u32 %v350, 16
        %v442 = vrot.slane %v440, 4
        %v443 = vor.u32 %v442, %v438
        %v444 = vrot.slane %v443, 4
        %v446 = vshll.u32 %v351, 16
        %v448 = vrot.slane %v446, 5
        %v449 = vsel %vm355, %v444, %v448
        %v450 = vshrl.u32 %v351, 16
        %v452 = vrot.slane %v450, 4
        %v453 = vor.u32 %v452, %v448
        %v454 = vrot.slane %v453, 4
        %v456 = vshll.u32 %v352, 16
        %v458 = vrot.slane %v456, 5
        %v459 = vsel %vm355, %v454, %v458
        %460 = vrot.lane.b32.xlu0 %v369, 16
        %v461 = vpop.permute.xlu0 %460
        %462 = vrot.lane.b32.xlu0 %v379, 16
        %v463 = vpop.permute.xlu0 %462
        %464 = vrot.lane.b32.xlu0 %v389, 16
        %v465 = vpop.permute.xlu0 %464
        %466 = vrot.lane.b32.xlu0 %v399, 16
        %v467 = vpop.permute.xlu0 %466
        %468 = vrot.lane.b32.xlu0 %v409, 16
        %v469 = vpop.permute.xlu0 %468
        %470 = vrot.lane.b32.xlu0 %v419, 16
        %v471 = vpop.permute.xlu0 %470
        %472 = vrot.lane.b32.xlu0 %v429, 16
        %v473 = vpop.permute.xlu0 %472
        %474 = vrot.lane.b32.xlu0 %v439, 16
        %v475 = vpop.permute.xlu0 %474
        %476 = vrot.lane.b32.xlu0 %v449, 16
        %v477 = vpop.permute.xlu0 %476
        %478 = vrot.lane.b32.xlu0 %v459, 16
        %v479 = vpop.permute.xlu0 %478
        %vm490 = vcmask 191616
        %491 = vst.msk [vmem:[#allocation2] sm:$0xf] %vm490, %v461
        %492 = vst.msk [vmem:[#allocation2 + $0x4] sm:$0xf] %vm490, %v463
        %493 = vst.msk [vmem:[#allocation2 + $0x8] sm:$0xf] %vm490, %v465
        %494 = vst.msk [vmem:[#allocation2 + $0xc] sm:$0xf] %vm490, %v467
        %495 = vst.msk [vmem:[#allocation2 + $0x10] sm:$0xf] %vm490, %v469
        %496 = vst.msk [vmem:[#allocation2 + $0x14] sm:$0xf] %vm490, %v471
        %497 = vst.msk [vmem:[#allocation2 + $0x18] sm:$0xf] %vm490, %v473
        %498 = vst.msk [vmem:[#allocation2 + $0x1c] sm:$0xf] %vm490, %v475
        %499 = vst.msk [vmem:[#allocation2 + $0x20] sm:$0xf] %vm490, %v477
        %500 = vst.msk [vmem:[#allocation2 + $0x24] sm:$0xf] %vm490, %v479
        %v501 = vld [vmem:[%s222 + $0x2c] sm:$0xe]
        %v502 = vld [vmem:[%s222 + $0x30] sm:$0xf]
        %v503 = vld [vmem:[%s222 + $0x34] sm:$0xf]
        %v504 = vld [vmem:[%s222 + $0x38] sm:$0xf]
        %v505 = vld [vmem:[%s222 + $0x3c] sm:$0xf]
        %v506 = vld [vmem:[%s222 + $0x40] sm:$0xf]
        %v507 = vld [vmem:[%s222 + $0x44] sm:$0xf]
        %v508 = vld [vmem:[%s222 + $0x48] sm:$0xf]
        %v509 = vld [vmem:[%s222 + $0x4c] sm:$0xf]
        %v510 = vld [vmem:[%s222 + $0x50] sm:$0xf]
        %v511 = vld [vmem:[%s222 + $0x54] sm:$0x3]
        %vm512 = vsmask.f32 2304
        %vm513 = vsmask.f32 6416
        %vm514 = vmor %vm512, %vm513
        %v516 = vshrl.u32 %v501, 16
        %v518 = vrot.slane %v516, 5
        %v519 = vshll.u32 %v501, 16
        %v521 = vrot.slane %v519, 6
        %v522 = vor.u32 %v518, %v521
        %v523 = vrot.slane %v522, 4
        %v525 = vshrl.u32 %v502, 16
        %v527 = vrot.slane %v525, 5
        %v528 = vshll.u32 %v502, 16
        %v530 = vrot.slane %v528, 6
        %v531 = vor.u32 %v527, %v530
        %v532 = vsel %vm514, %v523, %v531
        %v533 = vrot.slane %v531, 4
        %v535 = vshrl.u32 %v503, 16
        %v537 = vrot.slane %v535, 5
        %v538 = vshll.u32 %v503, 16
        %v540 = vrot.slane %v538, 6
        %v541 = vor.u32 %v537, %v540
        %v542 = vsel %vm514, %v533, %v541
        %v543 = vrot.slane %v541, 4
        %v545 = vshrl.u32 %v504, 16
        %v547 = vrot.slane %v545, 5
        %v548 = vshll.u32 %v504, 16
        %v550 = vrot.slane %v548, 6
        %v551 = vor.u32 %v547, %v550
        %v552 = vsel %vm514, %v543, %v551
        %v553 = vrot.slane %v551, 4
        %v555 = vshrl.u32 %v505, 16
        %v557 = vrot.slane %v555, 5
        %v558 = vshll.u32 %v505, 16
        %v560 = vrot.slane %v558, 6
        %v561 = vor.u32 %v557, %v560
        %v562 = vsel %vm514, %v553, %v561
        %v563 = vrot.slane %v561, 4
        %v565 = vshrl.u32 %v506, 16
        %v567 = vrot.slane %v565, 5
        %v568 = vshll.u32 %v506, 16
        %v570 = vrot.slane %v568, 6
        %v571 = vor.u32 %v567, %v570
        %v572 = vsel %vm514, %v563, %v571
        %v573 = vrot.slane %v571, 4
        %v575 = vshrl.u32 %v507, 16
        %v577 = vrot.slane %v575, 5
        %v578 = vshll.u32 %v507, 16
        %v580 = vrot.slane %v578, 6
        %v581 = vor.u32 %v577, %v580
        %v582 = vsel %vm514, %v573, %v581
        %v583 = vrot.slane %v581, 4
        %v585 = vshrl.u32 %v508, 16
        %v587 = vrot.slane %v585, 5
        %v588 = vshll.u32 %v508, 16
        %v590 = vrot.slane %v588, 6
        %v591 = vor.u32 %v587, %v590
        %v592 = vsel %vm514, %v583, %v591
        %v593 = vrot.slane %v591, 4
        %v595 = vshrl.u32 %v509, 16
        %v597 = vrot.slane %v595, 5
        %v598 = vshll.u32 %v509, 16
        %v600 = vrot.slane %v598, 6
        %v601 = vor.u32 %v597, %v600
        %v602 = vsel %vm514, %v593, %v601
        %v603 = vrot.slane %v601, 4
        %v605 = vshrl.u32 %v510, 16
        %v607 = vrot.slane %v605, 5
        %v608 = vshll.u32 %v510, 16
        %v610 = vrot.slane %v608, 6
        %v611 = vor.u32 %v607, %v610
        %v612 = vsel %vm514, %v603, %v611
        %v613 = vrot.slane %v611, 4
        %v615 = vshrl.u32 %v511, 16
        %v617 = vrot.slane %v615, 5
        %v618 = vshll.u32 %v511, 16
        %v620 = vrot.slane %v618, 6
        %v621 = vor.u32 %v617, %v620
        %v622 = vsel %vm514, %v613, %v621
        %623 = vrot.lane.b32.xlu0 %v532, 24
        %v624 = vpop.permute.xlu0 %623
        %625 = vrot.lane.b32.xlu0 %v542, 24
        %v626 = vpop.permute.xlu0 %625
        %627 = vrot.lane.b32.xlu0 %v552, 24
        %v628 = vpop.permute.xlu0 %627
        %629 = vrot.lane.b32.xlu0 %v562, 24
        %v630 = vpop.permute.xlu0 %629
        %631 = vrot.lane.b32.xlu0 %v572, 24
        %v632 = vpop.permute.xlu0 %631
        %633 = vrot.lane.b32.xlu0 %v582, 24
        %v634 = vpop.permute.xlu0 %633
        %635 = vrot.lane.b32.xlu0 %v592, 24
        %v636 = vpop.permute.xlu0 %635
        %637 = vrot.lane.b32.xlu0 %v602, 24
        %v638 = vpop.permute.xlu0 %637
        %639 = vrot.lane.b32.xlu0 %v612, 24
        %v640 = vpop.permute.xlu0 %639
        %641 = vrot.lane.b32.xlu0 %v622, 24
        %v642 = vpop.permute.xlu0 %641
        %vm653 = vcmask 257216
        %654 = vst.msk [vmem:[#allocation2] sm:$0xf] %vm653, %v624
        %655 = vst.msk [vmem:[#allocation2 + $0x4] sm:$0xf] %vm653, %v626
        %656 = vst.msk [vmem:[#allocation2 + $0x8] sm:$0xf] %vm653, %v628
        %657 = vst.msk [vmem:[#allocation2 + $0xc] sm:$0xf] %vm653, %v630
        %658 = vst.msk [vmem:[#allocation2 + $0x10] sm:$0xf] %vm653, %v632
        %659 = vst.msk [vmem:[#allocation2 + $0x14] sm:$0xf] %vm653, %v634
        %660 = vst.msk [vmem:[#allocation2 + $0x18] sm:$0xf] %vm653, %v636
        %661 = vst.msk [vmem:[#allocation2 + $0x1c] sm:$0xf] %vm653, %v638
        %662 = vst.msk [vmem:[#allocation2 + $0x20] sm:$0xf] %vm653, %v640
        %663 = vst.msk [vmem:[#allocation2 + $0x24] sm:$0xf] %vm653, %v642
        %v664 = vld [vmem:[%s222 + $0x58] sm:$0xc]
        %v665 = vld [vmem:[%s222 + $0x5c] sm:$0xf]
        %v666 = vld [vmem:[%s222 + $0x60] sm:$0xf]
        %v667 = vld [vmem:[%s222 + $0x64] sm:$0xf]
        %v668 = vld [vmem:[%s222 + $0x68] sm:$0xf]
        %v669 = vld [vmem:[%s222 + $0x6c] sm:$0xf]
        %v670 = vld [vmem:[%s222 + $0x70] sm:$0xf]
        %v671 = vld [vmem:[%s222 + $0x74] sm:$0xf]
        %v672 = vld [vmem:[%s222 + $0x78] sm:$0xf]
        %v673 = vld [vmem:[%s222 + $0x7c] sm:$0xf]
        %v674 = vld [vmem:[%s222 + $0x80] sm:$0x3]
        %vm686 = vcmask 1041408
        %vm687 = vcmask 1045508
        %vm688 = vmor %vm686, %vm687
        %v689 = vrot.slane %v664, 6
        %v690 = vrot.slane %v689, 4
        %v691 = vrot.slane %v665, 6
        %v692 = vsel %vm688, %v690, %v691
        %v693 = vrot.slane %v691, 4
        %v694 = vrot.slane %v666, 6
        %v695 = vsel %vm688, %v693, %v694
        %v696 = vrot.slane %v694, 4
        %v697 = vrot.slane %v667, 6
        %v698 = vsel %vm688, %v696, %v697
        %v699 = vrot.slane %v697, 4
        %v700 = vrot.slane %v668, 6
        %v701 = vsel %vm688, %v699, %v700
        %v702 = vrot.slane %v700, 4
        %v703 = vrot.slane %v669, 6
        %v704 = vsel %vm688, %v702, %v703
        %v705 = vrot.slane %v703, 4
        %v706 = vrot.slane %v670, 6
        %v707 = vsel %vm688, %v705, %v706
        %v708 = vrot.slane %v706, 4
        %v709 = vrot.slane %v671, 6
        %v710 = vsel %vm688, %v708, %v709
        %v711 = vrot.slane %v709, 4
        %v712 = vrot.slane %v672, 6
        %v713 = vsel %vm688, %v711, %v712
        %v714 = vrot.slane %v712, 4
        %v715 = vrot.slane %v673, 6
        %v716 = vsel %vm688, %v714, %v715
        %v717 = vrot.slane %v715, 4
        %v718 = vrot.slane %v674, 6
        %v719 = vsel %vm688, %v717, %v718
        %720 = vrot.lane.b32.xlu0 %v692, 32
        %v721 = vpop.permute.xlu0 %720
        %722 = vrot.lane.b32.xlu0 %v695, 32
        %v723 = vpop.permute.xlu0 %722
        %724 = vrot.lane.b32.xlu0 %v698, 32
        %v725 = vpop.permute.xlu0 %724
        %726 = vrot.lane.b32.xlu0 %v701, 32
        %v727 = vpop.permute.xlu0 %726
        %728 = vrot.lane.b32.xlu0 %v704, 32
        %v729 = vpop.permute.xlu0 %728
        %730 = vrot.lane.b32.xlu0 %v707, 32
        %v731 = vpop.permute.xlu0 %730
        %732 = vrot.lane.b32.xlu0 %v710, 32
        %v733 = vpop.permute.xlu0 %732
        %734 = vrot.lane.b32.xlu0 %v713, 32
        %v735 = vpop.permute.xlu0 %734
        %736 = vrot.lane.b32.xlu0 %v716, 32
        %v737 = vpop.permute.xlu0 %736
        %738 = vrot.lane.b32.xlu0 %v719, 32
        %v739 = vpop.permute.xlu0 %738
        %vm750 = vcmask 322816
        %751 = vst.msk [vmem:[#allocation2] sm:$0xf] %vm750, %v721
        %752 = vst.msk [vmem:[#allocation2 + $0x4] sm:$0xf] %vm750, %v723
        %753 = vst.msk [vmem:[#allocation2 + $0x8] sm:$0xf] %vm750, %v725
        %754 = vst.msk [vmem:[#allocation2 + $0xc] sm:$0xf] %vm750, %v727
        %755 = vst.msk [vmem:[#allocation2 + $0x10] sm:$0xf] %vm750, %v729
        %756 = vst.msk [vmem:[#allocation2 + $0x14] sm:$0xf] %vm750, %v731
        %757 = vst.msk [vmem:[#allocation2 + $0x18] sm:$0xf] %vm750, %v733
        %758 = vst.msk [vmem:[#allocation2 + $0x1c] sm:$0xf] %vm750, %v735
        %759 = vst.msk [vmem:[#allocation2 + $0x20] sm:$0xf] %vm750, %v737
        %760 = vst.msk [vmem:[#allocation2 + $0x24] sm:$0xf] %vm750, %v739
        %v761 = vld [vmem:[%s222 + $0x84] sm:$0x8]
        %v762 = vld [vmem:[%s222 + $0x88] sm:$0xf]
        %v763 = vld [vmem:[%s222 + $0x8c] sm:$0xf]
        %v764 = vld [vmem:[%s222 + $0x90] sm:$0xf]
        %v765 = vld [vmem:[%s222 + $0x94] sm:$0xf]
        %v766 = vld [vmem:[%s222 + $0x98] sm:$0xf]
        %v767 = vld [vmem:[%s222 + $0x9c] sm:$0xf]
        %v768 = vld [vmem:[%s222 + $0xa0] sm:$0xf]
        %v769 = vld [vmem:[%s222 + $0xa4] sm:$0xf]
        %v770 = vld [vmem:[%s222 + $0xa8] sm:$0xf]
        %v771 = vld [vmem:[%s222 + $0xac] sm:$0x7]
        %vm783 = vcmask 1040384
        %vm784 = vcmask 1044484
        %vm785 = vmor %vm783, %vm784
        %v786 = vrot.slane %v761, 7
        %v787 = vrot.slane %v786, 4
        %v788 = vrot.slane %v762, 7
        %v789 = vsel %vm785, %v787, %v788
        %v790 = vrot.slane %v788, 4
        %v791 = vrot.slane %v763, 7
        %v792 = vsel %vm785, %v790, %v791
        %v793 = vrot.slane %v791, 4
        %v794 = vrot.slane %v764, 7
        %v795 = vsel %vm785, %v793, %v794
        %v796 = vrot.slane %v794, 4
        %v797 = vrot.slane %v765, 7
        %v798 = vsel %vm785, %v796, %v797
        %v799 = vrot.slane %v797, 4
        %v800 = vrot.slane %v766, 7
        %v801 = vsel %vm785, %v799, %v800
        %v802 = vrot.slane %v800, 4
        %v803 = vrot.slane %v767, 7
        %v804 = vsel %vm785, %v802, %v803
        %v805 = vrot.slane %v803, 4
        %v806 = vrot.slane %v768, 7
        %v807 = vsel %vm785, %v805, %v806
        %v808 = vrot.slane %v806, 4
        %v809 = vrot.slane %v769, 7
        %v810 = vsel %vm785, %v808, %v809
        %v811 = vrot.slane %v809, 4
        %v812 = vrot.slane %v770, 7
        %v813 = vsel %vm785, %v811, %v812
        %v814 = vrot.slane %v812, 4
        %v815 = vrot.slane %v771, 7
        %v816 = vsel %vm785, %v814, %v815
        %817 = vrot.lane.b32.xlu0 %v789, 40
        %v818 = vpop.permute.xlu0 %817
        %819 = vrot.lane.b32.xlu0 %v792, 40
        %v820 = vpop.permute.xlu0 %819
        %821 = vrot.lane.b32.xlu0 %v795, 40
        %v822 = vpop.permute.xlu0 %821
        %823 = vrot.lane.b32.xlu0 %v798, 40
        %v824 = vpop.permute.xlu0 %823
        %825 = vrot.lane.b32.xlu0 %v801, 40
        %v826 = vpop.permute.xlu0 %825
        %827 = vrot.lane.b32.xlu0 %v804, 40
        %v828 = vpop.permute.xlu0 %827
        %829 = vrot.lane.b32.xlu0 %v807, 40
        %v830 = vpop.permute.xlu0 %829
        %831 = vrot.lane.b32.xlu0 %v810, 40
        %v832 = vpop.permute.xlu0 %831
        %833 = vrot.lane.b32.xlu0 %v813, 40
        %v834 = vpop.permute.xlu0 %833
        %835 = vrot.lane.b32.xlu0 %v816, 40
        %v836 = vpop.permute.xlu0 %835
        %vm847 = vcmask 388416
        %848 = vst.msk [vmem:[#allocation2] sm:$0xf] %vm847, %v818
        %849 = vst.msk [vmem:[#allocation2 + $0x4] sm:$0xf] %vm847, %v820
        %850 = vst.msk [vmem:[#allocation2 + $0x8] sm:$0xf] %vm847, %v822
        %851 = vst.msk [vmem:[#allocation2 + $0xc] sm:$0xf] %vm847, %v824
        %852 = vst.msk [vmem:[#allocation2 + $0x10] sm:$0xf] %vm847, %v826
        %853 = vst.msk [vmem:[#allocation2 + $0x14] sm:$0xf] %vm847, %v828
        %854 = vst.msk [vmem:[#allocation2 + $0x18] sm:$0xf] %vm847, %v830
        %855 = vst.msk [vmem:[#allocation2 + $0x1c] sm:$0xf] %vm847, %v832
        %856 = vst.msk [vmem:[#allocation2 + $0x20] sm:$0xf] %vm847, %v834
        %857 = vst.msk [vmem:[#allocation2 + $0x24] sm:$0xf] %vm847, %v836
        %v858 = vld [vmem:[%s222 + $0x58] sm:$0xc]
        %v859 = vld [vmem:[%s222 + $0x5c] sm:$0xf]
        %v860 = vld [vmem:[%s222 + $0x60] sm:$0xf]
        %v861 = vld [vmem:[%s222 + $0x64] sm:$0xf]
        %v862 = vld [vmem:[%s222 + $0x68] sm:$0xf]
        %v863 = vld [vmem:[%s222 + $0x6c] sm:$0xf]
        %v864 = vld [vmem:[%s222 + $0x70] sm:$0xf]
        %v865 = vld [vmem:[%s222 + $0x74] sm:$0xf]
        %v866 = vld [vmem:[%s222 + $0x78] sm:$0xf]
        %v867 = vld [vmem:[%s222 + $0x7c] sm:$0xf]
        %v868 = vld [vmem:[%s222 + $0x80] sm:$0x7]
        %vm869 = vsmask.f32 1280
        %vm870 = vsmask.f32 5392
        %vm871 = vmor %vm869, %vm870
        %v873 = vshrl.u32 %v858, 16
        %v875 = vrot.slane %v873, 6
        %v876 = vshll.u32 %v858, 16
        %v878 = vrot.slane %v876, 7
        %v879 = vor.u32 %v875, %v878
        %v880 = vrot.slane %v879, 4
        %v882 = vshrl.u32 %v859, 16
        %v884 = vrot.slane %v882, 6
        %v885 = vshll.u32 %v859, 16
        %v887 = vrot.slane %v885, 7
        %v888 = vor.u32 %v884, %v887
        %v889 = vsel %vm871, %v880, %v888
        %v890 = vrot.slane %v888, 4
        %v892 = vshrl.u32 %v860, 16
        %v894 = vrot.slane %v892, 6
        %v895 = vshll.u32 %v860, 16
        %v897 = vrot.slane %v895, 7
        %v898 = vor.u32 %v894, %v897
        %v899 = vsel %vm871, %v890, %v898
        %v900 = vrot.slane %v898, 4
        %v902 = vshrl.u32 %v861, 16
        %v904 = vrot.slane %v902, 6
        %v905 = vshll.u32 %v861, 16
        %v907 = vrot.slane %v905, 7
        %v908 = vor.u32 %v904, %v907
        %v909 = vsel %vm871, %v900, %v908
        %v910 = vrot.slane %v908, 4
        %v912 = vshrl.u32 %v862, 16
        %v914 = vrot.slane %v912, 6
        %v915 = vshll.u32 %v862, 16
        %v917 = vrot.slane %v915, 7
        %v918 = vor.u32 %v914, %v917
        %v919 = vsel %vm871, %v910, %v918
        %v920 = vrot.slane %v918, 4
        %v922 = vshrl.u32 %v863, 16
        %v924 = vrot.slane %v922, 6
        %v925 = vshll.u32 %v863, 16
        %v927 = vrot.slane %v925, 7
        %v928 = vor.u32 %v924, %v927
        %v929 = vsel %vm871, %v920, %v928
        %v930 = vrot.slane %v928, 4
        %v932 = vshrl.u32 %v864, 16
        %v934 = vrot.slane %v932, 6
        %v935 = vshll.u32 %v864, 16
        %v937 = vrot.slane %v935, 7
        %v938 = vor.u32 %v934, %v937
        %v939 = vsel %vm871, %v930, %v938
        %v940 = vrot.slane %v938, 4
        %v942 = vshrl.u32 %v865, 16
        %v944 = vrot.slane %v942, 6
        %v945 = vshll.u32 %v865, 16
        %v947 = vrot.slane %v945, 7
        %v948 = vor.u32 %v944, %v947
        %v949 = vsel %vm871, %v940, %v948
        %v950 = vrot.slane %v948, 4
        %v952 = vshrl.u32 %v866, 16
        %v954 = vrot.slane %v952, 6
        %v955 = vshll.u32 %v866, 16
        %v957 = vrot.slane %v955, 7
        %v958 = vor.u32 %v954, %v957
        %v959 = vsel %vm871, %v950, %v958
        %v960 = vrot.slane %v958, 4
        %v962 = vshrl.u32 %v867, 16
        %v964 = vrot.slane %v962, 6
        %v965 = vshll.u32 %v867, 16
        %v967 = vrot.slane %v965, 7
        %v968 = vor.u32 %v964, %v967
        %v969 = vsel %vm871, %v960, %v968
        %v970 = vrot.slane %v968, 4
        %v972 = vshrl.u32 %v868, 16
        %v974 = vrot.slane %v972, 6
        %v975 = vshll.u32 %v868, 16
        %v977 = vrot.slane %v975, 7
        %v978 = vor.u32 %v974, %v977
        %v979 = vsel %vm871, %v970, %v978
        %980 = vrot.lane.b32.xlu0 %v889, 48
        %v981 = vpop.permute.xlu0 %980
        %982 = vrot.lane.b32.xlu0 %v899, 48
        %v983 = vpop.permute.xlu0 %982
        %984 = vrot.lane.b32.xlu0 %v909, 48
        %v985 = vpop.permute.xlu0 %984
        %986 = vrot.lane.b32.xlu0 %v919, 48
        %v987 = vpop.permute.xlu0 %986
        %988 = vrot.lane.b32.xlu0 %v929, 48
        %v989 = vpop.permute.xlu0 %988
        %990 = vrot.lane.b32.xlu0 %v939, 48
        %v991 = vpop.permute.xlu0 %990
        %992 = vrot.lane.b32.xlu0 %v949, 48
        %v993 = vpop.permute.xlu0 %992
        %994 = vrot.lane.b32.xlu0 %v959, 48
        %v995 = vpop.permute.xlu0 %994
        %996 = vrot.lane.b32.xlu0 %v969, 48
        %v997 = vpop.permute.xlu0 %996
        %998 = vrot.lane.b32.xlu0 %v979, 48
        %v999 = vpop.permute.xlu0 %998
        %vm1010 = vcmask 454016
        %1011 = vst.msk [vmem:[#allocation2] sm:$0xf] %vm1010, %v981
        %1012 = vst.msk [vmem:[#allocation2 + $0x4] sm:$0xf] %vm1010, %v983
        %1013 = vst.msk [vmem:[#allocation2 + $0x8] sm:$0xf] %vm1010, %v985
        %1014 = vst.msk [vmem:[#allocation2 + $0xc] sm:$0xf] %vm1010, %v987
        %1015 = vst.msk [vmem:[#allocation2 + $0x10] sm:$0xf] %vm1010, %v989
        %1016 = vst.msk [vmem:[#allocation2 + $0x14] sm:$0xf] %vm1010, %v991
        %1017 = vst.msk [vmem:[#allocation2 + $0x18] sm:$0xf] %vm1010, %v993
        %1018 = vst.msk [vmem:[#allocation2 + $0x1c] sm:$0xf] %vm1010, %v995
        %1019 = vst.msk [vmem:[#allocation2 + $0x20] sm:$0xf] %vm1010, %v997
        %1020 = vst.msk [vmem:[#allocation2 + $0x24] sm:$0xf] %vm1010, %v999
        %v1021 = vld [vmem:[%s222 + $0x84] sm:$0x8]
        %v1022 = vld [vmem:[%s222 + $0x88] sm:$0xf]
        %v1023 = vld [vmem:[%s222 + $0x8c] sm:$0xf]
        %v1024 = vld [vmem:[%s222 + $0x90] sm:$0xf]
        %v1025 = vld [vmem:[%s222 + $0x94] sm:$0xf]
        %v1026 = vld [vmem:[%s222 + $0x98] sm:$0xf]
        %v1027 = vld [vmem:[%s222 + $0x9c] sm:$0xf]
        %v1028 = vld [vmem:[%s222 + $0xa0] sm:$0xf]
        %v1029 = vld [vmem:[%s222 + $0xa4] sm:$0xf]
        %v1030 = vld [vmem:[%s222 + $0xa8] sm:$0xf]
        %v1031 = vld [vmem:[%s222 + $0xac] sm:$0xf]
        %vm1032 = vsmask.f32 256
        %vm1033 = vsmask.f32 4368
        %vm1034 = vmor %vm1032, %vm1033
        %v1036 = vshrl.u32 %v1021, 16
        %v1038 = vrot.slane %v1036, 7
        %v1039 = vrot.slane %v1038, 4
        %v1041 = vshrl.u32 %v1022, 16
        %v1043 = vrot.slane %v1041, 7
        %v1044 = vshll.u32 %v1022, 16
        %v1046 = vor.u32 %v1043, %v1044
        %v1047 = vsel %vm1034, %v1039, %v1046
        %v1048 = vrot.slane %v1043, 4
        %v1050 = vshrl.u32 %v1023, 16
        %v1052 = vrot.slane %v1050, 7
        %v1053 = vshll.u32 %v1023, 16
        %v1055 = vor.u32 %v1052, %v1053
        %v1056 = vsel %vm1034, %v1048, %v1055
        %v1057 = vrot.slane %v1052, 4
        %v1059 = vshrl.u32 %v1024, 16
        %v1061 = vrot.slane %v1059, 7
        %v1062 = vshll.u32 %v1024, 16
        %v1064 = vor.u32 %v1061, %v1062
        %v1065 = vsel %vm1034, %v1057, %v1064
        %v1066 = vrot.slane %v1061, 4
        %v1068 = vshrl.u32 %v1025, 16
        %v1070 = vrot.slane %v1068, 7
        %v1071 = vshll.u32 %v1025, 16
        %v1073 = vor.u32 %v1070, %v1071
        %v1074 = vsel %vm1034, %v1066, %v1073
        %v1075 = vrot.slane %v1070, 4
        %v1077 = vshrl.u32 %v1026, 16
        %v1079 = vrot.slane %v1077, 7
        %v1080 = vshll.u32 %v1026, 16
        %v1082 = vor.u32 %v1079, %v1080
        %v1083 = vsel %vm1034, %v1075, %v1082
        %v1084 = vrot.slane %v1079, 4
        %v1086 = vshrl.u32 %v1027, 16
        %v1088 = vrot.slane %v1086, 7
        %v1089 = vshll.u32 %v1027, 16
        %v1091 = vor.u32 %v1088, %v1089
        %v1092 = vsel %vm1034, %v1084, %v1091
        %v1093 = vrot.slane %v1088, 4
        %v1095 = vshrl.u32 %v1028, 16
        %v1097 = vrot.slane %v1095, 7
        %v1098 = vshll.u32 %v1028, 16
        %v1100 = vor.u32 %v1097, %v1098
        %v1101 = vsel %vm1034, %v1093, %v1100
        %v1102 = vrot.slane %v1097, 4
        %v1104 = vshrl.u32 %v1029, 16
        %v1106 = vrot.slane %v1104, 7
        %v1107 = vshll.u32 %v1029, 16
        %v1109 = vor.u32 %v1106, %v1107
        %v1110 = vsel %vm1034, %v1102, %v1109
        %v1111 = vrot.slane %v1106, 4
        %v1113 = vshrl.u32 %v1030, 16
        %v1115 = vrot.slane %v1113, 7
        %v1116 = vshll.u32 %v1030, 16
        %v1118 = vor.u32 %v1115, %v1116
        %v1119 = vsel %vm1034, %v1111, %v1118
        %v1120 = vrot.slane %v1115, 4
        %v1122 = vshrl.u32 %v1031, 16
        %v1124 = vrot.slane %v1122, 7
        %v1125 = vshll.u32 %v1031, 16
        %v1127 = vor.u32 %v1124, %v1125
        %v1128 = vsel %vm1034, %v1120, %v1127
        %1129 = vrot.lane.b32.xlu0 %v1047, 56
        %v1130 = vpop.permute.xlu0 %1129
        %1131 = vrot.lane.b32.xlu0 %v1056, 56
        %v1132 = vpop.permute.xlu0 %1131
        %1133 = vrot.lane.b32.xlu0 %v1065, 56
        %v1134 = vpop.permute.xlu0 %1133
        %1135 = vrot.lane.b32.xlu0 %v1074, 56
        %v1136 = vpop.permute.xlu0 %1135
        %1137 = vrot.lane.b32.xlu0 %v1083, 56
        %v1138 = vpop.permute.xlu0 %1137
        %1139 = vrot.lane.b32.xlu0 %v1092, 56
        %v1140 = vpop.permute.xlu0 %1139
        %1141 = vrot.lane.b32.xlu0 %v1101, 56
        %v1142 = vpop.permute.xlu0 %1141
        %1143 = vrot.lane.b32.xlu0 %v1110, 56
        %v1144 = vpop.permute.xlu0 %1143
        %1145 = vrot.lane.b32.xlu0 %v1119, 56
        %v1146 = vpop.permute.xlu0 %1145
        %1147 = vrot.lane.b32.xlu0 %v1128, 56
        %v1148 = vpop.permute.xlu0 %1147
        %vm1159 = vcmask 519616
        %1160 = vst.msk [vmem:[#allocation2] sm:$0xf] %vm1159, %v1130
        %1161 = vst.msk [vmem:[#allocation2 + $0x4] sm:$0xf] %vm1159, %v1132
        %1162 = vst.msk [vmem:[#allocation2 + $0x8] sm:$0xf] %vm1159, %v1134
        %1163 = vst.msk [vmem:[#allocation2 + $0xc] sm:$0xf] %vm1159, %v1136
        %1164 = vst.msk [vmem:[#allocation2 + $0x10] sm:$0xf] %vm1159, %v1138
        %1165 = vst.msk [vmem:[#allocation2 + $0x14] sm:$0xf] %vm1159, %v1140
        %1166 = vst.msk [vmem:[#allocation2 + $0x18] sm:$0xf] %vm1159, %v1142
        %1167 = vst.msk [vmem:[#allocation2 + $0x1c] sm:$0xf] %vm1159, %v1144
        %1168 = vst.msk [vmem:[#allocation2 + $0x20] sm:$0xf] %vm1159, %v1146
        %1169 = vst.msk [vmem:[#allocation2 + $0x24] sm:$0xf] %vm1159, %v1148
        %v1170 = vld [vmem:[%s222 + $0x4] sm:$0xf]
        %v1171 = vld [vmem:[%s222 + $0x8] sm:$0xf]
        %v1172 = vld [vmem:[%s222 + $0xc] sm:$0xf]
        %v1173 = vld [vmem:[%s222 + $0x10] sm:$0xf]
        %v1174 = vld [vmem:[%s222 + $0x14] sm:$0xf]
        %v1175 = vld [vmem:[%s222 + $0x18] sm:$0xf]
        %v1176 = vld [vmem:[%s222 + $0x1c] sm:$0xf]
        %v1177 = vld [vmem:[%s222 + $0x20] sm:$0xf]
        %v1178 = vld [vmem:[%s222 + $0x24] sm:$0xf]
        %v1179 = vld [vmem:[%s222 + $0x28] sm:$0xf]
        %v1180 = vld [vmem:[%s222 + $0x2c] sm:$0x1]
        %v1182 = vshrl.u32 %v1170, 16
        %v1184 = vrot.slane %v1182, 4
        %v1185 = vshll.u32 %v1170, 16
        %v1187 = vrot.slane %v1185, 5
        %v1188 = vor.u32 %v1184, %v1187
        %v1189 = vrot.slane %v1188, 4
        %v1191 = vshll.u32 %v1171, 16
        %v1193 = vrot.slane %v1191, 5
        %v1194 = vsel %vm355, %v1189, %v1193
        %v1195 = vshrl.u32 %v1171, 16
        %v1197 = vrot.slane %v1195, 4
        %v1198 = vor.u32 %v1197, %v1193
        %v1199 = vrot.slane %v1198, 4
        %v1201 = vshll.u32 %v1172, 16
        %v1203 = vrot.slane %v1201, 5
        %v1204 = vsel %vm355, %v1199, %v1203
        %v1205 = vshrl.u32 %v1172, 16
        %v1207 = vrot.slane %v1205, 4
        %v1208 = vor.u32 %v1207, %v1203
        %v1209 = vrot.slane %v1208, 4
        %v1211 = vshll.u32 %v1173, 16
        %v1213 = vrot.slane %v1211, 5
        %v1214 = vsel %vm355, %v1209, %v1213
        %v1215 = vshrl.u32 %v1173, 16
        %v1217 = vrot.slane %v1215, 4
        %v1218 = vor.u32 %v1217, %v1213
        %v1219 = vrot.slane %v1218, 4
        %v1221 = vshll.u32 %v1174, 16
        %v1223 = vrot.slane %v1221, 5
        %v1224 = vsel %vm355, %v1219, %v1223
        %v1225 = vshrl.u32 %v1174, 16
        %v1227 = vrot.slane %v1225, 4
        %v1228 = vor.u32 %v1227, %v1223
        %v1229 = vrot.slane %v1228, 4
        %v1231 = vshll.u32 %v1175, 16
        %v1233 = vrot.slane %v1231, 5
        %v1234 = vsel %vm355, %v1229, %v1233
        %v1235 = vshrl.u32 %v1175, 16
        %v1237 = vrot.slane %v1235, 4
        %v1238 = vor.u32 %v1237, %v1233
        %v1239 = vrot.slane %v1238, 4
        %v1241 = vshll.u32 %v1176, 16
        %v1243 = vrot.slane %v1241, 5
        %v1244 = vsel %vm355, %v1239, %v1243
        %v1245 = vshrl.u32 %v1176, 16
        %v1247 = vrot.slane %v1245, 4
        %v1248 = vor.u32 %v1247, %v1243
        %v1249 = vrot.slane %v1248, 4
        %v1251 = vshll.u32 %v1177, 16
        %v1253 = vrot.slane %v1251, 5
        %v1254 = vsel %vm355, %v1249, %v1253
        %v1255 = vshrl.u32 %v1177, 16
        %v1257 = vrot.slane %v1255, 4
        %v1258 = vor.u32 %v1257, %v1253
        %v1259 = vrot.slane %v1258, 4
        %v1261 = vshll.u32 %v1178, 16
        %v1263 = vrot.slane %v1261, 5
        %v1264 = vsel %vm355, %v1259, %v1263
        %v1265 = vshrl.u32 %v1178, 16
        %v1267 = vrot.slane %v1265, 4
        %v1268 = vor.u32 %v1267, %v1263
        %v1269 = vrot.slane %v1268, 4
        %v1271 = vshll.u32 %v1179, 16
        %v1273 = vrot.slane %v1271, 5
        %v1274 = vsel %vm355, %v1269, %v1273
        %v1275 = vshrl.u32 %v1179, 16
        %v1277 = vrot.slane %v1275, 4
        %v1278 = vor.u32 %v1277, %v1273
        %v1279 = vrot.slane %v1278, 4
        %v1281 = vshll.u32 %v1180, 16
        %v1283 = vrot.slane %v1281, 5
        %v1284 = vsel %vm355, %v1279, %v1283
        %1285 = vrot.lane.b32.xlu0 %v1194, 64
        %v1286 = vpop.permute.xlu0 %1285
        %1287 = vrot.lane.b32.xlu0 %v1204, 64
        %v1288 = vpop.permute.xlu0 %1287
        %1289 = vrot.lane.b32.xlu0 %v1214, 64
        %v1290 = vpop.permute.xlu0 %1289
        %1291 = vrot.lane.b32.xlu0 %v1224, 64
        %v1292 = vpop.permute.xlu0 %1291
        %1293 = vrot.lane.b32.xlu0 %v1234, 64
        %v1294 = vpop.permute.xlu0 %1293
        %1295 = vrot.lane.b32.xlu0 %v1244, 64
        %v1296 = vpop.permute.xlu0 %1295
        %1297 = vrot.lane.b32.xlu0 %v1254, 64
        %v1298 = vpop.permute.xlu0 %1297
        %1299 = vrot.lane.b32.xlu0 %v1264, 64
        %v1300 = vpop.permute.xlu0 %1299
        %1301 = vrot.lane.b32.xlu0 %v1274, 64
        %v1302 = vpop.permute.xlu0 %1301
        %1303 = vrot.lane.b32.xlu0 %v1284, 64
        %v1304 = vpop.permute.xlu0 %1303
        %vm1315 = vcmask 585216
        %1316 = vst.msk [vmem:[#allocation2] sm:$0xf] %vm1315, %v1286
        %1317 = vst.msk [vmem:[#allocation2 + $0x4] sm:$0xf] %vm1315, %v1288
        %1318 = vst.msk [vmem:[#allocation2 + $0x8] sm:$0xf] %vm1315, %v1290
        %1319 = vst.msk [vmem:[#allocation2 + $0xc] sm:$0xf] %vm1315, %v1292
        %1320 = vst.msk [vmem:[#allocation2 + $0x10] sm:$0xf] %vm1315, %v1294
        %1321 = vst.msk [vmem:[#allocation2 + $0x14] sm:$0xf] %vm1315, %v1296
        %1322 = vst.msk [vmem:[#allocation2 + $0x18] sm:$0xf] %vm1315, %v1298
        %1323 = vst.msk [vmem:[#allocation2 + $0x1c] sm:$0xf] %vm1315, %v1300
        %1324 = vst.msk [vmem:[#allocation2 + $0x20] sm:$0xf] %vm1315, %v1302
        %1325 = vst.msk [vmem:[#allocation2 + $0x24] sm:$0xf] %vm1315, %v1304
        %v1326 = vld [vmem:[%s222 + $0x30] sm:$0xe]
        %v1327 = vld [vmem:[%s222 + $0x34] sm:$0xf]
        %v1328 = vld [vmem:[%s222 + $0x38] sm:$0xf]
        %v1329 = vld [vmem:[%s222 + $0x3c] sm:$0xf]
        %v1330 = vld [vmem:[%s222 + $0x40] sm:$0xf]
        %v1331 = vld [vmem:[%s222 + $0x44] sm:$0xf]
        %v1332 = vld [vmem:[%s222 + $0x48] sm:$0xf]
        %v1333 = vld [vmem:[%s222 + $0x4c] sm:$0xf]
        %v1334 = vld [vmem:[%s222 + $0x50] sm:$0xf]
        %v1335 = vld [vmem:[%s222 + $0x54] sm:$0xf]
        %v1336 = vld [vmem:[%s222 + $0x58] sm:$0x3]
        %v1338 = vshrl.u32 %v1326, 16
        %v1340 = vrot.slane %v1338, 5
        %v1341 = vshll.u32 %v1326, 16
        %v1343 = vrot.slane %v1341, 6
        %v1344 = vor.u32 %v1340, %v1343
        %v1345 = vrot.slane %v1344, 4
        %v1347 = vshrl.u32 %v1327, 16
        %v1349 = vrot.slane %v1347, 5
        %v1350 = vshll.u32 %v1327, 16
        %v1352 = vrot.slane %v1350, 6
        %v1353 = vor.u32 %v1349, %v1352
        %v1354 = vsel %vm514, %v1345, %v1353
        %v1355 = vrot.slane %v1353, 4
        %v1357 = vshrl.u32 %v1328, 16
        %v1359 = vrot.slane %v1357, 5
        %v1360 = vshll.u32 %v1328, 16
        %v1362 = vrot.slane %v1360, 6
        %v1363 = vor.u32 %v1359, %v1362
        %v1364 = vsel %vm514, %v1355, %v1363
        %v1365 = vrot.slane %v1363, 4
        %v1367 = vshrl.u32 %v1329, 16
        %v1369 = vrot.slane %v1367, 5
        %v1370 = vshll.u32 %v1329, 16
        %v1372 = vrot.slane %v1370, 6
        %v1373 = vor.u32 %v1369, %v1372
        %v1374 = vsel %vm514, %v1365, %v1373
        %v1375 = vrot.slane %v1373, 4
        %v1377 = vshrl.u32 %v1330, 16
        %v1379 = vrot.slane %v1377, 5
        %v1380 = vshll.u32 %v1330, 16
        %v1382 = vrot.slane %v1380, 6
        %v1383 = vor.u32 %v1379, %v1382
        %v1384 = vsel %vm514, %v1375, %v1383
        %v1385 = vrot.slane %v1383, 4
        %v1387 = vshrl.u32 %v1331, 16
        %v1389 = vrot.slane %v1387, 5
        %v1390 = vshll.u32 %v1331, 16
        %v1392 = vrot.slane %v1390, 6
        %v1393 = vor.u32 %v1389, %v1392
        %v1394 = vsel %vm514, %v1385, %v1393
        %v1395 = vrot.slane %v1393, 4
        %v1397 = vshrl.u32 %v1332, 16
        %v1399 = vrot.slane %v1397, 5
        %v1400 = vshll.u32 %v1332, 16
        %v1402 = vrot.slane %v1400, 6
        %v1403 = vor.u32 %v1399, %v1402
        %v1404 = vsel %vm514, %v1395, %v1403
        %v1405 = vrot.slane %v1403, 4
        %v1407 = vshrl.u32 %v1333, 16
        %v1409 = vrot.slane %v1407, 5
        %v1410 = vshll.u32 %v1333, 16
        %v1412 = vrot.slane %v1410, 6
        %v1413 = vor.u32 %v1409, %v1412
        %v1414 = vsel %vm514, %v1405, %v1413
        %v1415 = vrot.slane %v1413, 4
        %v1417 = vshrl.u32 %v1334, 16
        %v1419 = vrot.slane %v1417, 5
        %v1420 = vshll.u32 %v1334, 16
        %v1422 = vrot.slane %v1420, 6
        %v1423 = vor.u32 %v1419, %v1422
        %v1424 = vsel %vm514, %v1415, %v1423
        %v1425 = vrot.slane %v1423, 4
        %v1427 = vshrl.u32 %v1335, 16
        %v1429 = vrot.slane %v1427, 5
        %v1430 = vshll.u32 %v1335, 16
        %v1432 = vrot.slane %v1430, 6
        %v1433 = vor.u32 %v1429, %v1432
        %v1434 = vsel %vm514, %v1425, %v1433
        %v1435 = vrot.slane %v1433, 4
        %v1437 = vshrl.u32 %v1336, 16
        %v1439 = vrot.slane %v1437, 5
        %v1440 = vshll.u32 %v1336, 16
        %v1442 = vrot.slane %v1440, 6
        %v1443 = vor.u32 %v1439, %v1442
        %v1444 = vsel %vm514, %v1435, %v1443
        %1445 = vrot.lane.b32.xlu0 %v1354, 72
        %v1446 = vpop.permute.xlu0 %1445
        %1447 = vrot.lane.b32.xlu0 %v1364, 72
        %v1448 = vpop.permute.xlu0 %1447
        %1449 = vrot.lane.b32.xlu0 %v1374, 72
        %v1450 = vpop.permute.xlu0 %1449
        %1451 = vrot.lane.b32.xlu0 %v1384, 72
        %v1452 = vpop.permute.xlu0 %1451
        %1453 = vrot.lane.b32.xlu0 %v1394, 72
        %v1454 = vpop.permute.xlu0 %1453
        %1455 = vrot.lane.b32.xlu0 %v1404, 72
        %v1456 = vpop.permute.xlu0 %1455
        %1457 = vrot.lane.b32.xlu0 %v1414, 72
        %v1458 = vpop.permute.xlu0 %1457
        %1459 = vrot.lane.b32.xlu0 %v1424, 72
        %v1460 = vpop.permute.xlu0 %1459
        %1461 = vrot.lane.b32.xlu0 %v1434, 72
        %v1462 = vpop.permute.xlu0 %1461
        %1463 = vrot.lane.b32.xlu0 %v1444, 72
        %v1464 = vpop.permute.xlu0 %1463
        %vm1475 = vcmask 650816
        %1476 = vst.msk [vmem:[#allocation2] sm:$0xf] %vm1475, %v1446
        %1477 = vst.msk [vmem:[#allocation2 + $0x4] sm:$0xf] %vm1475, %v1448
        %1478 = vst.msk [vmem:[#allocation2 + $0x8] sm:$0xf] %vm1475, %v1450
        %1479 = vst.msk [vmem:[#allocation2 + $0xc] sm:$0xf] %vm1475, %v1452
        %1480 = vst.msk [vmem:[#allocation2 + $0x10] sm:$0xf] %vm1475, %v1454
        %1481 = vst.msk [vmem:[#allocation2 + $0x14] sm:$0xf] %vm1475, %v1456
        %1482 = vst.msk [vmem:[#allocation2 + $0x18] sm:$0xf] %vm1475, %v1458
        %1483 = vst.msk [vmem:[#allocation2 + $0x1c] sm:$0xf] %vm1475, %v1460
        %1484 = vst.msk [vmem:[#allocation2 + $0x20] sm:$0xf] %vm1475, %v1462
        %1485 = vst.msk [vmem:[#allocation2 + $0x24] sm:$0xf] %vm1475, %v1464
        %v1486 = vld [vmem:[%s222 + $0x4] sm:$0xe]
        %v1487 = vld [vmem:[%s222 + $0x8] sm:$0xf]
        %v1488 = vld [vmem:[%s222 + $0xc] sm:$0xf]
        %v1489 = vld [vmem:[%s222 + $0x10] sm:$0xf]
        %v1490 = vld [vmem:[%s222 + $0x14] sm:$0xf]
        %v1491 = vld [vmem:[%s222 + $0x18] sm:$0xf]
        %v1492 = vld [vmem:[%s222 + $0x1c] sm:$0xf]
        %v1493 = vld [vmem:[%s222 + $0x20] sm:$0xf]
        %v1494 = vld [vmem:[%s222 + $0x24] sm:$0xf]
        %v1495 = vld [vmem:[%s222 + $0x28] sm:$0xf]
        %v1496 = vld [vmem:[%s222 + $0x2c] sm:$0x1]
        %v1508 = vrot.slane %v1486, 5
        %v1509 = vrot.slane %v1508, 4
        %v1510 = vrot.slane %v1487, 5
        %v1511 = vsel %vm269, %v1509, %v1510
        %v1512 = vrot.slane %v1510, 4
        %v1513 = vrot.slane %v1488, 5
        %v1514 = vsel %vm269, %v1512, %v1513
        %v1515 = vrot.slane %v1513, 4
        %v1516 = vrot.slane %v1489, 5
        %v1517 = vsel %vm269, %v1515, %v1516
        %v1518 = vrot.slane %v1516, 4
        %v1519 = vrot.slane %v1490, 5
        %v1520 = vsel %vm269, %v1518, %v1519
        %v1521 = vrot.slane %v1519, 4
        %v1522 = vrot.slane %v1491, 5
        %v1523 = vsel %vm269, %v1521, %v1522
        %v1524 = vrot.slane %v1522, 4
        %v1525 = vrot.slane %v1492, 5
        %v1526 = vsel %vm269, %v1524, %v1525
        %v1527 = vrot.slane %v1525, 4
        %v1528 = vrot.slane %v1493, 5
        %v1529 = vsel %vm269, %v1527, %v1528
        %v1530 = vrot.slane %v1528, 4
        %v1531 = vrot.slane %v1494, 5
        %v1532 = vsel %vm269, %v1530, %v1531
        %v1533 = vrot.slane %v1531, 4
        %v1534 = vrot.slane %v1495, 5
        %v1535 = vsel %vm269, %v1533, %v1534
        %v1536 = vrot.slane %v1534, 4
        %v1537 = vrot.slane %v1496, 5
        %v1538 = vsel %vm269, %v1536, %v1537
        %1539 = vrot.lane.b32.xlu0 %v1511, 80
        %v1540 = vpop.permute.xlu0 %1539
        %1541 = vrot.lane.b32.xlu0 %v1514, 80
        %v1542 = vpop.permute.xlu0 %1541
        %1543 = vrot.lane.b32.xlu0 %v1517, 80
        %v1544 = vpop.permute.xlu0 %1543
        %1545 = vrot.lane.b32.xlu0 %v1520, 80
        %v1546 = vpop.permute.xlu0 %1545
        %1547 = vrot.lane.b32.xlu0 %v1523, 80
        %v1548 = vpop.permute.xlu0 %1547
        %1549 = vrot.lane.b32.xlu0 %v1526, 80
        %v1550 = vpop.permute.xlu0 %1549
        %1551 = vrot.lane.b32.xlu0 %v1529, 80
        %v1552 = vpop.permute.xlu0 %1551
        %1553 = vrot.lane.b32.xlu0 %v1532, 80
        %v1554 = vpop.permute.xlu0 %1553
        %1555 = vrot.lane.b32.xlu0 %v1535, 80
        %v1556 = vpop.permute.xlu0 %1555
        %1557 = vrot.lane.b32.xlu0 %v1538, 80
        %v1558 = vpop.permute.xlu0 %1557
        %vm1569 = vcmask 716416
        %1570 = vst.msk [vmem:[#allocation2] sm:$0xf] %vm1569, %v1540
        %1571 = vst.msk [vmem:[#allocation2 + $0x4] sm:$0xf] %vm1569, %v1542
        %1572 = vst.msk [vmem:[#allocation2 + $0x8] sm:$0xf] %vm1569, %v1544
        %1573 = vst.msk [vmem:[#allocation2 + $0xc] sm:$0xf] %vm1569, %v1546
        %1574 = vst.msk [vmem:[#allocation2 + $0x10] sm:$0xf] %vm1569, %v1548
        %1575 = vst.msk [vmem:[#allocation2 + $0x14] sm:$0xf] %vm1569, %v1550
        %1576 = vst.msk [vmem:[#allocation2 + $0x18] sm:$0xf] %vm1569, %v1552
        %1577 = vst.msk [vmem:[#allocation2 + $0x1c] sm:$0xf] %vm1569, %v1554
        %1578 = vst.msk [vmem:[#allocation2 + $0x20] sm:$0xf] %vm1569, %v1556
        %1579 = vst.msk [vmem:[#allocation2 + $0x24] sm:$0xf] %vm1569, %v1558
        %v1580 = vld [vmem:[%s222 + $0x30] sm:$0xc]
        %v1581 = vld [vmem:[%s222 + $0x34] sm:$0xf]
        %v1582 = vld [vmem:[%s222 + $0x38] sm:$0xf]
        %v1583 = vld [vmem:[%s222 + $0x3c] sm:$0xf]
        %v1584 = vld [vmem:[%s222 + $0x40] sm:$0xf]
        %v1585 = vld [vmem:[%s222 + $0x44] sm:$0xf]
        %v1586 = vld [vmem:[%s222 + $0x48] sm:$0xf]
        %v1587 = vld [vmem:[%s222 + $0x4c] sm:$0xf]
        %v1588 = vld [vmem:[%s222 + $0x50] sm:$0xf]
        %v1589 = vld [vmem:[%s222 + $0x54] sm:$0xf]
        %v1590 = vld [vmem:[%s222 + $0x58] sm:$0x3]
        %v1602 = vrot.slane %v1580, 6
        %v1603 = vrot.slane %v1602, 4
        %v1604 = vrot.slane %v1581, 6
        %v1605 = vsel %vm688, %v1603, %v1604
        %v1606 = vrot.slane %v1604, 4
        %v1607 = vrot.slane %v1582, 6
        %v1608 = vsel %vm688, %v1606, %v1607
        %v1609 = vrot.slane %v1607, 4
        %v1610 = vrot.slane %v1583, 6
        %v1611 = vsel %vm688, %v1609, %v1610
        %v1612 = vrot.slane %v1610, 4
        %v1613 = vrot.slane %v1584, 6
        %v1614 = vsel %vm688, %v1612, %v1613
        %v1615 = vrot.slane %v1613, 4
        %v1616 = vrot.slane %v1585, 6
        %v1617 = vsel %vm688, %v1615, %v1616
        %v1618 = vrot.slane %v1616, 4
        %v1619 = vrot.slane %v1586, 6
        %v1620 = vsel %vm688, %v1618, %v1619
        %v1621 = vrot.slane %v1619, 4
        %v1622 = vrot.slane %v1587, 6
        %v1623 = vsel %vm688, %v1621, %v1622
        %v1624 = vrot.slane %v1622, 4
        %v1625 = vrot.slane %v1588, 6
        %v1626 = vsel %vm688, %v1624, %v1625
        %v1627 = vrot.slane %v1625, 4
        %v1628 = vrot.slane %v1589, 6
        %v1629 = vsel %vm688, %v1627, %v1628
        %v1630 = vrot.slane %v1628, 4
        %v1631 = vrot.slane %v1590, 6
        %v1632 = vsel %vm688, %v1630, %v1631
        %1633 = vrot.lane.b32.xlu0 %v1605, 88
        %v1634 = vpop.permute.xlu0 %1633
        %1635 = vrot.lane.b32.xlu0 %v1608, 88
        %v1636 = vpop.permute.xlu0 %1635
        %1637 = vrot.lane.b32.xlu0 %v1611, 88
        %v1638 = vpop.permute.xlu0 %1637
        %1639 = vrot.lane.b32.xlu0 %v1614, 88
        %v1640 = vpop.permute.xlu0 %1639
        %1641 = vrot.lane.b32.xlu0 %v1617, 88
        %v1642 = vpop.permute.xlu0 %1641
        %1643 = vrot.lane.b32.xlu0 %v1620, 88
        %v1644 = vpop.permute.xlu0 %1643
        %1645 = vrot.lane.b32.xlu0 %v1623, 88
        %v1646 = vpop.permute.xlu0 %1645
        %1647 = vrot.lane.b32.xlu0 %v1626, 88
        %v1648 = vpop.permute.xlu0 %1647
        %1649 = vrot.lane.b32.xlu0 %v1629, 88
        %v1650 = vpop.permute.xlu0 %1649
        %1651 = vrot.lane.b32.xlu0 %v1632, 88
        %v1652 = vpop.permute.xlu0 %1651
        %vm1663 = vcmask 782016
        %1664 = vst.msk [vmem:[#allocation2] sm:$0xf] %vm1663, %v1634
        %1665 = vst.msk [vmem:[#allocation2 + $0x4] sm:$0xf] %vm1663, %v1636
        %1666 = vst.msk [vmem:[#allocation2 + $0x8] sm:$0xf] %vm1663, %v1638
        %1667 = vst.msk [vmem:[#allocation2 + $0xc] sm:$0xf] %vm1663, %v1640
        %1668 = vst.msk [vmem:[#allocation2 + $0x10] sm:$0xf] %vm1663, %v1642
        %1669 = vst.msk [vmem:[#allocation2 + $0x14] sm:$0xf] %vm1663, %v1644
        %1670 = vst.msk [vmem:[#allocation2 + $0x18] sm:$0xf] %vm1663, %v1646
        %1671 = vst.msk [vmem:[#allocation2 + $0x1c] sm:$0xf] %vm1663, %v1648
        %1672 = vst.msk [vmem:[#allocation2 + $0x20] sm:$0xf] %vm1663, %v1650
        %1673 = vst.msk [vmem:[#allocation2 + $0x24] sm:$0xf] %vm1663, %v1652
        %v1674 = vld [vmem:[%s222 + $0x5c] sm:$0xc]
        %v1675 = vld [vmem:[%s222 + $0x60] sm:$0xf]
        %v1676 = vld [vmem:[%s222 + $0x64] sm:$0xf]
        %v1677 = vld [vmem:[%s222 + $0x68] sm:$0xf]
        %v1678 = vld [vmem:[%s222 + $0x6c] sm:$0xf]
        %v1679 = vld [vmem:[%s222 + $0x70] sm:$0xf]
        %v1680 = vld [vmem:[%s222 + $0x74] sm:$0xf]
        %v1681 = vld [vmem:[%s222 + $0x78] sm:$0xf]
        %v1682 = vld [vmem:[%s222 + $0x7c] sm:$0xf]
        %v1683 = vld [vmem:[%s222 + $0x80] sm:$0xf]
        %v1684 = vld [vmem:[%s222 + $0x84] sm:$0x7]
        %v1686 = vshrl.u32 %v1674, 16
        %v1688 = vrot.slane %v1686, 6
        %v1689 = vshll.u32 %v1674, 16
        %v1691 = vrot.slane %v1689, 7
        %v1692 = vor.u32 %v1688, %v1691
        %v1693 = vrot.slane %v1692, 4
        %v1695 = vshrl.u32 %v1675, 16
        %v1697 = vrot.slane %v1695, 6
        %v1698 = vshll.u32 %v1675, 16
        %v1700 = vrot.slane %v1698, 7
        %v1701 = vor.u32 %v1697, %v1700
        %v1702 = vsel %vm871, %v1693, %v1701
        %v1703 = vrot.slane %v1701, 4
        %v1705 = vshrl.u32 %v1676, 16
        %v1707 = vrot.slane %v1705, 6
        %v1708 = vshll.u32 %v1676, 16
        %v1710 = vrot.slane %v1708, 7
        %v1711 = vor.u32 %v1707, %v1710
        %v1712 = vsel %vm871, %v1703, %v1711
        %v1713 = vrot.slane %v1711, 4
        %v1715 = vshrl.u32 %v1677, 16
        %v1717 = vrot.slane %v1715, 6
        %v1718 = vshll.u32 %v1677, 16
        %v1720 = vrot.slane %v1718, 7
        %v1721 = vor.u32 %v1717, %v1720
        %v1722 = vsel %vm871, %v1713, %v1721
        %v1723 = vrot.slane %v1721, 4
        %v1725 = vshrl.u32 %v1678, 16
        %v1727 = vrot.slane %v1725, 6
        %v1728 = vshll.u32 %v1678, 16
        %v1730 = vrot.slane %v1728, 7
        %v1731 = vor.u32 %v1727, %v1730
        %v1732 = vsel %vm871, %v1723, %v1731
        %v1733 = vrot.slane %v1731, 4
        %v1735 = vshrl.u32 %v1679, 16
        %v1737 = vrot.slane %v1735, 6
        %v1738 = vshll.u32 %v1679, 16
        %v1740 = vrot.slane %v1738, 7
        %v1741 = vor.u32 %v1737, %v1740
        %v1742 = vsel %vm871, %v1733, %v1741
        %v1743 = vrot.slane %v1741, 4
        %v1745 = vshrl.u32 %v1680, 16
        %v1747 = vrot.slane %v1745, 6
        %v1748 = vshll.u32 %v1680, 16
        %v1750 = vrot.slane %v1748, 7
        %v1751 = vor.u32 %v1747, %v1750
        %v1752 = vsel %vm871, %v1743, %v1751
        %v1753 = vrot.slane %v1751, 4
        %v1755 = vshrl.u32 %v1681, 16
        %v1757 = vrot.slane %v1755, 6
        %v1758 = vshll.u32 %v1681, 16
        %v1760 = vrot.slane %v1758, 7
        %v1761 = vor.u32 %v1757, %v1760
        %v1762 = vsel %vm871, %v1753, %v1761
        %v1763 = vrot.slane %v1761, 4
        %v1765 = vshrl.u32 %v1682, 16
        %v1767 = vrot.slane %v1765, 6
        %v1768 = vshll.u32 %v1682, 16
        %v1770 = vrot.slane %v1768, 7
        %v1771 = vor.u32 %v1767, %v1770
        %v1772 = vsel %vm871, %v1763, %v1771
        %v1773 = vrot.slane %v1771, 4
        %v1775 = vshrl.u32 %v1683, 16
        %v1777 = vrot.slane %v1775, 6
        %v1778 = vshll.u32 %v1683, 16
        %v1780 = vrot.slane %v1778, 7
        %v1781 = vor.u32 %v1777, %v1780
        %v1782 = vsel %vm871, %v1773, %v1781
        %v1783 = vrot.slane %v1781, 4
        %v1785 = vshrl.u32 %v1684, 16
        %v1787 = vrot.slane %v1785, 6
        %v1788 = vshll.u32 %v1684, 16
        %v1790 = vrot.slane %v1788, 7
        %v1791 = vor.u32 %v1787, %v1790
        %v1792 = vsel %vm871, %v1783, %v1791
        %1793 = vrot.lane.b32.xlu0 %v1702, 96
        %v1794 = vpop.permute.xlu0 %1793
        %1795 = vrot.lane.b32.xlu0 %v1712, 96
        %v1796 = vpop.permute.xlu0 %1795
        %1797 = vrot.lane.b32.xlu0 %v1722, 96
        %v1798 = vpop.permute.xlu0 %1797
        %1799 = vrot.lane.b32.xlu0 %v1732, 96
        %v1800 = vpop.permute.xlu0 %1799
        %1801 = vrot.lane.b32.xlu0 %v1742, 96
        %v1802 = vpop.permute.xlu0 %1801
        %1803 = vrot.lane.b32.xlu0 %v1752, 96
        %v1804 = vpop.permute.xlu0 %1803
        %1805 = vrot.lane.b32.xlu0 %v1762, 96
        %v1806 = vpop.permute.xlu0 %1805
        %1807 = vrot.lane.b32.xlu0 %v1772, 96
        %v1808 = vpop.permute.xlu0 %1807
        %1809 = vrot.lane.b32.xlu0 %v1782, 96
        %v1810 = vpop.permute.xlu0 %1809
        %1811 = vrot.lane.b32.xlu0 %v1792, 96
        %v1812 = vpop.permute.xlu0 %1811
        %vm1823 = vcmask 847616
        %1824 = vst.msk [vmem:[#allocation2] sm:$0xf] %vm1823, %v1794
        %1825 = vst.msk [vmem:[#allocation2 + $0x4] sm:$0xf] %vm1823, %v1796
        %1826 = vst.msk [vmem:[#allocation2 + $0x8] sm:$0xf] %vm1823, %v1798
        %1827 = vst.msk [vmem:[#allocation2 + $0xc] sm:$0xf] %vm1823, %v1800
        %1828 = vst.msk [vmem:[#allocation2 + $0x10] sm:$0xf] %vm1823, %v1802
        %1829 = vst.msk [vmem:[#allocation2 + $0x14] sm:$0xf] %vm1823, %v1804
        %1830 = vst.msk [vmem:[#allocation2 + $0x18] sm:$0xf] %vm1823, %v1806
        %1831 = vst.msk [vmem:[#allocation2 + $0x1c] sm:$0xf] %vm1823, %v1808
        %1832 = vst.msk [vmem:[#allocation2 + $0x20] sm:$0xf] %vm1823, %v1810
        %1833 = vst.msk [vmem:[#allocation2 + $0x24] sm:$0xf] %vm1823, %v1812
        %v1834 = vld [vmem:[%s222 + $0x88] sm:$0x8]
        %v1835 = vld [vmem:[%s222 + $0x8c] sm:$0xf]
        %v1836 = vld [vmem:[%s222 + $0x90] sm:$0xf]
        %v1837 = vld [vmem:[%s222 + $0x94] sm:$0xf]
        %v1838 = vld [vmem:[%s222 + $0x98] sm:$0xf]
        %v1839 = vld [vmem:[%s222 + $0x9c] sm:$0xf]
        %v1840 = vld [vmem:[%s222 + $0xa0] sm:$0xf]
        %v1841 = vld [vmem:[%s222 + $0xa4] sm:$0xf]
        %v1842 = vld [vmem:[%s222 + $0xa8] sm:$0xf]
        %v1843 = vld [vmem:[%s222 + $0xac] sm:$0xf]
        %v1844 = vld [vmem:[%s222 + $0xb0] sm:$0xf]
        %v1846 = vshrl.u32 %v1834, 16
        %v1848 = vrot.slane %v1846, 7
        %v1849 = vrot.slane %v1848, 4
        %v1851 = vshrl.u32 %v1835, 16
        %v1853 = vrot.slane %v1851, 7
        %v1854 = vshll.u32 %v1835, 16
        %v1856 = vor.u32 %v1853, %v1854
        %v1857 = vsel %vm1034, %v1849, %v1856
        %v1858 = vrot.slane %v1853, 4
        %v1860 = vshrl.u32 %v1836, 16
        %v1862 = vrot.slane %v1860, 7
        %v1863 = vshll.u32 %v1836, 16
        %v1865 = vor.u32 %v1862, %v1863
        %v1866 = vsel %vm1034, %v1858, %v1865
        %v1867 = vrot.slane %v1862, 4
        %v1869 = vshrl.u32 %v1837, 16
        %v1871 = vrot.slane %v1869, 7
        %v1872 = vshll.u32 %v1837, 16
        %v1874 = vor.u32 %v1871, %v1872
        %v1875 = vsel %vm1034, %v1867, %v1874
        %v1876 = vrot.slane %v1871, 4
        %v1878 = vshrl.u32 %v1838, 16
        %v1880 = vrot.slane %v1878, 7
        %v1881 = vshll.u32 %v1838, 16
        %v1883 = vor.u32 %v1880, %v1881
        %v1884 = vsel %vm1034, %v1876, %v1883
        %v1885 = vrot.slane %v1880, 4
        %v1887 = vshrl.u32 %v1839, 16
        %v1889 = vrot.slane %v1887, 7
        %v1890 = vshll.u32 %v1839, 16
        %v1892 = vor.u32 %v1889, %v1890
        %v1893 = vsel %vm1034, %v1885, %v1892
        %v1894 = vrot.slane %v1889, 4
        %v1896 = vshrl.u32 %v1840, 16
        %v1898 = vrot.slane %v1896, 7
        %v1899 = vshll.u32 %v1840, 16
        %v1901 = vor.u32 %v1898, %v1899
        %v1902 = vsel %vm1034, %v1894, %v1901
        %v1903 = vrot.slane %v1898, 4
        %v1905 = vshrl.u32 %v1841, 16
        %v1907 = vrot.slane %v1905, 7
        %v1908 = vshll.u32 %v1841, 16
        %v1910 = vor.u32 %v1907, %v1908
        %v1911 = vsel %vm1034, %v1903, %v1910
        %v1912 = vrot.slane %v1907, 4
        %v1914 = vshrl.u32 %v1842, 16
        %v1916 = vrot.slane %v1914, 7
        %v1917 = vshll.u32 %v1842, 16
        %v1919 = vor.u32 %v1916, %v1917
        %v1920 = vsel %vm1034, %v1912, %v1919
        %v1921 = vrot.slane %v1916, 4
        %v1923 = vshrl.u32 %v1843, 16
        %v1925 = vrot.slane %v1923, 7
        %v1926 = vshll.u32 %v1843, 16
        %v1928 = vor.u32 %v1925, %v1926
        %v1929 = vsel %vm1034, %v1921, %v1928
        %v1930 = vrot.slane %v1925, 4
        %v1932 = vshrl.u32 %v1844, 16
        %v1934 = vrot.slane %v1932, 7
        %v1935 = vshll.u32 %v1844, 16
        %v1937 = vor.u32 %v1934, %v1935
        %v1938 = vsel %vm1034, %v1930, %v1937
        %1939 = vrot.lane.b32.xlu0 %v1857, 104
        %v1940 = vpop.permute.xlu0 %1939
        %1941 = vrot.lane.b32.xlu0 %v1866, 104
        %v1942 = vpop.permute.xlu0 %1941
        %1943 = vrot.lane.b32.xlu0 %v1875, 104
        %v1944 = vpop.permute.xlu0 %1943
        %1945 = vrot.lane.b32.xlu0 %v1884, 104
        %v1946 = vpop.permute.xlu0 %1945
        %1947 = vrot.lane.b32.xlu0 %v1893, 104
        %v1948 = vpop.permute.xlu0 %1947
        %1949 = vrot.lane.b32.xlu0 %v1902, 104
        %v1950 = vpop.permute.xlu0 %1949
        %1951 = vrot.lane.b32.xlu0 %v1911, 104
        %v1952 = vpop.permute.xlu0 %1951
        %1953 = vrot.lane.b32.xlu0 %v1920, 104
        %v1954 = vpop.permute.xlu0 %1953
        %1955 = vrot.lane.b32.xlu0 %v1929, 104
        %v1956 = vpop.permute.xlu0 %1955
        %1957 = vrot.lane.b32.xlu0 %v1938, 104
        %v1958 = vpop.permute.xlu0 %1957
        %vm1969 = vcmask 913216
        %1970 = vst.msk [vmem:[#allocation2] sm:$0xf] %vm1969, %v1940
        %1971 = vst.msk [vmem:[#allocation2 + $0x4] sm:$0xf] %vm1969, %v1942
        %1972 = vst.msk [vmem:[#allocation2 + $0x8] sm:$0xf] %vm1969, %v1944
        %1973 = vst.msk [vmem:[#allocation2 + $0xc] sm:$0xf] %vm1969, %v1946
        %1974 = vst.msk [vmem:[#allocation2 + $0x10] sm:$0xf] %vm1969, %v1948
        %1975 = vst.msk [vmem:[#allocation2 + $0x14] sm:$0xf] %vm1969, %v1950
        %1976 = vst.msk [vmem:[#allocation2 + $0x18] sm:$0xf] %vm1969, %v1952
        %1977 = vst.msk [vmem:[#allocation2 + $0x1c] sm:$0xf] %vm1969, %v1954
        %1978 = vst.msk [vmem:[#allocation2 + $0x20] sm:$0xf] %vm1969, %v1956
        %1979 = vst.msk [vmem:[#allocation2 + $0x24] sm:$0xf] %vm1969, %v1958
        %v1980 = vld [vmem:[%s222 + $0x5c] sm:$0x8]
        %v1981 = vld [vmem:[%s222 + $0x60] sm:$0xf]
        %v1982 = vld [vmem:[%s222 + $0x64] sm:$0xf]
        %v1983 = vld [vmem:[%s222 + $0x68] sm:$0xf]
        %v1984 = vld [vmem:[%s222 + $0x6c] sm:$0xf]
        %v1985 = vld [vmem:[%s222 + $0x70] sm:$0xf]
        %v1986 = vld [vmem:[%s222 + $0x74] sm:$0xf]
        %v1987 = vld [vmem:[%s222 + $0x78] sm:$0xf]
        %v1988 = vld [vmem:[%s222 + $0x7c] sm:$0xf]
        %v1989 = vld [vmem:[%s222 + $0x80] sm:$0xf]
        %v1990 = vld [vmem:[%s222 + $0x84] sm:$0x7]
        %v2002 = vrot.slane %v1980, 7
        %v2003 = vrot.slane %v2002, 4
        %v2004 = vrot.slane %v1981, 7
        %v2005 = vsel %vm785, %v2003, %v2004
        %v2006 = vrot.slane %v2004, 4
        %v2007 = vrot.slane %v1982, 7
        %v2008 = vsel %vm785, %v2006, %v2007
        %v2009 = vrot.slane %v2007, 4
        %v2010 = vrot.slane %v1983, 7
        %v2011 = vsel %vm785, %v2009, %v2010
        %v2012 = vrot.slane %v2010, 4
        %v2013 = vrot.slane %v1984, 7
        %v2014 = vsel %vm785, %v2012, %v2013
        %v2015 = vrot.slane %v2013, 4
        %v2016 = vrot.slane %v1985, 7
        %v2017 = vsel %vm785, %v2015, %v2016
        %v2018 = vrot.slane %v2016, 4
        %v2019 = vrot.slane %v1986, 7
        %v2020 = vsel %vm785, %v2018, %v2019
        %v2021 = vrot.slane %v2019, 4
        %v2022 = vrot.slane %v1987, 7
        %v2023 = vsel %vm785, %v2021, %v2022
        %v2024 = vrot.slane %v2022, 4
        %v2025 = vrot.slane %v1988, 7
        %v2026 = vsel %vm785, %v2024, %v2025
        %v2027 = vrot.slane %v2025, 4
        %v2028 = vrot.slane %v1989, 7
        %v2029 = vsel %vm785, %v2027, %v2028
        %v2030 = vrot.slane %v2028, 4
        %v2031 = vrot.slane %v1990, 7
        %v2032 = vsel %vm785, %v2030, %v2031
        %2033 = vrot.lane.b32.xlu0 %v2005, 112
        %v2034 = vpop.permute.xlu0 %2033
        %2035 = vrot.lane.b32.xlu0 %v2008, 112
        %v2036 = vpop.permute.xlu0 %2035
        %2037 = vrot.lane.b32.xlu0 %v2011, 112
        %v2038 = vpop.permute.xlu0 %2037
        %2039 = vrot.lane.b32.xlu0 %v2014, 112
        %v2040 = vpop.permute.xlu0 %2039
        %2041 = vrot.lane.b32.xlu0 %v2017, 112
        %v2042 = vpop.permute.xlu0 %2041
        %2043 = vrot.lane.b32.xlu0 %v2020, 112
        %v2044 = vpop.permute.xlu0 %2043
        %2045 = vrot.lane.b32.xlu0 %v2023, 112
        %v2046 = vpop.permute.xlu0 %2045
        %2047 = vrot.lane.b32.xlu0 %v2026, 112
        %v2048 = vpop.permute.xlu0 %2047
        %2049 = vrot.lane.b32.xlu0 %v2029, 112
        %v2050 = vpop.permute.xlu0 %2049
        %2051 = vrot.lane.b32.xlu0 %v2032, 112
        %v2052 = vpop.permute.xlu0 %2051
        %vm2063 = vcmask 978816
        %2064 = vst.msk [vmem:[#allocation2] sm:$0xf] %vm2063, %v2034
        %2065 = vst.msk [vmem:[#allocation2 + $0x4] sm:$0xf] %vm2063, %v2036
        %2066 = vst.msk [vmem:[#allocation2 + $0x8] sm:$0xf] %vm2063, %v2038
        %2067 = vst.msk [vmem:[#allocation2 + $0xc] sm:$0xf] %vm2063, %v2040
        %2068 = vst.msk [vmem:[#allocation2 + $0x10] sm:$0xf] %vm2063, %v2042
        %2069 = vst.msk [vmem:[#allocation2 + $0x14] sm:$0xf] %vm2063, %v2044
        %2070 = vst.msk [vmem:[#allocation2 + $0x18] sm:$0xf] %vm2063, %v2046
        %2071 = vst.msk [vmem:[#allocation2 + $0x1c] sm:$0xf] %vm2063, %v2048
        %2072 = vst.msk [vmem:[#allocation2 + $0x20] sm:$0xf] %vm2063, %v2050
        %2073 = vst.msk [vmem:[#allocation2 + $0x24] sm:$0xf] %vm2063, %v2052
        %v2074 = vld [vmem:[%s222 + $0x8c] sm:$0xf]
        %v2075 = vld [vmem:[%s222 + $0x90] sm:$0xf]
        %v2076 = vld [vmem:[%s222 + $0x94] sm:$0xf]
        %v2077 = vld [vmem:[%s222 + $0x98] sm:$0xf]
        %v2078 = vld [vmem:[%s222 + $0x9c] sm:$0xf]
        %v2079 = vld [vmem:[%s222 + $0xa0] sm:$0xf]
        %v2080 = vld [vmem:[%s222 + $0xa4] sm:$0xf]
        %v2081 = vld [vmem:[%s222 + $0xa8] sm:$0xf]
        %v2082 = vld [vmem:[%s222 + $0xac] sm:$0xf]
        %v2083 = vld [vmem:[%s222 + $0xb0] sm:$0xf]
        %2094 = vrot.lane.b32.xlu0 %v2074, 120
        %v2095 = vpop.permute.xlu0 %2094
        %2096 = vrot.lane.b32.xlu0 %v2075, 120
        %v2097 = vpop.permute.xlu0 %2096
        %2098 = vrot.lane.b32.xlu0 %v2076, 120
        %v2099 = vpop.permute.xlu0 %2098
        %2100 = vrot.lane.b32.xlu0 %v2077, 120
        %v2101 = vpop.permute.xlu0 %2100
        %2102 = vrot.lane.b32.xlu0 %v2078, 120
        %v2103 = vpop.permute.xlu0 %2102
        %2104 = vrot.lane.b32.xlu0 %v2079, 120
        %v2105 = vpop.permute.xlu0 %2104
        %2106 = vrot.lane.b32.xlu0 %v2080, 120
        %v2107 = vpop.permute.xlu0 %2106
        %2108 = vrot.lane.b32.xlu0 %v2081, 120
        %v2109 = vpop.permute.xlu0 %2108
        %2110 = vrot.lane.b32.xlu0 %v2082, 120
        %v2111 = vpop.permute.xlu0 %2110
        %2112 = vrot.lane.b32.xlu0 %v2083, 120
        %v2113 = vpop.permute.xlu0 %2112
        %vm2124 = vcmask 1044416
        %2125 = vst.msk [vmem:[#allocation2] sm:$0xf] %vm2124, %v2095
        %2126 = vst.msk [vmem:[#allocation2 + $0x4] sm:$0xf] %vm2124, %v2097
        %2127 = vst.msk [vmem:[#allocation2 + $0x8] sm:$0xf] %vm2124, %v2099
        %2128 = vst.msk [vmem:[#allocation2 + $0xc] sm:$0xf] %vm2124, %v2101
        %2129 = vst.msk [vmem:[#allocation2 + $0x10] sm:$0xf] %vm2124, %v2103
        %2130 = vst.msk [vmem:[#allocation2 + $0x14] sm:$0xf] %vm2124, %v2105
        %2131 = vst.msk [vmem:[#allocation2 + $0x18] sm:$0xf] %vm2124, %v2107
        %2132 = vst.msk [vmem:[#allocation2 + $0x1c] sm:$0xf] %vm2124, %v2109
        %2133 = vst.msk [vmem:[#allocation2 + $0x20] sm:$0xf] %vm2124, %v2111
        %2134 = vst.msk [vmem:[#allocation2 + $0x24] sm:$0xf] %vm2124, %v2113
        %v2135 = vld [vmem:[#allocation2] sm:$0xf]
        %v2136 = vld [vmem:[#allocation2 + $0x4] sm:$0xf]
        %v2137 = vld [vmem:[#allocation2 + $0x8] sm:$0xf]
        %v2138 = vld [vmem:[#allocation2 + $0xc] sm:$0xf]
        %v2139 = vld [vmem:[#allocation2 + $0x10] sm:$0xf]
        %v2140 = vld [vmem:[#allocation2 + $0x14] sm:$0xf]
        %v2141 = vld [vmem:[#allocation2 + $0x18] sm:$0xf]
        %v2142 = vld [vmem:[#allocation2 + $0x1c] sm:$0xf]
        %v2143 = vld [vmem:[#allocation2 + $0x20] sm:$0xf]
        %v2144 = vld [vmem:[#allocation2 + $0x24] sm:$0xf]
        %v2145 = vld [vmem:[%s1] sm:$0xf]
        %v2146 = vld [vmem:[%s1 + $0x4] sm:$0xf]
        %v2147 = vld [vmem:[%s1 + $0x8] sm:$0xf]
        %v2148 = vld [vmem:[%s1 + $0xc] sm:$0xf]
        %v2149 = vld [vmem:[%s1 + $0x10] sm:$0xf]
        %v2150 = vld [vmem:[%s1 + $0x14] sm:$0xf]
        %v2151 = vld [vmem:[%s1 + $0x18] sm:$0xf]
        %v2152 = vld [vmem:[%s1 + $0x1c] sm:$0xf]
        %v2153 = vld [vmem:[%s1 + $0x20] sm:$0xf]
        %v2154 = vld [vmem:[%s1 + $0x24] sm:$0xf]
        %v2155 = vld [vmem:[%s1 + $0x28] sm:$0xf]
        %v2156 = vld [vmem:[%s1 + $0x2c] sm:$0xf]
        %v2157 = vld [vmem:[%s1 + $0x30] sm:$0xf]
        %v2158 = vld [vmem:[%s1 + $0x34] sm:$0xf]
        %v2159 = vld [vmem:[%s1 + $0x38] sm:$0xf]
        %v2160 = vld [vmem:[%s1 + $0x3c] sm:$0xf]
        %v2171 = vunpack.c.l.b16 %v2135
        %v2172 = vunpack.c.l.b16 %v2136
        %v2173 = vunpack.c.l.b16 %v2137
        %v2174 = vunpack.c.l.b16 %v2138
        %v2175 = vunpack.c.l.b16 %v2139
        %v2176 = vunpack.c.l.b16 %v2140
        %v2177 = vunpack.c.l.b16 %v2141
        %v2178 = vunpack.c.l.b16 %v2142
        %v2179 = vunpack.c.l.b16 %v2143
        %v2180 = vunpack.c.l.b16 %v2144
        %v2181 = vpack.c.b16 %v2172, %v2171
        %v2182 = vpack.c.b16 %v2174, %v2173
        %v2183 = vpack.c.b16 %v2176, %v2175
        %v2184 = vpack.c.b16 %v2178, %v2177
        %v2185 = vpack.c.b16 %v2180, %v2179
        %v2207 = vunpack.c.l.b16 %v2145
        %v2208 = vunpack.c.l.b16 %v2146
        %v2209 = vunpack.c.l.b16 %v2147
        %v2210 = vunpack.c.l.b16 %v2148
        %v2211 = vunpack.c.l.b16 %v2149
        %v2212 = vunpack.c.l.b16 %v2150
        %v2213 = vunpack.c.l.b16 %v2151
        %v2214 = vunpack.c.l.b16 %v2152
        %v2215 = vunpack.c.l.b16 %v2153
        %v2216 = vunpack.c.l.b16 %v2154
        %v2217 = vunpack.c.l.b16 %v2155
        %v2218 = vunpack.c.l.b16 %v2156
        %v2219 = vunpack.c.l.b16 %v2157
        %v2220 = vunpack.c.l.b16 %v2158
        %v2221 = vunpack.c.l.b16 %v2159
        %v2222 = vunpack.c.l.b16 %v2160
        %v2223 = vpack.c.b16 %v2208, %v2207
        %v2224 = vpack.c.b16 %v2210, %v2209
        %v2225 = vpack.c.b16 %v2212, %v2211
        %v2226 = vpack.c.b16 %v2214, %v2213
        %v2227 = vpack.c.b16 %v2216, %v2215
        %v2228 = vpack.c.b16 %v2218, %v2217
        %v2229 = vpack.c.b16 %v2220, %v2219
        %v2230 = vpack.c.b16 %v2222, %v2221
        %2239 = vmatprep.subr.bf16.mxu0 0
        %2240 = vmatpush1.bf16.msra.mxu0 %v2230
        %2241 = vmatprep.subr.bf16.mxu0 0
        %2242 = vmatpush1.bf16.msra.mxu0 %v2229
        %2243 = vmatprep.subr.bf16.mxu0 0
        %2244 = vmatpush1.bf16.msra.mxu0 %v2228
        %2245 = vmatprep.subr.bf16.mxu0 0
        %2246 = vmatpush1.bf16.msra.mxu0 %v2227
        %2247 = vmatprep.subr.bf16.mxu0 0
        %2248 = vmatpush1.bf16.msra.mxu0 %v2226
        %2249 = vmatprep.subr.bf16.mxu0 0
        %2250 = vmatpush1.bf16.msra.mxu0 %v2225
        %2251 = vmatprep.subr.bf16.mxu0 0
        %2252 = vmatpush1.bf16.msra.mxu0 %v2224
        %2253 = vmatprep.subr.bf16.mxu0 0
        %2254 = vmatpush1.bf16.msra.mxu0 %v2223
        %2255 = vmatprep.subr.bf16.mxu0 0
        %2256 = vmatpush2.bf16.msra.mxu0 0
        %2257 = vmatprep.subr.bf16.mxu0 0
        %2258 = vmatpush2.bf16.msra.mxu0 0
        %2259 = vmatprep.subr.bf16.mxu0 0
        %2260 = vmatpush2.bf16.msra.mxu0 0
        %2261 = vmatprep.subr.bf16.mxu0 0
        %2262 = vmatpush2.bf16.msra.mxu0 0
        %2263 = vmatprep.subr.bf16.mxu0 0
        %2264 = vmatpush2.bf16.msra.mxu0 0
        %2265 = vmatprep.subr.bf16.mxu0 0
        %2266 = vmatpush2.bf16.msra.mxu0 0
        %2267 = vmatprep.subr.bf16.mxu0 0
        %2268 = vmatpush2.bf16.msra.mxu0 0
        %2269 = vmatprep.subr.bf16.mxu0 0
        %2270 = vmatpush2.bf16.msra.mxu0 0
        %2271 = vmatprep.mubr.bf16.mxu0 0
        %2272 = vmatmul.mubr.bf16.gmra.mxu0 %v2181
        %v2273 = vpop.f32.mrf.mxu0
        %v2274 = vadd.f32 0.0, %v2273
        %v2275 = vpop.f32.mrf.mxu0
        %v2276 = vpop.f32.mrf.mxu0
        %v2277 = vadd.f32 0.0, %v2276
        %v2278 = vpop.f32.mrf.mxu0
        %2279 = vmatprep.mubr.bf16.mxu0 0
        %2280 = vmatmul.mubr.bf16.gmra.mxu0 %v2182
        %v2281 = vpop.f32.mrf.mxu0
        %v2282 = vadd.f32 0.0, %v2281
        %v2283 = vpop.f32.mrf.mxu0
        %v2284 = vpop.f32.mrf.mxu0
        %v2285 = vadd.f32 0.0, %v2284
        %v2286 = vpop.f32.mrf.mxu0
        %2287 = vmatprep.mubr.bf16.mxu0 0
        %2288 = vmatmul.mubr.bf16.gmra.mxu0 %v2183
        %v2289 = vpop.f32.mrf.mxu0
        %v2290 = vadd.f32 0.0, %v2289
        %v2291 = vpop.f32.mrf.mxu0
        %v2292 = vpop.f32.mrf.mxu0
        %v2293 = vadd.f32 0.0, %v2292
        %v2294 = vpop.f32.mrf.mxu0
        %2295 = vmatprep.mubr.bf16.mxu0 0
        %2296 = vmatmul.mubr.bf16.gmra.mxu0 %v2184
        %v2297 = vpop.f32.mrf.mxu0
        %v2298 = vadd.f32 0.0, %v2297
        %v2299 = vpop.f32.mrf.mxu0
        %v2300 = vpop.f32.mrf.mxu0
        %v2301 = vadd.f32 0.0, %v2300
        %v2302 = vpop.f32.mrf.mxu0
        %2303 = vmatprep.mubr.bf16.mxu0 0
        %2304 = vmatmul.mubr.bf16.gmra.mxu0 %v2185
        %v2305 = vpop.f32.mrf.mxu0
        %v2306 = vadd.f32 0.0, %v2305
        %v2307 = vpop.f32.mrf.mxu0
        %v2308 = vpop.f32.mrf.mxu0
        %v2309 = vadd.f32 0.0, %v2308
        %v2310 = vpop.f32.mrf.mxu0
        %2311 = vdwg.mxu0
        %v2312 = vld [vmem:[%s2] sm:$0xff]
        %v2313 = vld [vmem:[%s2 + $0x8] sm:$0xff]
        %v2314 = vld [vmem:[%s2 + $0x10] sm:$0xff]
        %v2315 = vld [vmem:[%s2 + $0x18] sm:$0xff]
        %v2316 = vld [vmem:[%s2 + $0x20] sm:$0xff]
        %v2317 = vld [vmem:[%s2 + $0x28] sm:$0xff]
        %v2318 = vld [vmem:[%s2 + $0x30] sm:$0xff]
        %v2319 = vld [vmem:[%s2 + $0x38] sm:$0xff]
        %v2320 = vld [vmem:[%s2 + $0x40] sm:$0xff]
        %v2321 = vld [vmem:[%s2 + $0x48] sm:$0xff]
        %2323 = vset.pattern.permute.xlu0 0
        %2324 = vperm.xlu0 %2323, %v2312
        %v2325 = vpop.permute.xlu0 %2324
        %2328 = vset.pattern.permute.xlu0 0
        %2329 = vperm.xlu0 %2328, %v2313
        %v2330 = vpop.permute.xlu0 %2329
        %2333 = vset.pattern.permute.xlu0 0
        %2334 = vperm.xlu0 %2333, %v2314
        %v2335 = vpop.permute.xlu0 %2334
        %2338 = vset.pattern.permute.xlu0 0
        %2339 = vperm.xlu0 %2338, %v2315
        %v2340 = vpop.permute.xlu0 %2339
        %2343 = vset.pattern.permute.xlu0 0
        %2344 = vperm.xlu0 %2343, %v2316
        %v2345 = vpop.permute.xlu0 %2344
        %2348 = vset.pattern.permute.xlu0 0
        %2349 = vperm.xlu0 %2348, %v2317
        %v2350 = vpop.permute.xlu0 %2349
        %2353 = vset.pattern.permute.xlu0 0
        %2354 = vperm.xlu0 %2353, %v2318
        %v2355 = vpop.permute.xlu0 %2354
        %2358 = vset.pattern.permute.xlu0 0
        %2359 = vperm.xlu0 %2358, %v2319
        %v2360 = vpop.permute.xlu0 %2359
        %2363 = vset.pattern.permute.xlu0 0
        %2364 = vperm.xlu0 %2363, %v2320
        %v2365 = vpop.permute.xlu0 %2364
        %2368 = vset.pattern.permute.xlu0 0
        %2369 = vperm.xlu0 %2368, %v2321
        %v2370 = vpop.permute.xlu0 %2369
        %v2372 = vmul.f32 %v2274, %v2325
        %v2373 = vmul.f32 %v2277, %v2330
        %v2374 = vmul.f32 %v2282, %v2335
        %v2375 = vmul.f32 %v2285, %v2340
        %v2376 = vmul.f32 %v2290, %v2345
        %v2377 = vmul.f32 %v2293, %v2350
        %v2378 = vmul.f32 %v2298, %v2355
        %v2379 = vmul.f32 %v2301, %v2360
        %v2380 = vmul.f32 %v2306, %v2365
        %v2381 = vmul.f32 %v2309, %v2370
        %v2382 = vadd.f32 %v2372, %v2373
        %v2383 = vadd.f32 %v2382, %v2374
        %v2384 = vadd.f32 %v2383, %v2375
        %v2385 = vadd.f32 %v2384, %v2376
        %v2386 = vadd.f32 %v2385, %v2377
        %v2387 = vadd.f32 %v2386, %v2378
        %v2388 = vadd.f32 %v2387, %v2379
        %v2389 = vadd.f32 %v2388, %v2380
        %v2390 = vadd.f32 %v2389, %v2381
        %v2391 = vrot.slane %v2390, 4
        %v2392 = vadd.f32 %v2390, %v2391
        %v2393 = vrot.slane %v2392, 2
        %v2394 = vadd.f32 %v2392, %v2393
        %v2395 = vrot.slane %v2394, 1
        %v2396 = vadd.f32 %v2394, %v2395
        %v2397 = vmul.f32 %v2274, %v2372
        %v2398 = vmul.f32 %v2277, %v2373
        %v2399 = vmul.f32 %v2282, %v2374
        %v2400 = vmul.f32 %v2285, %v2375
        %v2401 = vmul.f32 %v2290, %v2376
        %v2402 = vmul.f32 %v2293, %v2377
        %v2403 = vmul.f32 %v2298, %v2378
        %v2404 = vmul.f32 %v2301, %v2379
        %v2405 = vmul.f32 %v2306, %v2380
        %v2406 = vmul.f32 %v2309, %v2381
        %v2407 = vadd.f32 %v2397, %v2398
        %v2408 = vadd.f32 %v2407, %v2399
        %v2409 = vadd.f32 %v2408, %v2400
        %v2410 = vadd.f32 %v2409, %v2401
        %v2411 = vadd.f32 %v2410, %v2402
        %v2412 = vadd.f32 %v2411, %v2403
        %v2413 = vadd.f32 %v2412, %v2404
        %v2414 = vadd.f32 %v2413, %v2405
        %v2415 = vadd.f32 %v2414, %v2406
        %v2416 = vrot.slane %v2415, 4
        %v2417 = vadd.f32 %v2415, %v2416
        %v2418 = vrot.slane %v2417, 2
        %v2419 = vadd.f32 %v2417, %v2418
        %v2420 = vrot.slane %v2419, 1
        %v2421 = vadd.f32 %v2419, %v2420
        %v2422 = vmul.f32 %v2396, 0.015625
        %v2423 = vmul.f32 %v2421, 0.015625
        %v2424 = vmul.f32 %v2422, %v2422
        %v2425 = vsub.f32 %v2423, %v2424
        %v2426 = vmax.f32 %v2425, 0.0
        %v2427 = vadd.f32 %v2426, 1e-05
        %v2428 = vrsqrt.pop %v2427
        %v2429 = vld [vmem:[%s3] sm:$0x1]
        %v2430 = vmul.f32 %v2429, %v2428
        %v2431 = vld [vmem:[%s4] sm:$0x1]
        %v2432 = vmul.f32 %v2422, %v2430
        %v2433 = vsub.f32 %v2431, %v2432
        %v2435 = vlaneseq
        %v2436 = vshrl.u32 %v2435, 7
        %v2437 = vsub.s32 0, %v2436
        %v2438 = vrot.slane %v2430, %v2437
        %v2440 = vmul.f32 %v2274, %v2438
        %v2441 = vmul.f32 %v2277, %v2438
        %v2442 = vmul.f32 %v2282, %v2438
        %v2443 = vmul.f32 %v2285, %v2438
        %v2444 = vmul.f32 %v2290, %v2438
        %v2445 = vmul.f32 %v2293, %v2438
        %v2446 = vmul.f32 %v2298, %v2438
        %v2447 = vmul.f32 %v2301, %v2438
        %v2448 = vmul.f32 %v2306, %v2438
        %v2449 = vmul.f32 %v2309, %v2438
        %v2451 = vlaneseq
        %v2452 = vshrl.u32 %v2451, 7
        %v2453 = vsub.s32 0, %v2452
        %v2454 = vrot.slane %v2433, %v2453
        %v2456 = vadd.f32 %v2440, %v2454
        %v2457 = vadd.f32 %v2441, %v2454
        %v2458 = vadd.f32 %v2442, %v2454
        %v2459 = vadd.f32 %v2443, %v2454
        %v2460 = vadd.f32 %v2444, %v2454
        %v2461 = vadd.f32 %v2445, %v2454
        %v2462 = vadd.f32 %v2446, %v2454
        %v2463 = vadd.f32 %v2447, %v2454
        %v2464 = vadd.f32 %v2448, %v2454
        %v2465 = vadd.f32 %v2449, %v2454
        %vm2466 = vcmp.ge.f32.partialorder %v2456, 0.0
        %vm2467 = vcmp.ge.f32.partialorder %v2457, 0.0
        %vm2468 = vcmp.ge.f32.partialorder %v2458, 0.0
        %vm2469 = vcmp.ge.f32.partialorder %v2459, 0.0
        %vm2470 = vcmp.ge.f32.partialorder %v2460, 0.0
        %vm2471 = vcmp.ge.f32.partialorder %v2461, 0.0
        %vm2472 = vcmp.ge.f32.partialorder %v2462, 0.0
        %vm2473 = vcmp.ge.f32.partialorder %v2463, 0.0
        %vm2474 = vcmp.ge.f32.partialorder %v2464, 0.0
        %vm2475 = vcmp.ge.f32.partialorder %v2465, 0.0
        %v2476 = vmul.f32 %v2456, 0.2
        %v2477 = vmul.f32 %v2457, 0.2
        %v2478 = vmul.f32 %v2458, 0.2
        %v2479 = vmul.f32 %v2459, 0.2
        %v2480 = vmul.f32 %v2460, 0.2
        %v2481 = vmul.f32 %v2461, 0.2
        %v2482 = vmul.f32 %v2462, 0.2
        %v2483 = vmul.f32 %v2463, 0.2
        %v2484 = vmul.f32 %v2464, 0.2
        %v2485 = vmul.f32 %v2465, 0.2
        %v2486 = vsel %vm2466, %v2456, %v2476
        %v2487 = vsel %vm2467, %v2457, %v2477
        %v2488 = vsel %vm2468, %v2458, %v2478
        %v2489 = vsel %vm2469, %v2459, %v2479
        %v2490 = vsel %vm2470, %v2460, %v2480
        %v2491 = vsel %vm2471, %v2461, %v2481
        %v2492 = vsel %vm2472, %v2462, %v2482
        %v2493 = vsel %vm2473, %v2463, %v2483
        %v2494 = vsel %vm2474, %v2464, %v2484
        %v2495 = vsel %vm2475, %v2465, %v2485
        %v2496 = vpack.c.bf16 %v2487, %v2486
        %v2497 = vpack.c.bf16 %v2489, %v2488
        %v2498 = vpack.c.bf16 %v2491, %v2490
        %v2499 = vpack.c.bf16 %v2493, %v2492
        %v2500 = vpack.c.bf16 %v2495, %v2494
        %v2506 = vunpack.c.l.b16 %v2496
        %v2507 = vunpack.c.h.b16 %v2496
        %v2508 = vunpack.c.l.b16 %v2497
        %v2509 = vunpack.c.h.b16 %v2497
        %v2510 = vunpack.c.l.b16 %v2498
        %v2511 = vunpack.c.h.b16 %v2498
        %v2512 = vunpack.c.l.b16 %v2499
        %v2513 = vunpack.c.h.b16 %v2499
        %v2514 = vunpack.c.l.b16 %v2500
        %v2515 = vunpack.c.h.b16 %v2500
        %v2516 = vpack.c.b16 %v2506, %v2506
        %v2517 = vpack.c.b16 %v2507, %v2507
        %v2518 = vpack.c.b16 %v2508, %v2508
        %v2519 = vpack.c.b16 %v2509, %v2509
        %v2520 = vpack.c.b16 %v2510, %v2510
        %v2521 = vpack.c.b16 %v2511, %v2511
        %v2522 = vpack.c.b16 %v2512, %v2512
        %v2523 = vpack.c.b16 %v2513, %v2513
        %v2524 = vpack.c.b16 %v2514, %v2514
        %v2525 = vpack.c.b16 %v2515, %v2515
        %2536 = vst [vmem:[%s217] sm:$0xf] %v2516
        %2537 = vst [vmem:[%s217 + $0x4] sm:$0xf] %v2517
        %2538 = vst [vmem:[%s217 + $0x8] sm:$0xf] %v2518
        %2539 = vst [vmem:[%s217 + $0xc] sm:$0xf] %v2519
        %2540 = vst [vmem:[%s217 + $0x10] sm:$0xf] %v2520
        %2541 = vst [vmem:[%s217 + $0x14] sm:$0xf] %v2521
        %2542 = vst [vmem:[%s217 + $0x18] sm:$0xf] %v2522
        %2543 = vst [vmem:[%s217 + $0x1c] sm:$0xf] %v2523
        %2544 = vst [vmem:[%s217 + $0x20] sm:$0xf] %v2524
        %2545 = vst [vmem:[%s217 + $0x24] sm:$0xf] %v2525
        %s2546 = sand.u32 %s137, 1
        %s2547 = scalar_lea.sflag [#allocation4], %s2546
        %s2548 = sand.u32 %s137, 1
        %s2549 = smul.addr %s2548, 40
        %s2550 = scalar_lea.vmem [#allocation3], %s2549
        // Predicated region
        $region41: #{tpu_custom_call.1} parent=39 // pred_check
          %p2551 = pneg %p147
        $region42: #{tpu_custom_call.1} parent=39 // pred_check_branch
          %2553 = sbr.rel (%p2551) target = $region44
        $region43: #{tpu_custom_call.1} parent=39 // pred_region
          %s2555 = ssub.s32 640, 640
          %2556 = vsyncadd %s2547, %s2555
          %s2557 = smul.addr %s19, 10
          %s2558 = smul.addr %s2557, 64
          %s2559 = scalar_lea.hbm %s5, %s2558
          %s2560 = sshll.u32 %s2550, 4
          %s2561 = int_to_ptr.vmem [resolvable:$true] %s2560
          %2566 = dma.vmem_to_hbm [thread:$0]  %s2561, 640, %s2559, %s2547, 64, 64, 4
        $region44: #{tpu_custom_call.1} parent=39 // pred_fallthru
          _
      $region40: #{tpu_custom_call.1} parent=5 // pred_fallthru
        _
      %p2567 = scmp.le.s32.totalorder 2, %s14
      // Predicated region
      $region45: #{tpu_custom_call.1} parent=5 // pred_check
        %p2568 = pneg %p2567
      $region46: #{tpu_custom_call.1} parent=5 // pred_check_branch
        %2570 = sbr.rel (%p2568) target = $region48
      $region47: #{tpu_custom_call.1} parent=5 // pred_region
        %s2571 = ssub.s32 %s14, 2
        // Predicated region
        $region49: #{tpu_custom_call.1} parent=47 // pred_check
          %p2572 = pneg %p153
        $region50: #{tpu_custom_call.1} parent=47 // pred_check_branch
          %2574 = sbr.rel (%p2572) target = $region52
        $region51: #{tpu_custom_call.1} parent=47 // pred_region
          %s2575 = sand.u32 %s138, 1
          %s2576 = scalar_lea.sflag [#allocation4], %s2575
          %s2577 = sand.u32 %s138, 1
          %s2578 = smul.addr %s2577, 40
          %s2579 = scalar_lea.vmem [#allocation3], %s2578
          %2580 = dma.done %s2576, 640
        $region52: #{tpu_custom_call.1} parent=47 // pred_fallthru
          _
      $region48: #{tpu_custom_call.1} parent=5 // pred_fallthru
        _
    $region6: #{tpu_custom_call.1} parent=1 // loop_footer
      %s18 = sadd.s32 1, %s14
    $region7: #{tpu_custom_call.1} parent=1 // loop_footer_branch
      %13 = sbr.rel target = $region3
    $region8: #{tpu_custom_call.1} parent=1 // loop_exit
      _
    %2581 = vsyncpa [#allocation4], 1
    %s2582 = scalar_lea.sflag [#allocation4], 1
    %2583 = vsyncpa %s2582, 1

</llo_original>
